<compile_context>
chip_gen: v7x
topology: tpu7x:2x2x1
jax: 0.10.0
libtpu: 0.0.40
codegen_flags: <defaults>
</compile_context>

<pallas_src>
import jax
import jax.numpy as jnp
from jax.experimental import pallas as pl
from jax.experimental.pallas import tpu as pltpu

KH = KW = 3           # 3x3 convs, stride 1, padding 1, no bias
TAPS = KH * KW


def residual_block_kernel(x_ref, w1_ref, w2_ref, s1_ref, b1_ref, s2_ref, b2_ref,
                          o_ref, pad_ref, col_ref):
    # x_ref   : (H, W, C)       f32   (batch dim squeezed)
    # w*_ref  : (9*Cin, Cout)   matmul dtype, rows ordered (tap = dy*3+dx, cin)
    # s*/b*   : (1, C)          f32   folded BN scale / shift
    # o_ref   : (H*W, C)        f32
    # pad_ref : (H+2, W+2, C)   f32   zero-halo padded activation scratch
    # col_ref : (H*W, 9*C)      matmul dtype, im2col scratch
    H, W, C = x_ref.shape
    HW = H * W
    mm_dtype = col_ref.dtype

    # Zero ONLY the 1-pixel halo (2 rows + 2 cols) -- the interior is fully
    # rewritten before each conv reads it.  Done unconditionally every step so
    # correctness does not depend on which core handled program_id == 0.
    zrow = jnp.zeros((1, W + 2, C), pad_ref.dtype)
    zcol = jnp.zeros((H + 2, 1, C), pad_ref.dtype)
    pad_ref[0:1, :, :] = zrow
    pad_ref[H + 1:H + 2, :, :] = zrow
    pad_ref[:, 0:1, :] = zcol
    pad_ref[:, W + 1:W + 2, :] = zcol

    def conv3x3(src_hwc, w_ref):
        # 3x3/s1/p1 conv as a single (HW, 9C) @ (9C, C) MXU matmul, f32 acc.
        pad_ref[1:H + 1, 1:W + 1, :] = src_hwc             # f32 interior
        for tap in range(TAPS):                            # build im2col slabs
            dy, dx = tap // KW, tap % KW
            col_ref[:, tap * C:(tap + 1) * C] = (
                pad_ref[dy:dy + H, dx:dx + W, :].reshape(HW, C).astype(mm_dtype))
        return jnp.dot(col_ref[...], w_ref[...],
                       preferred_element_type=jnp.float32)

    # ---- conv1 -> BN1 (folded affine) -> ReLU ----
    y1 = conv3x3(x_ref[...], w1_ref)
    y1 = jnp.maximum(y1 * s1_ref[...] + b1_ref[...], 0.0)

    # ---- conv2 -> BN2 -> residual add -> ReLU ----
    # y1 stays f32 inside the shared pad scratch (halo still zero); only the
    # im2col slabs / weights are cast to the matmul dtype.
    y2 = conv3x3(y1.reshape(H, W, C), w2_ref)
    y2 = y2 * s2_ref[...] + b2_ref[...]
    o_ref[...] = jnp.maximum(y2 + x_ref[...].reshape(HW, C),
                             0.0).astype(o_ref.dtype)


def residual_block(x_nchw, w1_oihw, w2_oihw, bn1, bn2, *,
                   eps=1e-5, matmul_dtype=jnp.bfloat16):
    """ResidualBlock forward (stride=1, eval-mode BN, in_channels == n_filters).

    x_nchw: (N, C, H, W) f32; w*_oihw: (Cout, Cin, 3, 3); bn*: (gamma, beta, mean, var).
    matmul_dtype: dtype of the conv matmul *operands* (bf16 recommended on all
    TPU generations -- the MXU is bf16-native on v5e/v6e/v7x); accumulation and
    all BN / ReLU / residual math stay in f32.
    """
    N, C, H, W = x_nchw.shape
    # TODO(synk): accept/emit NHWC end-to-end to drop these two HBM transpose
    #             passes when the surrounding model allows it.
    x = jnp.transpose(x_nchw, (0, 2, 3, 1)).astype(jnp.float32)   # NHWC, unpadded

    def prep_w(w_oihw):
        # OIHW -> (9*Cin, Cout): rows ordered (dy*3+dx, cin) to match im2col.
        w = jnp.transpose(w_oihw, (2, 3, 1, 0)).reshape(TAPS * C, C)
        return w.astype(matmul_dtype)

    def fold_bn(params):
        gamma, beta, mean, var = params
        scale = gamma / jnp.sqrt(var + eps)
        shift = beta - mean * scale
        return (scale.reshape(1, C).astype(jnp.float32),
                shift.reshape(1, C).astype(jnp.float32))

    w1, w2 = prep_w(w1_oihw), prep_w(w2_oihw)
    s1, b1 = fold_bn(bn1)
    s2, b2 = fold_bn(bn2)

    # VMEM budget from the actual block footprint, clamped to ~80% of the
    # device's physical VMEM (leaves compiler headroom on 64 MiB/TC v7x while
    # allowing ~102 MiB on 128 MiB v5e/v6e parts).
    mm_bytes = jnp.dtype(matmul_dtype).itemsize
    blk_bytes = (
        2 * H * W * C * 4                       # x block (double-buffered)
        + 2 * 2 * TAPS * C * C * mm_bytes       # w1, w2 (double-buffered)
        # TODO(synk): w1/w2 and the BN vectors could be single-buffered
        #             (pipeline_mode=pl.Buffered(1), constant index_map) to
        #             reclaim VMEM at large C.
        + 2 * 4 * C * 4                         # BN scale/shift
        + 2 * H * W * C * 4                     # output block (double-buffered)
        + (H + 2) * (W + 2) * C * 4             # padded f32 activation scratch
        + H * W * TAPS * C * mm_bytes)          # im2col scratch
    try:
        vmem_cap = int(pltpu.get_tpu_info().vmem_capacity_bytes)
    except Exception:
        vmem_cap = 64 * 1024 * 1024             # conservative (v7x-sized) fallback
    vmem_limit = int(min(max(2 * blk_bytes, 16 * 1024 * 1024),
                         (vmem_cap * 4) // 5))

    out2d = pl.pallas_call(
        residual_block_kernel,
        out_shape=jax.ShapeDtypeStruct((N, H * W, C), jnp.float32),
        grid_spec=pltpu.PrefetchScalarGridSpec(
            num_scalar_prefetch=0,
            grid=(N,),
            # TODO(synk): for large H*W (esp. on v7x's 64 MiB VMEM/TC) add a
            #             halo'd row-tiled spatial grid axis instead of
            #             whole-image blocks; it also yields >2 grid steps so
            #             both v7x TensorCores get work at small N.
            in_specs=[
                pl.BlockSpec((pl.Squeezed(), H, W, C), lambda n: (n, 0, 0, 0)),
                pl.BlockSpec((TAPS * C, C), lambda n: (0, 0)),
                pl.BlockSpec((TAPS * C, C), lambda n: (0, 0)),
                pl.BlockSpec((1, C), lambda n: (0, 0)),
                pl.BlockSpec((1, C), lambda n: (0, 0)),
                pl.BlockSpec((1, C), lambda n: (0, 0)),
                pl.BlockSpec((1, C), lambda n: (0, 0)),
            ],
            # TODO(synk): for C < 128 a lane-dense out block (last dim a
            #             multiple of 128, e.g. (N, H, W*C)) avoids masked
            #             vst.msk stores at the cost of an in-kernel relayout.
            out_specs=pl.BlockSpec((pl.Squeezed(), H * W, C), lambda n: (n, 0, 0)),
            scratch_shapes=[
                pltpu.VMEM((H + 2, W + 2, C), jnp.float32),    # padded activations
                pltpu.VMEM((H * W, TAPS * C), matmul_dtype),   # im2col buffer
            ],
        ),
        compiler_params=pltpu.CompilerParams(
            dimension_semantics=("parallel",),
            vmem_limit_bytes=vmem_limit,
        ),
    )(x, w1, w2, s1, b1, s2, b2)

    out = out2d.reshape(N, H, W, C)            # free (same HBM layout)
    return jnp.transpose(out, (0, 3, 1, 2))    # back to NCHW


def reference(x, w1, w2, bn1, bn2, eps=1e-5):
    """Pure-JAX NCHW reference (mirrors the PyTorch forward, BN in eval mode)."""
    def conv(x, w):
        return jax.lax.conv_general_dilated(
            x, w, window_strides=(1, 1), padding=((1, 1), (1, 1)),
            dimension_numbers=('NCHW', 'OIHW', 'NCHW'))

    def bn(x, params):
        gamma, beta, mean, var = params
        scale = (gamma / jnp.sqrt(var + eps)).reshape(1, -1, 1, 1)
        shift = (beta - mean * gamma / jnp.sqrt(var + eps)).reshape(1, -1, 1, 1)
        return x * scale + shift

    out = jax.nn.relu(bn(conv(x, w1), bn1))
    out = bn(conv(out, w2), bn2)
    return jax.nn.relu(out + x)


if __name__ == "__main__":
    key = jax.random.PRNGKey(0)
    N, C, H, W = 2, 4, 16, 16            # in_channels == n_filters, stride=1, downsample=None
    ks = jax.random.split(key, 10)

    x = jax.random.normal(ks[0], (N, C, H, W), jnp.float32)
    # Conv2d(C, C, k=3, bias=False) weights: OIHW (C, C, 3, 3)
    w1 = jax.random.normal(ks[1], (C, C, 3, 3), jnp.float32) * 0.1
    w2 = jax.random.normal(ks[2], (C, C, 3, 3), jnp.float32) * 0.1
    # BatchNorm2d(C) params: (gamma, beta, running_mean, running_var)
    bn1 = (jax.random.uniform(ks[3], (C,), minval=0.5, maxval=1.5),
           jax.random.normal(ks[4], (C,)) * 0.1,
           jax.random.normal(ks[5], (C,)) * 0.1,
           jax.random.uniform(ks[6], (C,), minval=0.5, maxval=1.5))
    bn2 = (jax.random.uniform(ks[7], (C,), minval=0.5, maxval=1.5),
           jax.random.normal(ks[8], (C,)) * 0.1,
           jax.random.normal(ks[9], (C,)) * 0.1,
           jnp.ones((C,), jnp.float32))

    ref = reference(x, w1, w2, bn1, bn2)

    # Full-f32 matmul path: strict check against the f32 reference.
    out = jax.block_until_ready(
        residual_block(x, w1, w2, bn1, bn2, matmul_dtype=jnp.float32))
    assert out.shape == x.shape
    err_f32 = float(jnp.max(jnp.abs(out - ref)))
    assert jnp.allclose(out, ref, rtol=1e-3, atol=1e-3), err_f32

    # bf16 matmul operands (fast path on all generations), f32 accumulation
    # and f32 intermediate activations: loose bound.
    out_bf16 = jax.block_until_ready(
        residual_block(x, w1, w2, bn1, bn2, matmul_dtype=jnp.bfloat16))
    err_bf16 = float(jnp.max(jnp.abs(out_bf16 - ref)))
    assert err_bf16 < 0.25, err_bf16

    print("KERNEL_OK")
</pallas_src>

<mosaic_0001>
module attributes {stable_mosaic.version = 11 : i64} {
  func.func @residual_block_kernel(%arg0: i32, %arg1: memref<1x16x16x4xf32, #tpu.memory_space<vmem>>, %arg2: memref<36x4xf32, #tpu.memory_space<vmem>>, %arg3: memref<36x4xf32, #tpu.memory_space<vmem>>, %arg4: memref<1x4xf32, #tpu.memory_space<vmem>>, %arg5: memref<1x4xf32, #tpu.memory_space<vmem>>, %arg6: memref<1x4xf32, #tpu.memory_space<vmem>>, %arg7: memref<1x4xf32, #tpu.memory_space<vmem>>, %arg8: memref<1x256x4xf32, #tpu.memory_space<vmem>>, %arg9: memref<18x18x4xf32, #tpu.memory_space<vmem>>, %arg10: memref<256x36xf32, #tpu.memory_space<vmem>>) attributes {dimension_semantics = [#tpu.dimension_semantics<parallel>], iteration_bounds = array<i64: 2>, scalar_prefetch = 0 : i64, scratch_operands = 2 : i64, tpu.core_type = #tpu.core_type<tc>, window_params = [{transform_indices = @transform_0, window_bounds = array<i64: 1, 16, 16, 4>}, {pipeline_mode = #tpu.pipeline_mode<synchronous>, transform_indices = @transform_1, window_bounds = array<i64: 36, 4>}, {pipeline_mode = #tpu.pipeline_mode<synchronous>, transform_indices = @transform_2, window_bounds = array<i64: 36, 4>}, {pipeline_mode = #tpu.pipeline_mode<synchronous>, transform_indices = @transform_3, window_bounds = array<i64: 1, 4>}, {pipeline_mode = #tpu.pipeline_mode<synchronous>, transform_indices = @transform_4, window_bounds = array<i64: 1, 4>}, {pipeline_mode = #tpu.pipeline_mode<synchronous>, transform_indices = @transform_5, window_bounds = array<i64: 1, 4>}, {pipeline_mode = #tpu.pipeline_mode<synchronous>, transform_indices = @transform_6, window_bounds = array<i64: 1, 4>}, {transform_indices = @transform_7, window_bounds = array<i64: 1, 256, 4>}]} {
    %cst = arith.constant 0.000000e+00 : f32
    %0 = vector.broadcast %cst : f32 to vector<1x18x4xf32>
    %cst_0 = arith.constant 0.000000e+00 : f32
    %1 = vector.broadcast %cst_0 : f32 to vector<18x1x4xf32>
    %c0 = arith.constant 0 : index
    %c0_1 = arith.constant 0 : index
    %c0_2 = arith.constant 0 : index
    %2 = vector.load %arg9[%c0, %c0_1, %c0_2] : memref<18x18x4xf32, #tpu.memory_space<vmem>>, vector<1x18x4xf32>
    tpu.vector_store %arg9[%c0, %c0_1, %c0_2], %0 {strides = array<i32>} : memref<18x18x4xf32, #tpu.memory_space<vmem>>, vector<1x18x4xf32>,
    %c17 = arith.constant 17 : index
    %c0_3 = arith.constant 0 : index
    %c0_4 = arith.constant 0 : index
    %3 = vector.load %arg9[%c17, %c0_3, %c0_4] : memref<18x18x4xf32, #tpu.memory_space<vmem>>, vector<1x18x4xf32>
    tpu.vector_store %arg9[%c17, %c0_3, %c0_4], %0 {strides = array<i32>} : memref<18x18x4xf32, #tpu.memory_space<vmem>>, vector<1x18x4xf32>,
    %c0_5 = arith.constant 0 : index
    %c0_6 = arith.constant 0 : index
    %c0_7 = arith.constant 0 : index
    %4 = vector.load %arg9[%c0_5, %c0_6, %c0_7] : memref<18x18x4xf32, #tpu.memory_space<vmem>>, vector<18x1x4xf32>
    tpu.vector_store %arg9[%c0_5, %c0_6, %c0_7], %1 {strides = array<i32>} : memref<18x18x4xf32, #tpu.memory_space<vmem>>, vector<18x1x4xf32>,
    %c0_8 = arith.constant 0 : index
    %c17_9 = arith.constant 17 : index
    %c0_10 = arith.constant 0 : index
    %5 = vector.load %arg9[%c0_8, %c17_9, %c0_10] : memref<18x18x4xf32, #tpu.memory_space<vmem>>, vector<18x1x4xf32>
    tpu.vector_store %arg9[%c0_8, %c17_9, %c0_10], %1 {strides = array<i32>} : memref<18x18x4xf32, #tpu.memory_space<vmem>>, vector<18x1x4xf32>,
    %c0_11 = arith.constant 0 : index
    %c0_12 = arith.constant 0 : index
    %c0_13 = arith.constant 0 : index
    %c0_14 = arith.constant 0 : index
    %6 = vector.load %arg1[%c0_11, %c0_12, %c0_13, %c0_14] : memref<1x16x16x4xf32, #tpu.memory_space<vmem>>, vector<1x16x16x4xf32>
    %7 = vector.shape_cast %6 : vector<1x16x16x4xf32> to vector<16x16x4xf32>
    %c1 = arith.constant 1 : index
    %c1_15 = arith.constant 1 : index
    %c0_16 = arith.constant 0 : index
    %8 = vector.load %arg9[%c1, %c1_15, %c0_16] : memref<18x18x4xf32, #tpu.memory_space<vmem>>, vector<16x16x4xf32>
    tpu.vector_store %arg9[%c1, %c1_15, %c0_16], %7 {strides = array<i32>} : memref<18x18x4xf32, #tpu.memory_space<vmem>>, vector<16x16x4xf32>,
    %c0_17 = arith.constant 0 : index
    %c0_18 = arith.constant 0 : index
    %c0_19 = arith.constant 0 : index
    %9 = vector.load %arg9[%c0_17, %c0_18, %c0_19] : memref<18x18x4xf32, #tpu.memory_space<vmem>>, vector<16x16x4xf32>
    %10 = vector.shape_cast %9 : vector<16x16x4xf32> to vector<256x4xf32>
    %c0_20 = arith.constant 0 : index
    %c0_21 = arith.constant 0 : index
    %11 = vector.load %arg10[%c0_20, %c0_21] : memref<256x36xf32, #tpu.memory_space<vmem>>, vector<256x4xf32>
    tpu.vector_store %arg10[%c0_20, %c0_21], %10 {strides = array<i32>} : memref<256x36xf32, #tpu.memory_space<vmem>>, vector<256x4xf32>,
    %c0_22 = arith.constant 0 : index
    %c1_23 = arith.constant 1 : index
    %c0_24 = arith.constant 0 : index
    %12 = vector.load %arg9[%c0_22, %c1_23, %c0_24] : memref<18x18x4xf32, #tpu.memory_space<vmem>>, vector<16x16x4xf32>
    %13 = vector.shape_cast %12 : vector<16x16x4xf32> to vector<256x4xf32>
    %c0_25 = arith.constant 0 : index
    %c4 = arith.constant 4 : index
    %14 = vector.load %arg10[%c0_25, %c4] : memref<256x36xf32, #tpu.memory_space<vmem>>, vector<256x4xf32>
    tpu.vector_store %arg10[%c0_25, %c4], %13 {strides = array<i32>} : memref<256x36xf32, #tpu.memory_space<vmem>>, vector<256x4xf32>,
    %c0_26 = arith.constant 0 : index
    %c2 = arith.constant 2 : index
    %c0_27 = arith.constant 0 : index
    %15 = vector.load %arg9[%c0_26, %c2, %c0_27] : memref<18x18x4xf32, #tpu.memory_space<vmem>>, vector<16x16x4xf32>
    %16 = vector.shape_cast %15 : vector<16x16x4xf32> to vector<256x4xf32>
    %c0_28 = arith.constant 0 : index
    %c8 = arith.constant 8 : index
    %17 = vector.load %arg10[%c0_28, %c8] : memref<256x36xf32, #tpu.memory_space<vmem>>, vector<256x4xf32>
    tpu.vector_store %arg10[%c0_28, %c8], %16 {strides = array<i32>} : memref<256x36xf32, #tpu.memory_space<vmem>>, vector<256x4xf32>,
    %c1_29 = arith.constant 1 : index
    %c0_30 = arith.constant 0 : index
    %c0_31 = arith.constant 0 : index
    %18 = vector.load %arg9[%c1_29, %c0_30, %c0_31] : memref<18x18x4xf32, #tpu.memory_space<vmem>>, vector<16x16x4xf32>
    %19 = vector.shape_cast %18 : vector<16x16x4xf32> to vector<256x4xf32>
    %c0_32 = arith.constant 0 : index
    %c12 = arith.constant 12 : index
    %20 = vector.load %arg10[%c0_32, %c12] : memref<256x36xf32, #tpu.memory_space<vmem>>, vector<256x4xf32>
    tpu.vector_store %arg10[%c0_32, %c12], %19 {strides = array<i32>} : memref<256x36xf32, #tpu.memory_space<vmem>>, vector<256x4xf32>,
    %c1_33 = arith.constant 1 : index
    %c1_34 = arith.constant 1 : index
    %c0_35 = arith.constant 0 : index
    %21 = vector.load %arg9[%c1_33, %c1_34, %c0_35] : memref<18x18x4xf32, #tpu.memory_space<vmem>>, vector<16x16x4xf32>
    %22 = vector.shape_cast %21 : vector<16x16x4xf32> to vector<256x4xf32>
    %c0_36 = arith.constant 0 : index
    %c16 = arith.constant 16 : index
    %23 = vector.load %arg10[%c0_36, %c16] : memref<256x36xf32, #tpu.memory_space<vmem>>, vector<256x4xf32>
    tpu.vector_store %arg10[%c0_36, %c16], %22 {strides = array<i32>} : memref<256x36xf32, #tpu.memory_space<vmem>>, vector<256x4xf32>,
    %c1_37 = arith.constant 1 : index
    %c2_38 = arith.constant 2 : index
    %c0_39 = arith.constant 0 : index
    %24 = vector.load %arg9[%c1_37, %c2_38, %c0_39] : memref<18x18x4xf32, #tpu.memory_space<vmem>>, vector<16x16x4xf32>
    %25 = vector.shape_cast %24 : vector<16x16x4xf32> to vector<256x4xf32>
    %c0_40 = arith.constant 0 : index
    %c20 = arith.constant 20 : index
    %26 = vector.load %arg10[%c0_40, %c20] : memref<256x36xf32, #tpu.memory_space<vmem>>, vector<256x4xf32>
    tpu.vector_store %arg10[%c0_40, %c20], %25 {strides = array<i32>} : memref<256x36xf32, #tpu.memory_space<vmem>>, vector<256x4xf32>,
    %c2_41 = arith.constant 2 : index
    %c0_42 = arith.constant 0 : index
    %c0_43 = arith.constant 0 : index
    %27 = vector.load %arg9[%c2_41, %c0_42, %c0_43] : memref<18x18x4xf32, #tpu.memory_space<vmem>>, vector<16x16x4xf32>
    %28 = vector.shape_cast %27 : vector<16x16x4xf32> to vector<256x4xf32>
    %c0_44 = arith.constant 0 : index
    %c24 = arith.constant 24 : index
    %29 = vector.load %arg10[%c0_44, %c24] : memref<256x36xf32, #tpu.memory_space<vmem>>, vector<256x4xf32>
    tpu.vector_store %arg10[%c0_44, %c24], %28 {strides = array<i32>} : memref<256x36xf32, #tpu.memory_space<vmem>>, vector<256x4xf32>,
    %c2_45 = arith.constant 2 : index
    %c1_46 = arith.constant 1 : index
    %c0_47 = arith.constant 0 : index
    %30 = vector.load %arg9[%c2_45, %c1_46, %c0_47] : memref<18x18x4xf32, #tpu.memory_space<vmem>>, vector<16x16x4xf32>
    %31 = vector.shape_cast %30 : vector<16x16x4xf32> to vector<256x4xf32>
    %c0_48 = arith.constant 0 : index
    %c28 = arith.constant 28 : index
    %32 = vector.load %arg10[%c0_48, %c28] : memref<256x36xf32, #tpu.memory_space<vmem>>, vector<256x4xf32>
    tpu.vector_store %arg10[%c0_48, %c28], %31 {strides = array<i32>} : memref<256x36xf32, #tpu.memory_space<vmem>>, vector<256x4xf32>,
    %c2_49 = arith.constant 2 : index
    %c2_50 = arith.constant 2 : index
    %c0_51 = arith.constant 0 : index
    %33 = vector.load %arg9[%c2_49, %c2_50, %c0_51] : memref<18x18x4xf32, #tpu.memory_space<vmem>>, vector<16x16x4xf32>
    %34 = vector.shape_cast %33 : vector<16x16x4xf32> to vector<256x4xf32>
    %c0_52 = arith.constant 0 : index
    %c32 = arith.constant 32 : index
    %35 = vector.load %arg10[%c0_52, %c32] : memref<256x36xf32, #tpu.memory_space<vmem>>, vector<256x4xf32>
    tpu.vector_store %arg10[%c0_52, %c32], %34 {strides = array<i32>} : memref<256x36xf32, #tpu.memory_space<vmem>>, vector<256x4xf32>,
    %c0_53 = arith.constant 0 : index
    %c0_54 = arith.constant 0 : index
    %36 = vector.load %arg10[%c0_53, %c0_54] : memref<256x36xf32, #tpu.memory_space<vmem>>, vector<256x36xf32>
    %c0_55 = arith.constant 0 : index
    %c0_56 = arith.constant 0 : index
    %37 = vector.load %arg2[%c0_55, %c0_56] : memref<36x4xf32, #tpu.memory_space<vmem>>, vector<36x4xf32>
    %cst_57 = arith.constant dense<0.000000e+00> : vector<256x4xf32>
    %38 = tpu.matmul %36, %37, %cst_57 {dimension_numbers = #tpu.dot_dimension_numbers<[1], [0], [0], [1], [0, 0, 1, 1], [], []>} : vector<256x36xf32>, vector<36x4xf32>, vector<256x4xf32> -> vector<256x4xf32>
    %c0_58 = arith.constant 0 : index
    %c0_59 = arith.constant 0 : index
    %39 = vector.load %arg4[%c0_58, %c0_59] : memref<1x4xf32, #tpu.memory_space<vmem>>, vector<1x4xf32>
    %40 = vector.broadcast %39 : vector<1x4xf32> to vector<256x4xf32>
    %41 = arith.mulf %38, %40 : vector<256x4xf32>
    %c0_60 = arith.constant 0 : index
    %c0_61 = arith.constant 0 : index
    %42 = vector.load %arg5[%c0_60, %c0_61] : memref<1x4xf32, #tpu.memory_space<vmem>>, vector<1x4xf32>
    %43 = vector.broadcast %42 : vector<1x4xf32> to vector<256x4xf32>
    %44 = arith.addf %41, %43 : vector<256x4xf32>
    %cst_62 = arith.constant 0.000000e+00 : f32
    %45 = vector.broadcast %cst_62 : f32 to vector<256x4xf32>
    %46 = arith.maximumf %44, %45 : vector<256x4xf32>
    %47 = vector.shape_cast %46 : vector<256x4xf32> to vector<16x16x4xf32>
    %c1_63 = arith.constant 1 : index
    %c1_64 = arith.constant 1 : index
    %c0_65 = arith.constant 0 : index
    %48 = vector.load %arg9[%c1_63, %c1_64, %c0_65] : memref<18x18x4xf32, #tpu.memory_space<vmem>>, vector<16x16x4xf32>
    tpu.vector_store %arg9[%c1_63, %c1_64, %c0_65], %47 {strides = array<i32>} : memref<18x18x4xf32, #tpu.memory_space<vmem>>, vector<16x16x4xf32>,
    %c0_66 = arith.constant 0 : index
    %c0_67 = arith.constant 0 : index
    %c0_68 = arith.constant 0 : index
    %49 = vector.load %arg9[%c0_66, %c0_67, %c0_68] : memref<18x18x4xf32, #tpu.memory_space<vmem>>, vector<16x16x4xf32>
    %50 = vector.shape_cast %49 : vector<16x16x4xf32> to vector<256x4xf32>
    %c0_69 = arith.constant 0 : index
    %c0_70 = arith.constant 0 : index
    %51 = vector.load %arg10[%c0_69, %c0_70] : memref<256x36xf32, #tpu.memory_space<vmem>>, vector<256x4xf32>
    tpu.vector_store %arg10[%c0_69, %c0_70], %50 {strides = array<i32>} : memref<256x36xf32, #tpu.memory_space<vmem>>, vector<256x4xf32>,
    %c0_71 = arith.constant 0 : index
    %c1_72 = arith.constant 1 : index
    %c0_73 = arith.constant 0 : index
    %52 = vector.load %arg9[%c0_71, %c1_72, %c0_73] : memref<18x18x4xf32, #tpu.memory_space<vmem>>, vector<16x16x4xf32>
    %53 = vector.shape_cast %52 : vector<16x16x4xf32> to vector<256x4xf32>
    %c0_74 = arith.constant 0 : index
    %c4_75 = arith.constant 4 : index
    %54 = vector.load %arg10[%c0_74, %c4_75] : memref<256x36xf32, #tpu.memory_space<vmem>>, vector<256x4xf32>
    tpu.vector_store %arg10[%c0_74, %c4_75], %53 {strides = array<i32>} : memref<256x36xf32, #tpu.memory_space<vmem>>, vector<256x4xf32>,
    %c0_76 = arith.constant 0 : index
    %c2_77 = arith.constant 2 : index
    %c0_78 = arith.constant 0 : index
    %55 = vector.load %arg9[%c0_76, %c2_77, %c0_78] : memref<18x18x4xf32, #tpu.memory_space<vmem>>, vector<16x16x4xf32>
    %56 = vector.shape_cast %55 : vector<16x16x4xf32> to vector<256x4xf32>
    %c0_79 = arith.constant 0 : index
    %c8_80 = arith.constant 8 : index
    %57 = vector.load %arg10[%c0_79, %c8_80] : memref<256x36xf32, #tpu.memory_space<vmem>>, vector<256x4xf32>
    tpu.vector_store %arg10[%c0_79, %c8_80], %56 {strides = array<i32>} : memref<256x36xf32, #tpu.memory_space<vmem>>, vector<256x4xf32>,
    %c1_81 = arith.constant 1 : index
    %c0_82 = arith.constant 0 : index
    %c0_83 = arith.constant 0 : index
    %58 = vector.load %arg9[%c1_81, %c0_82, %c0_83] : memref<18x18x4xf32, #tpu.memory_space<vmem>>, vector<16x16x4xf32>
    %59 = vector.shape_cast %58 : vector<16x16x4xf32> to vector<256x4xf32>
    %c0_84 = arith.constant 0 : index
    %c12_85 = arith.constant 12 : index
    %60 = vector.load %arg10[%c0_84, %c12_85] : memref<256x36xf32, #tpu.memory_space<vmem>>, vector<256x4xf32>
    tpu.vector_store %arg10[%c0_84, %c12_85], %59 {strides = array<i32>} : memref<256x36xf32, #tpu.memory_space<vmem>>, vector<256x4xf32>,
    %c1_86 = arith.constant 1 : index
    %c1_87 = arith.constant 1 : index
    %c0_88 = arith.constant 0 : index
    %61 = vector.load %arg9[%c1_86, %c1_87, %c0_88] : memref<18x18x4xf32, #tpu.memory_space<vmem>>, vector<16x16x4xf32>
    %62 = vector.shape_cast %61 : vector<16x16x4xf32> to vector<256x4xf32>
    %c0_89 = arith.constant 0 : index
    %c16_90 = arith.constant 16 : index
    %63 = vector.load %arg10[%c0_89, %c16_90] : memref<256x36xf32, #tpu.memory_space<vmem>>, vector<256x4xf32>
    tpu.vector_store %arg10[%c0_89, %c16_90], %62 {strides = array<i32>} : memref<256x36xf32, #tpu.memory_space<vmem>>, vector<256x4xf32>,
    %c1_91 = arith.constant 1 : index
    %c2_92 = arith.constant 2 : index
    %c0_93 = arith.constant 0 : index
    %64 = vector.load %arg9[%c1_91, %c2_92, %c0_93] : memref<18x18x4xf32, #tpu.memory_space<vmem>>, vector<16x16x4xf32>
    %65 = vector.shape_cast %64 : vector<16x16x4xf32> to vector<256x4xf32>
    %c0_94 = arith.constant 0 : index
    %c20_95 = arith.constant 20 : index
    %66 = vector.load %arg10[%c0_94, %c20_95] : memref<256x36xf32, #tpu.memory_space<vmem>>, vector<256x4xf32>
    tpu.vector_store %arg10[%c0_94, %c20_95], %65 {strides = array<i32>} : memref<256x36xf32, #tpu.memory_space<vmem>>, vector<256x4xf32>,
    %c2_96 = arith.constant 2 : index
    %c0_97 = arith.constant 0 : index
    %c0_98 = arith.constant 0 : index
    %67 = vector.load %arg9[%c2_96, %c0_97, %c0_98] : memref<18x18x4xf32, #tpu.memory_space<vmem>>, vector<16x16x4xf32>
    %68 = vector.shape_cast %67 : vector<16x16x4xf32> to vector<256x4xf32>
    %c0_99 = arith.constant 0 : index
    %c24_100 = arith.constant 24 : index
    %69 = vector.load %arg10[%c0_99, %c24_100] : memref<256x36xf32, #tpu.memory_space<vmem>>, vector<256x4xf32>
    tpu.vector_store %arg10[%c0_99, %c24_100], %68 {strides = array<i32>} : memref<256x36xf32, #tpu.memory_space<vmem>>, vector<256x4xf32>,
    %c2_101 = arith.constant 2 : index
    %c1_102 = arith.constant 1 : index
    %c0_103 = arith.constant 0 : index
    %70 = vector.load %arg9[%c2_101, %c1_102, %c0_103] : memref<18x18x4xf32, #tpu.memory_space<vmem>>, vector<16x16x4xf32>
    %71 = vector.shape_cast %70 : vector<16x16x4xf32> to vector<256x4xf32>
    %c0_104 = arith.constant 0 : index
    %c28_105 = arith.constant 28 : index
    %72 = vector.load %arg10[%c0_104, %c28_105] : memref<256x36xf32, #tpu.memory_space<vmem>>, vector<256x4xf32>
    tpu.vector_store %arg10[%c0_104, %c28_105], %71 {strides = array<i32>} : memref<256x36xf32, #tpu.memory_space<vmem>>, vector<256x4xf32>,
    %c2_106 = arith.constant 2 : index
    %c2_107 = arith.constant 2 : index
    %c0_108 = arith.constant 0 : index
    %73 = vector.load %arg9[%c2_106, %c2_107, %c0_108] : memref<18x18x4xf32, #tpu.memory_space<vmem>>, vector<16x16x4xf32>
    %74 = vector.shape_cast %73 : vector<16x16x4xf32> to vector<256x4xf32>
    %c0_109 = arith.constant 0 : index
    %c32_110 = arith.constant 32 : index
    %75 = vector.load %arg10[%c0_109, %c32_110] : memref<256x36xf32, #tpu.memory_space<vmem>>, vector<256x4xf32>
    tpu.vector_store %arg10[%c0_109, %c32_110], %74 {strides = array<i32>} : memref<256x36xf32, #tpu.memory_space<vmem>>, vector<256x4xf32>,
    %c0_111 = arith.constant 0 : index
    %c0_112 = arith.constant 0 : index
    %76 = vector.load %arg10[%c0_111, %c0_112] : memref<256x36xf32, #tpu.memory_space<vmem>>, vector<256x36xf32>
    %c0_113 = arith.constant 0 : index
    %c0_114 = arith.constant 0 : index
    %77 = vector.load %arg3[%c0_113, %c0_114] : memref<36x4xf32, #tpu.memory_space<vmem>>, vector<36x4xf32>
    %cst_115 = arith.constant dense<0.000000e+00> : vector<256x4xf32>
    %78 = tpu.matmul %76, %77, %cst_115 {dimension_numbers = #tpu.dot_dimension_numbers<[1], [0], [0], [1], [0, 0, 1, 1], [], []>} : vector<256x36xf32>, vector<36x4xf32>, vector<256x4xf32> -> vector<256x4xf32>
    %c0_116 = arith.constant 0 : index
    %c0_117 = arith.constant 0 : index
    %79 = vector.load %arg6[%c0_116, %c0_117] : memref<1x4xf32, #tpu.memory_space<vmem>>, vector<1x4xf32>
    %80 = vector.broadcast %79 : vector<1x4xf32> to vector<256x4xf32>
    %81 = arith.mulf %78, %80 : vector<256x4xf32>
    %c0_118 = arith.constant 0 : index
    %c0_119 = arith.constant 0 : index
    %82 = vector.load %arg7[%c0_118, %c0_119] : memref<1x4xf32, #tpu.memory_space<vmem>>, vector<1x4xf32>
    %83 = vector.broadcast %82 : vector<1x4xf32> to vector<256x4xf32>
    %84 = arith.addf %81, %83 : vector<256x4xf32>
    %c0_120 = arith.constant 0 : index
    %c0_121 = arith.constant 0 : index
    %c0_122 = arith.constant 0 : index
    %c0_123 = arith.constant 0 : index
    %85 = vector.load %arg1[%c0_120, %c0_121, %c0_122, %c0_123] : memref<1x16x16x4xf32, #tpu.memory_space<vmem>>, vector<1x16x16x4xf32>
    %86 = vector.shape_cast %85 : vector<1x16x16x4xf32> to vector<16x16x4xf32>
    %87 = vector.shape_cast %86 : vector<16x16x4xf32> to vector<256x4xf32>
    %88 = arith.addf %84, %87 : vector<256x4xf32>
    %cst_124 = arith.constant 0.000000e+00 : f32
    %89 = vector.broadcast %cst_124 : f32 to vector<256x4xf32>
    %90 = arith.maximumf %88, %89 : vector<256x4xf32>
    %c0_125 = arith.constant 0 : index
    %c0_126 = arith.constant 0 : index
    %c0_127 = arith.constant 0 : index
    %91 = vector.load %arg8[%c0_125, %c0_126, %c0_127] : memref<1x256x4xf32, #tpu.memory_space<vmem>>, vector<1x256x4xf32>
    %92 = vector.shape_cast %91 : vector<1x256x4xf32> to vector<256x4xf32>
    %93 = vector.shape_cast %90 : vector<256x4xf32> to vector<1x256x4xf32>
    tpu.vector_store %arg8[%c0_125, %c0_126, %c0_127], %93 {strides = array<i32>} : memref<1x256x4xf32, #tpu.memory_space<vmem>>, vector<1x256x4xf32>,
    return
  }
  func.func @transform_0(%arg0: i32) -> (i32, i32, i32, i32) {
    %c0_i32 = arith.constant 0 : i32
    %c0_i32_0 = arith.constant 0 : i32
    %c0_i32_1 = arith.constant 0 : i32
    %c0_i32_2 = arith.constant 0 : i32
    return %arg0, %c0_i32, %c0_i32_0, %c0_i32_1 : i32, i32, i32, i32
  }
  func.func @transform_1(%arg0: i32) -> (i32, i32) {
    %c0_i32 = arith.constant 0 : i32
    %c0_i32_0 = arith.constant 0 : i32
    %c0_i32_1 = arith.constant 0 : i32
    return %c0_i32, %c0_i32_0 : i32, i32
  }
  func.func @transform_2(%arg0: i32) -> (i32, i32) {
    %c0_i32 = arith.constant 0 : i32
    %c0_i32_0 = arith.constant 0 : i32
    %c0_i32_1 = arith.constant 0 : i32
    return %c0_i32, %c0_i32_0 : i32, i32
  }
  func.func @transform_3(%arg0: i32) -> (i32, i32) {
    %c0_i32 = arith.constant 0 : i32
    %c0_i32_0 = arith.constant 0 : i32
    %c0_i32_1 = arith.constant 0 : i32
    return %c0_i32, %c0_i32_0 : i32, i32
  }
  func.func @transform_4(%arg0: i32) -> (i32, i32) {
    %c0_i32 = arith.constant 0 : i32
    %c0_i32_0 = arith.constant 0 : i32
    %c0_i32_1 = arith.constant 0 : i32
    return %c0_i32, %c0_i32_0 : i32, i32
  }
  func.func @transform_5(%arg0: i32) -> (i32, i32) {
    %c0_i32 = arith.constant 0 : i32
    %c0_i32_0 = arith.constant 0 : i32
    %c0_i32_1 = arith.constant 0 : i32
    return %c0_i32, %c0_i32_0 : i32, i32
  }
  func.func @transform_6(%arg0: i32) -> (i32, i32) {
    %c0_i32 = arith.constant 0 : i32
    %c0_i32_0 = arith.constant 0 : i32
    %c0_i32_1 = arith.constant 0 : i32
    return %c0_i32, %c0_i32_0 : i32, i32
  }
  func.func @transform_7(%arg0: i32) -> (i32, i32, i32) {
    %c0_i32 = arith.constant 0 : i32
    %c0_i32_0 = arith.constant 0 : i32
    %c0_i32_1 = arith.constant 0 : i32
    return %arg0, %c0_i32, %c0_i32_0 : i32, i32, i32
  }
}

</mosaic_0001>

<llo_original>
// kernel: tpu_custom_call.1
$region0: #{tpu_custom_call.1}
  #allocation0 [shape = 'u32[]', space=smem, size = 0x4, offset = 0x4, fixed_abs, tag = 'smem constant byte address 0x4 - core index']
  #allocation1 [shape = 'u32[144,128]{1,0:T(1,128)}', space=vmem, size = 0x12000, scoped, tag = 'internal scratch']
  #allocation2 [shape = 'f32[18,18,4]{2,1,0:T(8,128)}', space=vmem, size = 0x36000, scoped, tag = 'scratch operand']
  #allocation3 [shape = 'f32[256,36]{1,0:T(8,128)}', space=vmem, size = 0x20000, scoped, tag = 'scratch operand']
  %s0 = inlined_call_operand.vmem [shape: f32[2,16,16,4], index: 0, kind: input, shape index: {}]
  %s1 = inlined_call_operand.vmem [shape: f32[36,4], index: 1, kind: input, shape index: {}]
  %s2 = inlined_call_operand.vmem [shape: f32[36,4], index: 2, kind: input, shape index: {}]
  %s3 = inlined_call_operand.vmem [shape: f32[1,4], index: 3, kind: input, shape index: {}]
  %s4 = inlined_call_operand.vmem [shape: f32[1,4], index: 4, kind: input, shape index: {}]
  %s5 = inlined_call_operand.vmem [shape: f32[1,4], index: 5, kind: input, shape index: {}]
  %s6 = inlined_call_operand.vmem [shape: f32[1,4], index: 6, kind: input, shape index: {}]
  %s7 = inlined_call_operand.vmem [shape: f32[2,256,4], index: 7, kind: output, shape index: {}]
  %s8 = sld [smem:[#allocation0]]
  $region61: #{tpu_custom_call.1} parent=0
    _
  %s10 = ssub.s32 1, %s8
  %s11 = scalar_select 0, %s10, %s8
  loop: start=0, step=1, limit=4
  $region2: #{tpu_custom_call.1} parent=0 // loop_pre_header
    _
  $region3: #{tpu_custom_call.1} parent=0 // loop_header
    %s13 = sphi 0, %s17
    %p14 = scmp.ge.s32.totalorder %s13, 4
    %s23 = sphi 0, %s25
    %s26 = sphi 0, %s23
    %s27 = sphi 0, %s26
    %s43 = sphi 0, %s27
    %s47 = sphi 0, %s47
    %s49 = sphi 0, %s47
    %s50 = sphi 0, %s49
    %s64 = sphi 0, %s50
    %s68 = sphi 0, %s68
    %s70 = sphi 0, %s68
    %s71 = sphi 0, %s70
    %s85 = sphi 0, %s71
    %s89 = sphi 0, %s89
    %s91 = sphi 0, %s89
    %s92 = sphi 0, %s91
    %s106 = sphi 0, %s92
    %s110 = sphi 0, %s110
    %s112 = sphi 0, %s110
    %s113 = sphi 0, %s112
    %s127 = sphi 0, %s113
    %s131 = sphi 0, %s131
    %s133 = sphi 0, %s131
    %s134 = sphi 0, %s133
    %s148 = sphi 0, %s134
    %s152 = sphi 0, %s152
    %s154 = sphi 0, %s152
    %s155 = sphi 0, %s154
    %s169 = sphi 0, %s155
    %s175 = sphi 0, %s177
    %s178 = sphi 0, %s175
    %s179 = sphi 0, %s178
    %s195 = sphi 0, %s179
  $region4: #{tpu_custom_call.1} parent=0 // loop_header_branch
    %16 = sbr.rel (%p14) target = $region8
  $region5: #{tpu_custom_call.1} parent=0 // loop_body
    %s18 = ssub.s32 %s13, 1
    %s19 = ssub.s32 %s13, 2
    %s20 = sadd.s32 %s13, 1
    %s21 = ssub.s32 %s13, %s20
    %p22 = scmp.eq.s32.totalorder %s21, 0
    %s24 = sadd.s32 %s23, 1
    %s25 = scalar_select %p22, %s23, %s24
    %p28 = pneg %p22
    %p29 = scmp.eq.s32.totalorder %s13, 1
    %p30 = por %p28, %p29
    %p31 = scmp.ne.s32.totalorder %s23, %s26
    %p32 = scmp.eq.s32.totalorder %s13, 0
    %p33 = por %p31, %p32
    %p34 = scmp.ne.s32.totalorder %s23, %s26
    %p35 = scmp.eq.s32.totalorder %s18, 1
    %p36 = por %p34, %p35
    %p37 = scmp.ne.s32.totalorder %s26, %s27
    %p38 = scmp.eq.s32.totalorder %s18, 0
    %p39 = por %p37, %p38
    %p40 = scmp.ne.s32.totalorder %s26, %s27
    %p41 = scmp.eq.s32.totalorder %s19, 1
    %p42 = por %p40, %p41
    %p44 = scmp.ne.s32.totalorder %s27, %s43
    %p45 = scmp.eq.s32.totalorder %s19, 0
    %p46 = por %p44, %p45
    %s48 = sadd.s32 %s47, 1
    %p51 = scmp.eq.s32.totalorder %s13, 1
    %p52 = scmp.ne.s32.totalorder %s47, %s49
    %p53 = scmp.eq.s32.totalorder %s13, 0
    %p54 = por %p52, %p53
    %p55 = scmp.ne.s32.totalorder %s47, %s49
    %p56 = scmp.eq.s32.totalorder %s18, 1
    %p57 = por %p55, %p56
    %p58 = scmp.ne.s32.totalorder %s49, %s50
    %p59 = scmp.eq.s32.totalorder %s18, 0
    %p60 = por %p58, %p59
    %p61 = scmp.ne.s32.totalorder %s49, %s50
    %p62 = scmp.eq.s32.totalorder %s19, 1
    %p63 = por %p61, %p62
    %p65 = scmp.ne.s32.totalorder %s50, %s64
    %p66 = scmp.eq.s32.totalorder %s19, 0
    %p67 = por %p65, %p66
    %s69 = sadd.s32 %s68, 1
    %p72 = scmp.eq.s32.totalorder %s13, 1
    %p73 = scmp.ne.s32.totalorder %s68, %s70
    %p74 = scmp.eq.s32.totalorder %s13, 0
    %p75 = por %p73, %p74
    %p76 = scmp.ne.s32.totalorder %s68, %s70
    %p77 = scmp.eq.s32.totalorder %s18, 1
    %p78 = por %p76, %p77
    %p79 = scmp.ne.s32.totalorder %s70, %s71
    %p80 = scmp.eq.s32.totalorder %s18, 0
    %p81 = por %p79, %p80
    %p82 = scmp.ne.s32.totalorder %s70, %s71
    %p83 = scmp.eq.s32.totalorder %s19, 1
    %p84 = por %p82, %p83
    %p86 = scmp.ne.s32.totalorder %s71, %s85
    %p87 = scmp.eq.s32.totalorder %s19, 0
    %p88 = por %p86, %p87
    %s90 = sadd.s32 %s89, 1
    %p93 = scmp.eq.s32.totalorder %s13, 1
    %p94 = scmp.ne.s32.totalorder %s89, %s91
    %p95 = scmp.eq.s32.totalorder %s13, 0
    %p96 = por %p94, %p95
    %p97 = scmp.ne.s32.totalorder %s89, %s91
    %p98 = scmp.eq.s32.totalorder %s18, 1
    %p99 = por %p97, %p98
    %p100 = scmp.ne.s32.totalorder %s91, %s92
    %p101 = scmp.eq.s32.totalorder %s18, 0
    %p102 = por %p100, %p101
    %p103 = scmp.ne.s32.totalorder %s91, %s92
    %p104 = scmp.eq.s32.totalorder %s19, 1
    %p105 = por %p103, %p104
    %p107 = scmp.ne.s32.totalorder %s92, %s106
    %p108 = scmp.eq.s32.totalorder %s19, 0
    %p109 = por %p107, %p108
    %s111 = sadd.s32 %s110, 1
    %p114 = scmp.eq.s32.totalorder %s13, 1
    %p115 = scmp.ne.s32.totalorder %s110, %s112
    %p116 = scmp.eq.s32.totalorder %s13, 0
    %p117 = por %p115, %p116
    %p118 = scmp.ne.s32.totalorder %s110, %s112
    %p119 = scmp.eq.s32.totalorder %s18, 1
    %p120 = por %p118, %p119
    %p121 = scmp.ne.s32.totalorder %s112, %s113
    %p122 = scmp.eq.s32.totalorder %s18, 0
    %p123 = por %p121, %p122
    %p124 = scmp.ne.s32.totalorder %s112, %s113
    %p125 = scmp.eq.s32.totalorder %s19, 1
    %p126 = por %p124, %p125
    %p128 = scmp.ne.s32.totalorder %s113, %s127
    %p129 = scmp.eq.s32.totalorder %s19, 0
    %p130 = por %p128, %p129
    %s132 = sadd.s32 %s131, 1
    %p135 = scmp.eq.s32.totalorder %s13, 1
    %p136 = scmp.ne.s32.totalorder %s131, %s133
    %p137 = scmp.eq.s32.totalorder %s13, 0
    %p138 = por %p136, %p137
    %p139 = scmp.ne.s32.totalorder %s131, %s133
    %p140 = scmp.eq.s32.totalorder %s18, 1
    %p141 = por %p139, %p140
    %p142 = scmp.ne.s32.totalorder %s133, %s134
    %p143 = scmp.eq.s32.totalorder %s18, 0
    %p144 = por %p142, %p143
    %p145 = scmp.ne.s32.totalorder %s133, %s134
    %p146 = scmp.eq.s32.totalorder %s19, 1
    %p147 = por %p145, %p146
    %p149 = scmp.ne.s32.totalorder %s134, %s148
    %p150 = scmp.eq.s32.totalorder %s19, 0
    %p151 = por %p149, %p150
    %s153 = sadd.s32 %s152, 1
    %p156 = scmp.eq.s32.totalorder %s13, 1
    %p157 = scmp.ne.s32.totalorder %s152, %s154
    %p158 = scmp.eq.s32.totalorder %s13, 0
    %p159 = por %p157, %p158
    %p160 = scmp.ne.s32.totalorder %s152, %s154
    %p161 = scmp.eq.s32.totalorder %s18, 1
    %p162 = por %p160, %p161
    %p163 = scmp.ne.s32.totalorder %s154, %s155
    %p164 = scmp.eq.s32.totalorder %s18, 0
    %p165 = por %p163, %p164
    %p166 = scmp.ne.s32.totalorder %s154, %s155
    %p167 = scmp.eq.s32.totalorder %s19, 1
    %p168 = por %p166, %p167
    %p170 = scmp.ne.s32.totalorder %s155, %s169
    %p171 = scmp.eq.s32.totalorder %s19, 0
    %p172 = por %p170, %p171
    %s173 = ssub.s32 %s13, %s20
    %p174 = scmp.eq.s32.totalorder %s173, 0
    %s176 = sadd.s32 %s175, 1
    %s177 = scalar_select %p174, %s175, %s176
    %p180 = pneg %p174
    %p181 = scmp.eq.s32.totalorder %s13, 1
    %p182 = por %p180, %p181
    %p183 = scmp.ne.s32.totalorder %s175, %s178
    %p184 = scmp.eq.s32.totalorder %s13, 0
    %p185 = por %p183, %p184
    %p186 = scmp.ne.s32.totalorder %s175, %s178
    %p187 = scmp.eq.s32.totalorder %s18, 1
    %p188 = por %p186, %p187
    %p189 = scmp.ne.s32.totalorder %s178, %s179
    %p190 = scmp.eq.s32.totalorder %s18, 0
    %p191 = por %p189, %p190
    %p192 = scmp.ne.s32.totalorder %s178, %s179
    %p193 = scmp.eq.s32.totalorder %s19, 1
    %p194 = por %p192, %p193
    %p196 = scmp.ne.s32.totalorder %s179, %s195
    %p197 = scmp.eq.s32.totalorder %s19, 0
    %p198 = por %p196, %p197
    %p199 = scmp.le.s32.totalorder 1, %s13
    %p200 = scmp.lt.s32.totalorder %s13, 3
    %p201 = pnand %p199, %p200
    %p202 = pneg %p201
    // Predicated region
    $region9: #{tpu_custom_call.1} parent=5 // pred_check
      _
    $region10: #{tpu_custom_call.1} parent=5 // pred_check_branch
      %204 = sbr.rel (%p201) target = $region12
    $region11: #{tpu_custom_call.1} parent=5 // pred_region
      %s205 = ssub.s32 %s13, 1
      // Predicated region
      $region13: #{tpu_custom_call.1} parent=11 // pred_check
        %p206 = pneg %p60
      $region14: #{tpu_custom_call.1} parent=11 // pred_check_branch
        %208 = sbr.rel (%p206) target = $region16
      $region15: #{tpu_custom_call.1} parent=11 // pred_region
        _
      $region16: #{tpu_custom_call.1} parent=11 // pred_fallthru
        _
      // Predicated region
      $region17: #{tpu_custom_call.1} parent=11 // pred_check
        %p209 = pneg %p81
      $region18: #{tpu_custom_call.1} parent=11 // pred_check_branch
        %211 = sbr.rel (%p209) target = $region20
      $region19: #{tpu_custom_call.1} parent=11 // pred_region
        _
      $region20: #{tpu_custom_call.1} parent=11 // pred_fallthru
        _
      // Predicated region
      $region21: #{tpu_custom_call.1} parent=11 // pred_check
        %p212 = pneg %p102
      $region22: #{tpu_custom_call.1} parent=11 // pred_check_branch
        %214 = sbr.rel (%p212) target = $region24
      $region23: #{tpu_custom_call.1} parent=11 // pred_region
        _
      $region24: #{tpu_custom_call.1} parent=11 // pred_fallthru
        _
      // Predicated region
      $region25: #{tpu_custom_call.1} parent=11 // pred_check
        %p215 = pneg %p123
      $region26: #{tpu_custom_call.1} parent=11 // pred_check_branch
        %217 = sbr.rel (%p215) target = $region28
      $region27: #{tpu_custom_call.1} parent=11 // pred_region
        _
      $region28: #{tpu_custom_call.1} parent=11 // pred_fallthru
        _
      // Predicated region
      $region29: #{tpu_custom_call.1} parent=11 // pred_check
        %p218 = pneg %p144
      $region30: #{tpu_custom_call.1} parent=11 // pred_check_branch
        %220 = sbr.rel (%p218) target = $region32
      $region31: #{tpu_custom_call.1} parent=11 // pred_region
        _
      $region32: #{tpu_custom_call.1} parent=11 // pred_fallthru
        _
      // Predicated region
      $region33: #{tpu_custom_call.1} parent=11 // pred_check
        %p221 = pneg %p165
      $region34: #{tpu_custom_call.1} parent=11 // pred_check_branch
        %223 = sbr.rel (%p221) target = $region36
      $region35: #{tpu_custom_call.1} parent=11 // pred_region
        _
      $region36: #{tpu_custom_call.1} parent=11 // pred_fallthru
        _
    $region12: #{tpu_custom_call.1} parent=5 // pred_fallthru
      _
    %p224 = scmp.lt.s32.totalorder %s13, 2
    // Predicated region
    $region37: #{tpu_custom_call.1} parent=5 // pred_check
      %p225 = pneg %p224
    $region38: #{tpu_custom_call.1} parent=5 // pred_check_branch
      %227 = sbr.rel (%p225) target = $region40
    $region39: #{tpu_custom_call.1} parent=5 // pred_region
      // Predicated region
      $region41: #{tpu_custom_call.1} parent=39 // pred_check
        %p228 = pneg %p33
      $region42: #{tpu_custom_call.1} parent=39 // pred_check_branch
        %230 = sbr.rel (%p228) target = $region44
      $region43: #{tpu_custom_call.1} parent=39 // pred_region
        %p231 = scmp.lt.s32.totalorder %s13, 1
        %s232 = scalar_select %p231, %s13, 1
        %s233 = smul.addr %s232, 32
        %s234 = smul.addr %s233, 8
        %s235 = scalar_lea.vmem %s0, %s234
      $region44: #{tpu_custom_call.1} parent=39 // pred_fallthru
        _
    $region40: #{tpu_custom_call.1} parent=5 // pred_fallthru
      _
    %p236 = scmp.le.s32.totalorder 1, %s13
    %p237 = scmp.lt.s32.totalorder %s13, 3
    %p238 = pnand %p236, %p237
    %p239 = pneg %p238
    // Predicated region
    $region45: #{tpu_custom_call.1} parent=5 // pred_check
      _
    $region46: #{tpu_custom_call.1} parent=5 // pred_check_branch
      %241 = sbr.rel (%p238) target = $region48
    $region47: #{tpu_custom_call.1} parent=5 // pred_region
      %s242 = ssub.s32 %s13, 1
      %p243 = scmp.lt.s32.totalorder %s18, 1
      %s244 = scalar_select %p243, %s18, 1
      %s245 = smul.addr %s244, 32
      %s246 = smul.addr %s245, 8
      %s247 = scalar_lea.vmem %s0, %s246
      %p248 = pneg %p39
      %p249 = pneg %p36
      %p250 = pneg %p60
      %p251 = pneg %p57
      %p252 = pneg %p81
      %p253 = pneg %p78
      %p254 = pneg %p102
      %p255 = pneg %p99
      %p256 = pneg %p123
      %p257 = pneg %p120
      %p258 = pneg %p144
      %p259 = pneg %p141
      %p260 = pneg %p165
      %p261 = pneg %p162
      %p262 = pneg %p191
      %p263 = pneg %p188
      %p264 = scmp.lt.s32.totalorder %s18, 1
      %s265 = scalar_select %p264, %s18, 1
      %s266 = smul.addr %s265, 32
      %s267 = smul.addr %s266, 8
      %s268 = scalar_lea.vmem %s7, %s267
      %p269 = scmp.lt.s32.totalorder %s18, 1
      %s270 = scalar_select %p269, %s18, 1
      %s271 = smul.addr %s270, 32
      %s272 = smul.addr %s271, 8
      %s273 = scalar_lea.vmem %s0, %s272
      %p274 = scmp.lt.s32.totalorder %s18, 1
      %s275 = scalar_select %p274, %s18, 1
      %s276 = smul.addr %s275, 32
      %s277 = smul.addr %s276, 8
      %s278 = scalar_lea.vmem %s7, %s277
      %vm279 = vcmask 31744
      %280 = vst.msk [vmem:[#allocation2] sm:$0xff] %vm279, 0.0
      %281 = vst.msk [vmem:[#allocation2 + $0x8] sm:$0xff] %vm279, 0.0
      %vm282 = vcmask 25600
      %283 = vst.msk [vmem:[#allocation2 + $0x10] sm:$0x3] %vm282, 0.0
      %s284 = scalar_lea.vmem [#allocation2], 408
      %285 = vst.msk [vmem:[%s284] sm:$0xff] %vm279, 0.0
      %286 = vst.msk [vmem:[%s284 + $0x8] sm:$0xff] %vm279, 0.0
      %287 = vst.msk [vmem:[%s284 + $0x10] sm:$0x3] %vm282, 0.0
      %vm288 = vcmask 24576
      %289 = vst.msk [vmem:[#allocation2] sm:$0x1] %vm288, 0.0
      %290 = vst.msk [vmem:[#allocation2 + $0x18] sm:$0x1] %vm288, 0.0
      %291 = vst.msk [vmem:[#allocation2 + $0x30] sm:$0x1] %vm288, 0.0
      %292 = vst.msk [vmem:[#allocation2 + $0x48] sm:$0x1] %vm288, 0.0
      %293 = vst.msk [vmem:[#allocation2 + $0x60] sm:$0x1] %vm288, 0.0
      %294 = vst.msk [vmem:[#allocation2 + $0x78] sm:$0x1] %vm288, 0.0
      %295 = vst.msk [vmem:[#allocation2 + $0x90] sm:$0x1] %vm288, 0.0
      %296 = vst.msk [vmem:[#allocation2 + $0xa8] sm:$0x1] %vm288, 0.0
      %297 = vst.msk [vmem:[#allocation2 + $0xc0] sm:$0x1] %vm288, 0.0
      %298 = vst.msk [vmem:[#allocation2 + $0xd8] sm:$0x1] %vm288, 0.0
      %299 = vst.msk [vmem:[#allocation2 + $0xf0] sm:$0x1] %vm288, 0.0
      %300 = vst.msk [vmem:[#allocation2 + $0x108] sm:$0x1] %vm288, 0.0
      %301 = vst.msk [vmem:[#allocation2 + $0x120] sm:$0x1] %vm288, 0.0
      %302 = vst.msk [vmem:[#allocation2 + $0x138] sm:$0x1] %vm288, 0.0
      %303 = vst.msk [vmem:[#allocation2 + $0x150] sm:$0x1] %vm288, 0.0
      %304 = vst.msk [vmem:[#allocation2 + $0x168] sm:$0x1] %vm288, 0.0
      %305 = vst.msk [vmem:[#allocation2 + $0x180] sm:$0x1] %vm288, 0.0
      %306 = vst.msk [vmem:[#allocation2 + $0x198] sm:$0x1] %vm288, 0.0
      %307 = vst.msk [vmem:[#allocation2 + $0x11] sm:$0x1] %vm288, 0.0
      %308 = vst.msk [vmem:[#allocation2 + $0x29] sm:$0x1] %vm288, 0.0
      %309 = vst.msk [vmem:[#allocation2 + $0x41] sm:$0x1] %vm288, 0.0
      %310 = vst.msk [vmem:[#allocation2 + $0x59] sm:$0x1] %vm288, 0.0
      %311 = vst.msk [vmem:[#allocation2 + $0x71] sm:$0x1] %vm288, 0.0
      %312 = vst.msk [vmem:[#allocation2 + $0x89] sm:$0x1] %vm288, 0.0
      %313 = vst.msk [vmem:[#allocation2 + $0xa1] sm:$0x1] %vm288, 0.0
      %314 = vst.msk [vmem:[#allocation2 + $0xb9] sm:$0x1] %vm288, 0.0
      %315 = vst.msk [vmem:[#allocation2 + $0xd1] sm:$0x1] %vm288, 0.0
      %316 = vst.msk [vmem:[#allocation2 + $0xe9] sm:$0x1] %vm288, 0.0
      %317 = vst.msk [vmem:[#allocation2 + $0x101] sm:$0x1] %vm288, 0.0
      %318 = vst.msk [vmem:[#allocation2 + $0x119] sm:$0x1] %vm288, 0.0
      %319 = vst.msk [vmem:[#allocation2 + $0x131] sm:$0x1] %vm288, 0.0
      %320 = vst.msk [vmem:[#allocation2 + $0x149] sm:$0x1] %vm288, 0.0
      %321 = vst.msk [vmem:[#allocation2 + $0x161] sm:$0x1] %vm288, 0.0
      %322 = vst.msk [vmem:[#allocation2 + $0x179] sm:$0x1] %vm288, 0.0
      %323 = vst.msk [vmem:[#allocation2 + $0x191] sm:$0x1] %vm288, 0.0
      %324 = vst.msk [vmem:[#allocation2 + $0x1a9] sm:$0x1] %vm288, 0.0
      %v325 = vld [vmem:[%s273] sm:$0xff]
      %v326 = vld [vmem:[%s273 + $0x8] sm:$0xff]
      %v327 = vld [vmem:[%s273 + $0x10] sm:$0xff]
      %v328 = vld [vmem:[%s273 + $0x18] sm:$0xff]
      %v329 = vld [vmem:[%s273 + $0x20] sm:$0xff]
      %v330 = vld [vmem:[%s273 + $0x28] sm:$0xff]
      %v331 = vld [vmem:[%s273 + $0x30] sm:$0xff]
      %v332 = vld [vmem:[%s273 + $0x38] sm:$0xff]
      %v333 = vld [vmem:[%s273 + $0x40] sm:$0xff]
      %v334 = vld [vmem:[%s273 + $0x48] sm:$0xff]
      %v335 = vld [vmem:[%s273 + $0x50] sm:$0xff]
      %v336 = vld [vmem:[%s273 + $0x58] sm:$0xff]
      %v337 = vld [vmem:[%s273 + $0x60] sm:$0xff]
      %v338 = vld [vmem:[%s273 + $0x68] sm:$0xff]
      %v339 = vld [vmem:[%s273 + $0x70] sm:$0xff]
      %v340 = vld [vmem:[%s273 + $0x78] sm:$0xff]
      %v341 = vld [vmem:[%s273 + $0x80] sm:$0xff]
      %v342 = vld [vmem:[%s273 + $0x88] sm:$0xff]
      %v343 = vld [vmem:[%s273 + $0x90] sm:$0xff]
      %v344 = vld [vmem:[%s273 + $0x98] sm:$0xff]
      %v345 = vld [vmem:[%s273 + $0xa0] sm:$0xff]
      %v346 = vld [vmem:[%s273 + $0xa8] sm:$0xff]
      %v347 = vld [vmem:[%s273 + $0xb0] sm:$0xff]
      %v348 = vld [vmem:[%s273 + $0xb8] sm:$0xff]
      %v349 = vld [vmem:[%s273 + $0xc0] sm:$0xff]
      %v350 = vld [vmem:[%s273 + $0xc8] sm:$0xff]
      %v351 = vld [vmem:[%s273 + $0xd0] sm:$0xff]
      %v352 = vld [vmem:[%s273 + $0xd8] sm:$0xff]
      %v353 = vld [vmem:[%s273 + $0xe0] sm:$0xff]
      %v354 = vld [vmem:[%s273 + $0xe8] sm:$0xff]
      %v355 = vld [vmem:[%s273 + $0xf0] sm:$0xff]
      %v356 = vld [vmem:[%s273 + $0xf8] sm:$0xff]
      %s357 = scalar_lea.vmem [#allocation2], 24
      %358 = vst.msk [vmem:[%s357 + $0x1] sm:$0xff] %vm279, %v325
      %359 = vst.msk [vmem:[%s357 + $0x9] sm:$0xff] %vm279, %v326
      %360 = vst.msk [vmem:[%s357 + $0x19] sm:$0xff] %vm279, %v327
      %361 = vst.msk [vmem:[%s357 + $0x21] sm:$0xff] %vm279, %v328
      %362 = vst.msk [vmem:[%s357 + $0x31] sm:$0xff] %vm279, %v329
      %363 = vst.msk [vmem:[%s357 + $0x39] sm:$0xff] %vm279, %v330
      %364 = vst.msk [vmem:[%s357 + $0x49] sm:$0xff] %vm279, %v331
      %365 = vst.msk [vmem:[%s357 + $0x51] sm:$0xff] %vm279, %v332
      %366 = vst.msk [vmem:[%s357 + $0x61] sm:$0xff] %vm279, %v333
      %367 = vst.msk [vmem:[%s357 + $0x69] sm:$0xff] %vm279, %v334
      %368 = vst.msk [vmem:[%s357 + $0x79] sm:$0xff] %vm279, %v335
      %369 = vst.msk [vmem:[%s357 + $0x81] sm:$0xff] %vm279, %v336
      %370 = vst.msk [vmem:[%s357 + $0x91] sm:$0xff] %vm279, %v337
      %371 = vst.msk [vmem:[%s357 + $0x99] sm:$0xff] %vm279, %v338
      %372 = vst.msk [vmem:[%s357 + $0xa9] sm:$0xff] %vm279, %v339
      %373 = vst.msk [vmem:[%s357 + $0xb1] sm:$0xff] %vm279, %v340
      %374 = vst.msk [vmem:[%s357 + $0xc1] sm:$0xff] %vm279, %v341
      %375 = vst.msk [vmem:[%s357 + $0xc9] sm:$0xff] %vm279, %v342
      %376 = vst.msk [vmem:[%s357 + $0xd9] sm:$0xff] %vm279, %v343
      %377 = vst.msk [vmem:[%s357 + $0xe1] sm:$0xff] %vm279, %v344
      %378 = vst.msk [vmem:[%s357 + $0xf1] sm:$0xff] %vm279, %v345
      %379 = vst.msk [vmem:[%s357 + $0xf9] sm:$0xff] %vm279, %v346
      %380 = vst.msk [vmem:[%s357 + $0x109] sm:$0xff] %vm279, %v347
      %381 = vst.msk [vmem:[%s357 + $0x111] sm:$0xff] %vm279, %v348
      %382 = vst.msk [vmem:[%s357 + $0x121] sm:$0xff] %vm279, %v349
      %383 = vst.msk [vmem:[%s357 + $0x129] sm:$0xff] %vm279, %v350
      %384 = vst.msk [vmem:[%s357 + $0x139] sm:$0xff] %vm279, %v351
      %385 = vst.msk [vmem:[%s357 + $0x141] sm:$0xff] %vm279, %v352
      %386 = vst.msk [vmem:[%s357 + $0x151] sm:$0xff] %vm279, %v353
      %387 = vst.msk [vmem:[%s357 + $0x159] sm:$0xff] %vm279, %v354
      %388 = vst.msk [vmem:[%s357 + $0x169] sm:$0xff] %vm279, %v355
      %389 = vst.msk [vmem:[%s357 + $0x171] sm:$0xff] %vm279, %v356
      %v390 = vld [vmem:[#allocation2] sm:$0xff]
      %v391 = vld [vmem:[#allocation2 + $0x8] sm:$0xff]
      %v392 = vld [vmem:[#allocation2 + $0x18] sm:$0xff]
      %v393 = vld [vmem:[#allocation2 + $0x20] sm:$0xff]
      %v394 = vld [vmem:[#allocation2 + $0x30] sm:$0xff]
      %v395 = vld [vmem:[#allocation2 + $0x38] sm:$0xff]
      %v396 = vld [vmem:[#allocation2 + $0x48] sm:$0xff]
      %v397 = vld [vmem:[#allocation2 + $0x50] sm:$0xff]
      %v398 = vld [vmem:[#allocation2 + $0x60] sm:$0xff]
      %v399 = vld [vmem:[#allocation2 + $0x68] sm:$0xff]
      %v400 = vld [vmem:[#allocation2 + $0x78] sm:$0xff]
      %v401 = vld [vmem:[#allocation2 + $0x80] sm:$0xff]
      %v402 = vld [vmem:[#allocation2 + $0x90] sm:$0xff]
      %v403 = vld [vmem:[#allocation2 + $0x98] sm:$0xff]
      %v404 = vld [vmem:[#allocation2 + $0xa8] sm:$0xff]
      %v405 = vld [vmem:[#allocation2 + $0xb0] sm:$0xff]
      %v406 = vld [vmem:[#allocation2 + $0xc0] sm:$0xff]
      %v407 = vld [vmem:[#allocation2 + $0xc8] sm:$0xff]
      %v408 = vld [vmem:[#allocation2 + $0xd8] sm:$0xff]
      %v409 = vld [vmem:[#allocation2 + $0xe0] sm:$0xff]
      %v410 = vld [vmem:[#allocation2 + $0xf0] sm:$0xff]
      %v411 = vld [vmem:[#allocation2 + $0xf8] sm:$0xff]
      %v412 = vld [vmem:[#allocation2 + $0x108] sm:$0xff]
      %v413 = vld [vmem:[#allocation2 + $0x110] sm:$0xff]
      %v414 = vld [vmem:[#allocation2 + $0x120] sm:$0xff]
      %v415 = vld [vmem:[#allocation2 + $0x128] sm:$0xff]
      %v416 = vld [vmem:[#allocation2 + $0x138] sm:$0xff]
      %v417 = vld [vmem:[#allocation2 + $0x140] sm:$0xff]
      %v418 = vld [vmem:[#allocation2 + $0x150] sm:$0xff]
      %v419 = vld [vmem:[#allocation2 + $0x158] sm:$0xff]
      %v420 = vld [vmem:[#allocation2 + $0x168] sm:$0xff]
      %v421 = vld [vmem:[#allocation2 + $0x170] sm:$0xff]
      %422 = vst.msk [vmem:[#allocation3] sm:$0xff] %vm279, %v390
      %423 = vst.msk [vmem:[#allocation3 + $0x8] sm:$0xff] %vm279, %v391
      %424 = vst.msk [vmem:[#allocation3 + $0x10] sm:$0xff] %vm279, %v392
      %425 = vst.msk [vmem:[#allocation3 + $0x18] sm:$0xff] %vm279, %v393
      %426 = vst.msk [vmem:[#allocation3 + $0x20] sm:$0xff] %vm279, %v394
      %427 = vst.msk [vmem:[#allocation3 + $0x28] sm:$0xff] %vm279, %v395
      %428 = vst.msk [vmem:[#allocation3 + $0x30] sm:$0xff] %vm279, %v396
      %429 = vst.msk [vmem:[#allocation3 + $0x38] sm:$0xff] %vm279, %v397
      %430 = vst.msk [vmem:[#allocation3 + $0x40] sm:$0xff] %vm279, %v398
      %431 = vst.msk [vmem:[#allocation3 + $0x48] sm:$0xff] %vm279, %v399
      %432 = vst.msk [vmem:[#allocation3 + $0x50] sm:$0xff] %vm279, %v400
      %433 = vst.msk [vmem:[#allocation3 + $0x58] sm:$0xff] %vm279, %v401
      %434 = vst.msk [vmem:[#allocation3 + $0x60] sm:$0xff] %vm279, %v402
      %435 = vst.msk [vmem:[#allocation3 + $0x68] sm:$0xff] %vm279, %v403
      %436 = vst.msk [vmem:[#allocation3 + $0x70] sm:$0xff] %vm279, %v404
      %437 = vst.msk [vmem:[#allocation3 + $0x78] sm:$0xff] %vm279, %v405
      %438 = vst.msk [vmem:[#allocation3 + $0x80] sm:$0xff] %vm279, %v406
      %439 = vst.msk [vmem:[#allocation3 + $0x88] sm:$0xff] %vm279, %v407
      %440 = vst.msk [vmem:[#allocation3 + $0x90] sm:$0xff] %vm279, %v408
      %441 = vst.msk [vmem:[#allocation3 + $0x98] sm:$0xff] %vm279, %v409
      %442 = vst.msk [vmem:[#allocation3 + $0xa0] sm:$0xff] %vm279, %v410
      %443 = vst.msk [vmem:[#allocation3 + $0xa8] sm:$0xff] %vm279, %v411
      %444 = vst.msk [vmem:[#allocation3 + $0xb0] sm:$0xff] %vm279, %v412
      %445 = vst.msk [vmem:[#allocation3 + $0xb8] sm:$0xff] %vm279, %v413
      %446 = vst.msk [vmem:[#allocation3 + $0xc0] sm:$0xff] %vm279, %v414
      %447 = vst.msk [vmem:[#allocation3 + $0xc8] sm:$0xff] %vm279, %v415
      %448 = vst.msk [vmem:[#allocation3 + $0xd0] sm:$0xff] %vm279, %v416
      %449 = vst.msk [vmem:[#allocation3 + $0xd8] sm:$0xff] %vm279, %v417
      %450 = vst.msk [vmem:[#allocation3 + $0xe0] sm:$0xff] %vm279, %v418
      %451 = vst.msk [vmem:[#allocation3 + $0xe8] sm:$0xff] %vm279, %v419
      %452 = vst.msk [vmem:[#allocation3 + $0xf0] sm:$0xff] %vm279, %v420
      %453 = vst.msk [vmem:[#allocation3 + $0xf8] sm:$0xff] %vm279, %v421
      %v454 = vld [vmem:[#allocation2 + $0x1] sm:$0xff]
      %v455 = vld [vmem:[#allocation2 + $0x9] sm:$0xff]
      %v456 = vld [vmem:[#allocation2 + $0x19] sm:$0xff]
      %v457 = vld [vmem:[#allocation2 + $0x21] sm:$0xff]
      %v458 = vld [vmem:[#allocation2 + $0x31] sm:$0xff]
      %v459 = vld [vmem:[#allocation2 + $0x39] sm:$0xff]
      %v460 = vld [vmem:[#allocation2 + $0x49] sm:$0xff]
      %v461 = vld [vmem:[#allocation2 + $0x51] sm:$0xff]
      %v462 = vld [vmem:[#allocation2 + $0x61] sm:$0xff]
      %v463 = vld [vmem:[#allocation2 + $0x69] sm:$0xff]
      %v464 = vld [vmem:[#allocation2 + $0x79] sm:$0xff]
      %v465 = vld [vmem:[#allocation2 + $0x81] sm:$0xff]
      %v466 = vld [vmem:[#allocation2 + $0x91] sm:$0xff]
      %v467 = vld [vmem:[#allocation2 + $0x99] sm:$0xff]
      %v468 = vld [vmem:[#allocation2 + $0xa9] sm:$0xff]
      %v469 = vld [vmem:[#allocation2 + $0xb1] sm:$0xff]
      %v470 = vld [vmem:[#allocation2 + $0xc1] sm:$0xff]
      %v471 = vld [vmem:[#allocation2 + $0xc9] sm:$0xff]
      %v472 = vld [vmem:[#allocation2 + $0xd9] sm:$0xff]
      %v473 = vld [vmem:[#allocation2 + $0xe1] sm:$0xff]
      %v474 = vld [vmem:[#allocation2 + $0xf1] sm:$0xff]
      %v475 = vld [vmem:[#allocation2 + $0xf9] sm:$0xff]
      %v476 = vld [vmem:[#allocation2 + $0x109] sm:$0xff]
      %v477 = vld [vmem:[#allocation2 + $0x111] sm:$0xff]
      %v478 = vld [vmem:[#allocation2 + $0x121] sm:$0xff]
      %v479 = vld [vmem:[#allocation2 + $0x129] sm:$0xff]
      %v480 = vld [vmem:[#allocation2 + $0x139] sm:$0xff]
      %v481 = vld [vmem:[#allocation2 + $0x141] sm:$0xff]
      %v482 = vld [vmem:[#allocation2 + $0x151] sm:$0xff]
      %v483 = vld [vmem:[#allocation2 + $0x159] sm:$0xff]
      %v484 = vld [vmem:[#allocation2 + $0x169] sm:$0xff]
      %v485 = vld [vmem:[#allocation2 + $0x171] sm:$0xff]
      %518 = vrot.lane.b32.xlu0 %v454, 4
      %v519 = vpop.permute.xlu0 %518
      %520 = vrot.lane.b32.xlu0 %v455, 4
      %v521 = vpop.permute.xlu0 %520
      %522 = vrot.lane.b32.xlu0 %v456, 4
      %v523 = vpop.permute.xlu0 %522
      %524 = vrot.lane.b32.xlu0 %v457, 4
      %v525 = vpop.permute.xlu0 %524
      %526 = vrot.lane.b32.xlu0 %v458, 4
      %v527 = vpop.permute.xlu0 %526
      %528 = vrot.lane.b32.xlu0 %v459, 4
      %v529 = vpop.permute.xlu0 %528
      %530 = vrot.lane.b32.xlu0 %v460, 4
      %v531 = vpop.permute.xlu0 %530
      %532 = vrot.lane.b32.xlu0 %v461, 4
      %v533 = vpop.permute.xlu0 %532
      %534 = vrot.lane.b32.xlu0 %v462, 4
      %v535 = vpop.permute.xlu0 %534
      %536 = vrot.lane.b32.xlu0 %v463, 4
      %v537 = vpop.permute.xlu0 %536
      %538 = vrot.lane.b32.xlu0 %v464, 4
      %v539 = vpop.permute.xlu0 %538
      %540 = vrot.lane.b32.xlu0 %v465, 4
      %v541 = vpop.permute.xlu0 %540
      %542 = vrot.lane.b32.xlu0 %v466, 4
      %v543 = vpop.permute.xlu0 %542
      %544 = vrot.lane.b32.xlu0 %v467, 4
      %v545 = vpop.permute.xlu0 %544
      %546 = vrot.lane.b32.xlu0 %v468, 4
      %v547 = vpop.permute.xlu0 %546
      %548 = vrot.lane.b32.xlu0 %v469, 4
      %v549 = vpop.permute.xlu0 %548
      %550 = vrot.lane.b32.xlu0 %v470, 4
      %v551 = vpop.permute.xlu0 %550
      %552 = vrot.lane.b32.xlu0 %v471, 4
      %v553 = vpop.permute.xlu0 %552
      %554 = vrot.lane.b32.xlu0 %v472, 4
      %v555 = vpop.permute.xlu0 %554
      %556 = vrot.lane.b32.xlu0 %v473, 4
      %v557 = vpop.permute.xlu0 %556
      %558 = vrot.lane.b32.xlu0 %v474, 4
      %v559 = vpop.permute.xlu0 %558
      %560 = vrot.lane.b32.xlu0 %v475, 4
      %v561 = vpop.permute.xlu0 %560
      %562 = vrot.lane.b32.xlu0 %v476, 4
      %v563 = vpop.permute.xlu0 %562
      %564 = vrot.lane.b32.xlu0 %v477, 4
      %v565 = vpop.permute.xlu0 %564
      %566 = vrot.lane.b32.xlu0 %v478, 4
      %v567 = vpop.permute.xlu0 %566
      %568 = vrot.lane.b32.xlu0 %v479, 4
      %v569 = vpop.permute.xlu0 %568
      %570 = vrot.lane.b32.xlu0 %v480, 4
      %v571 = vpop.permute.xlu0 %570
      %572 = vrot.lane.b32.xlu0 %v481, 4
      %v573 = vpop.permute.xlu0 %572
      %574 = vrot.lane.b32.xlu0 %v482, 4
      %v575 = vpop.permute.xlu0 %574
      %576 = vrot.lane.b32.xlu0 %v483, 4
      %v577 = vpop.permute.xlu0 %576
      %578 = vrot.lane.b32.xlu0 %v484, 4
      %v579 = vpop.permute.xlu0 %578
      %580 = vrot.lane.b32.xlu0 %v485, 4
      %v581 = vpop.permute.xlu0 %580
      %vm614 = vcmask 64544
      %615 = vst.msk [vmem:[#allocation3] sm:$0xff] %vm614, %v519
      %616 = vst.msk [vmem:[#allocation3 + $0x8] sm:$0xff] %vm614, %v521
      %617 = vst.msk [vmem:[#allocation3 + $0x10] sm:$0xff] %vm614, %v523
      %618 = vst.msk [vmem:[#allocation3 + $0x18] sm:$0xff] %vm614, %v525
      %619 = vst.msk [vmem:[#allocation3 + $0x20] sm:$0xff] %vm614, %v527
      %620 = vst.msk [vmem:[#allocation3 + $0x28] sm:$0xff] %vm614, %v529
      %621 = vst.msk [vmem:[#allocation3 + $0x30] sm:$0xff] %vm614, %v531
      %622 = vst.msk [vmem:[#allocation3 + $0x38] sm:$0xff] %vm614, %v533
      %623 = vst.msk [vmem:[#allocation3 + $0x40] sm:$0xff] %vm614, %v535
      %624 = vst.msk [vmem:[#allocation3 + $0x48] sm:$0xff] %vm614, %v537
      %625 = vst.msk [vmem:[#allocation3 + $0x50] sm:$0xff] %vm614, %v539
      %626 = vst.msk [vmem:[#allocation3 + $0x58] sm:$0xff] %vm614, %v541
      %627 = vst.msk [vmem:[#allocation3 + $0x60] sm:$0xff] %vm614, %v543
      %628 = vst.msk [vmem:[#allocation3 + $0x68] sm:$0xff] %vm614, %v545
      %629 = vst.msk [vmem:[#allocation3 + $0x70] sm:$0xff] %vm614, %v547
      %630 = vst.msk [vmem:[#allocation3 + $0x78] sm:$0xff] %vm614, %v549
      %631 = vst.msk [vmem:[#allocation3 + $0x80] sm:$0xff] %vm614, %v551
      %632 = vst.msk [vmem:[#allocation3 + $0x88] sm:$0xff] %vm614, %v553
      %633 = vst.msk [vmem:[#allocation3 + $0x90] sm:$0xff] %vm614, %v555
      %634 = vst.msk [vmem:[#allocation3 + $0x98] sm:$0xff] %vm614, %v557
      %635 = vst.msk [vmem:[#allocation3 + $0xa0] sm:$0xff] %vm614, %v559
      %636 = vst.msk [vmem:[#allocation3 + $0xa8] sm:$0xff] %vm614, %v561
      %637 = vst.msk [vmem:[#allocation3 + $0xb0] sm:$0xff] %vm614, %v563
      %638 = vst.msk [vmem:[#allocation3 + $0xb8] sm:$0xff] %vm614, %v565
      %639 = vst.msk [vmem:[#allocation3 + $0xc0] sm:$0xff] %vm614, %v567
      %640 = vst.msk [vmem:[#allocation3 + $0xc8] sm:$0xff] %vm614, %v569
      %641 = vst.msk [vmem:[#allocation3 + $0xd0] sm:$0xff] %vm614, %v571
      %642 = vst.msk [vmem:[#allocation3 + $0xd8] sm:$0xff] %vm614, %v573
      %643 = vst.msk [vmem:[#allocation3 + $0xe0] sm:$0xff] %vm614, %v575
      %644 = vst.msk [vmem:[#allocation3 + $0xe8] sm:$0xff] %vm614, %v577
      %645 = vst.msk [vmem:[#allocation3 + $0xf0] sm:$0xff] %vm614, %v579
      %646 = vst.msk [vmem:[#allocation3 + $0xf8] sm:$0xff] %vm614, %v581
      %v647 = vld [vmem:[#allocation2 + $0x2] sm:$0xff]
      %v648 = vld [vmem:[#allocation2 + $0xa] sm:$0xff]
      %v649 = vld [vmem:[#allocation2 + $0x1a] sm:$0xff]
      %v650 = vld [vmem:[#allocation2 + $0x22] sm:$0xff]
      %v651 = vld [vmem:[#allocation2 + $0x32] sm:$0xff]
      %v652 = vld [vmem:[#allocation2 + $0x3a] sm:$0xff]
      %v653 = vld [vmem:[#allocation2 + $0x4a] sm:$0xff]
      %v654 = vld [vmem:[#allocation2 + $0x52] sm:$0xff]
      %v655 = vld [vmem:[#allocation2 + $0x62] sm:$0xff]
      %v656 = vld [vmem:[#allocation2 + $0x6a] sm:$0xff]
      %v657 = vld [vmem:[#allocation2 + $0x7a] sm:$0xff]
      %v658 = vld [vmem:[#allocation2 + $0x82] sm:$0xff]
      %v659 = vld [vmem:[#allocation2 + $0x92] sm:$0xff]
      %v660 = vld [vmem:[#allocation2 + $0x9a] sm:$0xff]
      %v661 = vld [vmem:[#allocation2 + $0xaa] sm:$0xff]
      %v662 = vld [vmem:[#allocation2 + $0xb2] sm:$0xff]
      %v663 = vld [vmem:[#allocation2 + $0xc2] sm:$0xff]
      %v664 = vld [vmem:[#allocation2 + $0xca] sm:$0xff]
      %v665 = vld [vmem:[#allocation2 + $0xda] sm:$0xff]
      %v666 = vld [vmem:[#allocation2 + $0xe2] sm:$0xff]
      %v667 = vld [vmem:[#allocation2 + $0xf2] sm:$0xff]
      %v668 = vld [vmem:[#allocation2 + $0xfa] sm:$0xff]
      %v669 = vld [vmem:[#allocation2 + $0x10a] sm:$0xff]
      %v670 = vld [vmem:[#allocation2 + $0x112] sm:$0xff]
      %v671 = vld [vmem:[#allocation2 + $0x122] sm:$0xff]
      %v672 = vld [vmem:[#allocation2 + $0x12a] sm:$0xff]
      %v673 = vld [vmem:[#allocation2 + $0x13a] sm:$0xff]
      %v674 = vld [vmem:[#allocation2 + $0x142] sm:$0xff]
      %v675 = vld [vmem:[#allocation2 + $0x152] sm:$0xff]
      %v676 = vld [vmem:[#allocation2 + $0x15a] sm:$0xff]
      %v677 = vld [vmem:[#allocation2 + $0x16a] sm:$0xff]
      %v678 = vld [vmem:[#allocation2 + $0x172] sm:$0xff]
      %711 = vrot.lane.b32.xlu0 %v647, 8
      %v712 = vpop.permute.xlu0 %711
      %713 = vrot.lane.b32.xlu0 %v648, 8
      %v714 = vpop.permute.xlu0 %713
      %715 = vrot.lane.b32.xlu0 %v649, 8
      %v716 = vpop.permute.xlu0 %715
      %717 = vrot.lane.b32.xlu0 %v650, 8
      %v718 = vpop.permute.xlu0 %717
      %719 = vrot.lane.b32.xlu0 %v651, 8
      %v720 = vpop.permute.xlu0 %719
      %721 = vrot.lane.b32.xlu0 %v652, 8
      %v722 = vpop.permute.xlu0 %721
      %723 = vrot.lane.b32.xlu0 %v653, 8
      %v724 = vpop.permute.xlu0 %723
      %725 = vrot.lane.b32.xlu0 %v654, 8
      %v726 = vpop.permute.xlu0 %725
      %727 = vrot.lane.b32.xlu0 %v655, 8
      %v728 = vpop.permute.xlu0 %727
      %729 = vrot.lane.b32.xlu0 %v656, 8
      %v730 = vpop.permute.xlu0 %729
      %731 = vrot.lane.b32.xlu0 %v657, 8
      %v732 = vpop.permute.xlu0 %731
      %733 = vrot.lane.b32.xlu0 %v658, 8
      %v734 = vpop.permute.xlu0 %733
      %735 = vrot.lane.b32.xlu0 %v659, 8
      %v736 = vpop.permute.xlu0 %735
      %737 = vrot.lane.b32.xlu0 %v660, 8
      %v738 = vpop.permute.xlu0 %737
      %739 = vrot.lane.b32.xlu0 %v661, 8
      %v740 = vpop.permute.xlu0 %739
      %741 = vrot.lane.b32.xlu0 %v662, 8
      %v742 = vpop.permute.xlu0 %741
      %743 = vrot.lane.b32.xlu0 %v663, 8
      %v744 = vpop.permute.xlu0 %743
      %745 = vrot.lane.b32.xlu0 %v664, 8
      %v746 = vpop.permute.xlu0 %745
      %747 = vrot.lane.b32.xlu0 %v665, 8
      %v748 = vpop.permute.xlu0 %747
      %749 = vrot.lane.b32.xlu0 %v666, 8
      %v750 = vpop.permute.xlu0 %749
      %751 = vrot.lane.b32.xlu0 %v667, 8
      %v752 = vpop.permute.xlu0 %751
      %753 = vrot.lane.b32.xlu0 %v668, 8
      %v754 = vpop.permute.xlu0 %753
      %755 = vrot.lane.b32.xlu0 %v669, 8
      %v756 = vpop.permute.xlu0 %755
      %757 = vrot.lane.b32.xlu0 %v670, 8
      %v758 = vpop.permute.xlu0 %757
      %759 = vrot.lane.b32.xlu0 %v671, 8
      %v760 = vpop.permute.xlu0 %759
      %761 = vrot.lane.b32.xlu0 %v672, 8
      %v762 = vpop.permute.xlu0 %761
      %763 = vrot.lane.b32.xlu0 %v673, 8
      %v764 = vpop.permute.xlu0 %763
      %765 = vrot.lane.b32.xlu0 %v674, 8
      %v766 = vpop.permute.xlu0 %765
      %767 = vrot.lane.b32.xlu0 %v675, 8
      %v768 = vpop.permute.xlu0 %767
      %769 = vrot.lane.b32.xlu0 %v676, 8
      %v770 = vpop.permute.xlu0 %769
      %771 = vrot.lane.b32.xlu0 %v677, 8
      %v772 = vpop.permute.xlu0 %771
      %773 = vrot.lane.b32.xlu0 %v678, 8
      %v774 = vpop.permute.xlu0 %773
      %vm807 = vcmask 97344
      %808 = vst.msk [vmem:[#allocation3] sm:$0xff] %vm807, %v712
      %809 = vst.msk [vmem:[#allocation3 + $0x8] sm:$0xff] %vm807, %v714
      %810 = vst.msk [vmem:[#allocation3 + $0x10] sm:$0xff] %vm807, %v716
      %811 = vst.msk [vmem:[#allocation3 + $0x18] sm:$0xff] %vm807, %v718
      %812 = vst.msk [vmem:[#allocation3 + $0x20] sm:$0xff] %vm807, %v720
      %813 = vst.msk [vmem:[#allocation3 + $0x28] sm:$0xff] %vm807, %v722
      %814 = vst.msk [vmem:[#allocation3 + $0x30] sm:$0xff] %vm807, %v724
      %815 = vst.msk [vmem:[#allocation3 + $0x38] sm:$0xff] %vm807, %v726
      %816 = vst.msk [vmem:[#allocation3 + $0x40] sm:$0xff] %vm807, %v728
      %817 = vst.msk [vmem:[#allocation3 + $0x48] sm:$0xff] %vm807, %v730
      %818 = vst.msk [vmem:[#allocation3 + $0x50] sm:$0xff] %vm807, %v732
      %819 = vst.msk [vmem:[#allocation3 + $0x58] sm:$0xff] %vm807, %v734
      %820 = vst.msk [vmem:[#allocation3 + $0x60] sm:$0xff] %vm807, %v736
      %821 = vst.msk [vmem:[#allocation3 + $0x68] sm:$0xff] %vm807, %v738
      %822 = vst.msk [vmem:[#allocation3 + $0x70] sm:$0xff] %vm807, %v740
      %823 = vst.msk [vmem:[#allocation3 + $0x78] sm:$0xff] %vm807, %v742
      %824 = vst.msk [vmem:[#allocation3 + $0x80] sm:$0xff] %vm807, %v744
      %825 = vst.msk [vmem:[#allocation3 + $0x88] sm:$0xff] %vm807, %v746
      %826 = vst.msk [vmem:[#allocation3 + $0x90] sm:$0xff] %vm807, %v748
      %827 = vst.msk [vmem:[#allocation3 + $0x98] sm:$0xff] %vm807, %v750
      %828 = vst.msk [vmem:[#allocation3 + $0xa0] sm:$0xff] %vm807, %v752
      %829 = vst.msk [vmem:[#allocation3 + $0xa8] sm:$0xff] %vm807, %v754
      %830 = vst.msk [vmem:[#allocation3 + $0xb0] sm:$0xff] %vm807, %v756
      %831 = vst.msk [vmem:[#allocation3 + $0xb8] sm:$0xff] %vm807, %v758
      %832 = vst.msk [vmem:[#allocation3 + $0xc0] sm:$0xff] %vm807, %v760
      %833 = vst.msk [vmem:[#allocation3 + $0xc8] sm:$0xff] %vm807, %v762
      %834 = vst.msk [vmem:[#allocation3 + $0xd0] sm:$0xff] %vm807, %v764
      %835 = vst.msk [vmem:[#allocation3 + $0xd8] sm:$0xff] %vm807, %v766
      %836 = vst.msk [vmem:[#allocation3 + $0xe0] sm:$0xff] %vm807, %v768
      %837 = vst.msk [vmem:[#allocation3 + $0xe8] sm:$0xff] %vm807, %v770
      %838 = vst.msk [vmem:[#allocation3 + $0xf0] sm:$0xff] %vm807, %v772
      %839 = vst.msk [vmem:[#allocation3 + $0xf8] sm:$0xff] %vm807, %v774
      %v840 = vld [vmem:[%s357] sm:$0xff]
      %v841 = vld [vmem:[%s357 + $0x8] sm:$0xff]
      %v842 = vld [vmem:[%s357 + $0x18] sm:$0xff]
      %v843 = vld [vmem:[%s357 + $0x20] sm:$0xff]
      %v844 = vld [vmem:[%s357 + $0x30] sm:$0xff]
      %v845 = vld [vmem:[%s357 + $0x38] sm:$0xff]
      %v846 = vld [vmem:[%s357 + $0x48] sm:$0xff]
      %v847 = vld [vmem:[%s357 + $0x50] sm:$0xff]
      %v848 = vld [vmem:[%s357 + $0x60] sm:$0xff]
      %v849 = vld [vmem:[%s357 + $0x68] sm:$0xff]
      %v850 = vld [vmem:[%s357 + $0x78] sm:$0xff]
      %v851 = vld [vmem:[%s357 + $0x80] sm:$0xff]
      %v852 = vld [vmem:[%s357 + $0x90] sm:$0xff]
      %v853 = vld [vmem:[%s357 + $0x98] sm:$0xff]
      %v854 = vld [vmem:[%s357 + $0xa8] sm:$0xff]
      %v855 = vld [vmem:[%s357 + $0xb0] sm:$0xff]
      %v856 = vld [vmem:[%s357 + $0xc0] sm:$0xff]
      %v857 = vld [vmem:[%s357 + $0xc8] sm:$0xff]
      %v858 = vld [vmem:[%s357 + $0xd8] sm:$0xff]
      %v859 = vld [vmem:[%s357 + $0xe0] sm:$0xff]
      %v860 = vld [vmem:[%s357 + $0xf0] sm:$0xff]
      %v861 = vld [vmem:[%s357 + $0xf8] sm:$0xff]
      %v862 = vld [vmem:[%s357 + $0x108] sm:$0xff]
      %v863 = vld [vmem:[%s357 + $0x110] sm:$0xff]
      %v864 = vld [vmem:[%s357 + $0x120] sm:$0xff]
      %v865 = vld [vmem:[%s357 + $0x128] sm:$0xff]
      %v866 = vld [vmem:[%s357 + $0x138] sm:$0xff]
      %v867 = vld [vmem:[%s357 + $0x140] sm:$0xff]
      %v868 = vld [vmem:[%s357 + $0x150] sm:$0xff]
      %v869 = vld [vmem:[%s357 + $0x158] sm:$0xff]
      %v870 = vld [vmem:[%s357 + $0x168] sm:$0xff]
      %v871 = vld [vmem:[%s357 + $0x170] sm:$0xff]
      %904 = vrot.lane.b32.xlu0 %v840, 12
      %v905 = vpop.permute.xlu0 %904
      %906 = vrot.lane.b32.xlu0 %v841, 12
      %v907 = vpop.permute.xlu0 %906
      %908 = vrot.lane.b32.xlu0 %v842, 12
      %v909 = vpop.permute.xlu0 %908
      %910 = vrot.lane.b32.xlu0 %v843, 12
      %v911 = vpop.permute.xlu0 %910
      %912 = vrot.lane.b32.xlu0 %v844, 12
      %v913 = vpop.permute.xlu0 %912
      %914 = vrot.lane.b32.xlu0 %v845, 12
      %v915 = vpop.permute.xlu0 %914
      %916 = vrot.lane.b32.xlu0 %v846, 12
      %v917 = vpop.permute.xlu0 %916
      %918 = vrot.lane.b32.xlu0 %v847, 12
      %v919 = vpop.permute.xlu0 %918
      %920 = vrot.lane.b32.xlu0 %v848, 12
      %v921 = vpop.permute.xlu0 %920
      %922 = vrot.lane.b32.xlu0 %v849, 12
      %v923 = vpop.permute.xlu0 %922
      %924 = vrot.lane.b32.xlu0 %v850, 12
      %v925 = vpop.permute.xlu0 %924
      %926 = vrot.lane.b32.xlu0 %v851, 12
      %v927 = vpop.permute.xlu0 %926
      %928 = vrot.lane.b32.xlu0 %v852, 12
      %v929 = vpop.permute.xlu0 %928
      %930 = vrot.lane.b32.xlu0 %v853, 12
      %v931 = vpop.permute.xlu0 %930
      %932 = vrot.lane.b32.xlu0 %v854, 12
      %v933 = vpop.permute.xlu0 %932
      %934 = vrot.lane.b32.xlu0 %v855, 12
      %v935 = vpop.permute.xlu0 %934
      %936 = vrot.lane.b32.xlu0 %v856, 12
      %v937 = vpop.permute.xlu0 %936
      %938 = vrot.lane.b32.xlu0 %v857, 12
      %v939 = vpop.permute.xlu0 %938
      %940 = vrot.lane.b32.xlu0 %v858, 12
      %v941 = vpop.permute.xlu0 %940
      %942 = vrot.lane.b32.xlu0 %v859, 12
      %v943 = vpop.permute.xlu0 %942
      %944 = vrot.lane.b32.xlu0 %v860, 12
      %v945 = vpop.permute.xlu0 %944
      %946 = vrot.lane.b32.xlu0 %v861, 12
      %v947 = vpop.permute.xlu0 %946
      %948 = vrot.lane.b32.xlu0 %v862, 12
      %v949 = vpop.permute.xlu0 %948
      %950 = vrot.lane.b32.xlu0 %v863, 12
      %v951 = vpop.permute.xlu0 %950
      %952 = vrot.lane.b32.xlu0 %v864, 12
      %v953 = vpop.permute.xlu0 %952
      %954 = vrot.lane.b32.xlu0 %v865, 12
      %v955 = vpop.permute.xlu0 %954
      %956 = vrot.lane.b32.xlu0 %v866, 12
      %v957 = vpop.permute.xlu0 %956
      %958 = vrot.lane.b32.xlu0 %v867, 12
      %v959 = vpop.permute.xlu0 %958
      %960 = vrot.lane.b32.xlu0 %v868, 12
      %v961 = vpop.permute.xlu0 %960
      %962 = vrot.lane.b32.xlu0 %v869, 12
      %v963 = vpop.permute.xlu0 %962
      %964 = vrot.lane.b32.xlu0 %v870, 12
      %v965 = vpop.permute.xlu0 %964
      %966 = vrot.lane.b32.xlu0 %v871, 12
      %v967 = vpop.permute.xlu0 %966
      %vm1000 = vcmask 130144
      %1001 = vst.msk [vmem:[#allocation3] sm:$0xff] %vm1000, %v905
      %1002 = vst.msk [vmem:[#allocation3 + $0x8] sm:$0xff] %vm1000, %v907
      %1003 = vst.msk [vmem:[#allocation3 + $0x10] sm:$0xff] %vm1000, %v909
      %1004 = vst.msk [vmem:[#allocation3 + $0x18] sm:$0xff] %vm1000, %v911
      %1005 = vst.msk [vmem:[#allocation3 + $0x20] sm:$0xff] %vm1000, %v913
      %1006 = vst.msk [vmem:[#allocation3 + $0x28] sm:$0xff] %vm1000, %v915
      %1007 = vst.msk [vmem:[#allocation3 + $0x30] sm:$0xff] %vm1000, %v917
      %1008 = vst.msk [vmem:[#allocation3 + $0x38] sm:$0xff] %vm1000, %v919
      %1009 = vst.msk [vmem:[#allocation3 + $0x40] sm:$0xff] %vm1000, %v921
      %1010 = vst.msk [vmem:[#allocation3 + $0x48] sm:$0xff] %vm1000, %v923
      %1011 = vst.msk [vmem:[#allocation3 + $0x50] sm:$0xff] %vm1000, %v925
      %1012 = vst.msk [vmem:[#allocation3 + $0x58] sm:$0xff] %vm1000, %v927
      %1013 = vst.msk [vmem:[#allocation3 + $0x60] sm:$0xff] %vm1000, %v929
      %1014 = vst.msk [vmem:[#allocation3 + $0x68] sm:$0xff] %vm1000, %v931
      %1015 = vst.msk [vmem:[#allocation3 + $0x70] sm:$0xff] %vm1000, %v933
      %1016 = vst.msk [vmem:[#allocation3 + $0x78] sm:$0xff] %vm1000, %v935
      %1017 = vst.msk [vmem:[#allocation3 + $0x80] sm:$0xff] %vm1000, %v937
      %1018 = vst.msk [vmem:[#allocation3 + $0x88] sm:$0xff] %vm1000, %v939
      %1019 = vst.msk [vmem:[#allocation3 + $0x90] sm:$0xff] %vm1000, %v941
      %1020 = vst.msk [vmem:[#allocation3 + $0x98] sm:$0xff] %vm1000, %v943
      %1021 = vst.msk [vmem:[#allocation3 + $0xa0] sm:$0xff] %vm1000, %v945
      %1022 = vst.msk [vmem:[#allocation3 + $0xa8] sm:$0xff] %vm1000, %v947
      %1023 = vst.msk [vmem:[#allocation3 + $0xb0] sm:$0xff] %vm1000, %v949
      %1024 = vst.msk [vmem:[#allocation3 + $0xb8] sm:$0xff] %vm1000, %v951
      %1025 = vst.msk [vmem:[#allocation3 + $0xc0] sm:$0xff] %vm1000, %v953
      %1026 = vst.msk [vmem:[#allocation3 + $0xc8] sm:$0xff] %vm1000, %v955
      %1027 = vst.msk [vmem:[#allocation3 + $0xd0] sm:$0xff] %vm1000, %v957
      %1028 = vst.msk [vmem:[#allocation3 + $0xd8] sm:$0xff] %vm1000, %v959
      %1029 = vst.msk [vmem:[#allocation3 + $0xe0] sm:$0xff] %vm1000, %v961
      %1030 = vst.msk [vmem:[#allocation3 + $0xe8] sm:$0xff] %vm1000, %v963
      %1031 = vst.msk [vmem:[#allocation3 + $0xf0] sm:$0xff] %vm1000, %v965
      %1032 = vst.msk [vmem:[#allocation3 + $0xf8] sm:$0xff] %vm1000, %v967
      %v1033 = vld [vmem:[%s357 + $0x1] sm:$0xff]
      %v1034 = vld [vmem:[%s357 + $0x9] sm:$0xff]
      %v1035 = vld [vmem:[%s357 + $0x19] sm:$0xff]
      %v1036 = vld [vmem:[%s357 + $0x21] sm:$0xff]
      %v1037 = vld [vmem:[%s357 + $0x31] sm:$0xff]
      %v1038 = vld [vmem:[%s357 + $0x39] sm:$0xff]
      %v1039 = vld [vmem:[%s357 + $0x49] sm:$0xff]
      %v1040 = vld [vmem:[%s357 + $0x51] sm:$0xff]
      %v1041 = vld [vmem:[%s357 + $0x61] sm:$0xff]
      %v1042 = vld [vmem:[%s357 + $0x69] sm:$0xff]
      %v1043 = vld [vmem:[%s357 + $0x79] sm:$0xff]
      %v1044 = vld [vmem:[%s357 + $0x81] sm:$0xff]
      %v1045 = vld [vmem:[%s357 + $0x91] sm:$0xff]
      %v1046 = vld [vmem:[%s357 + $0x99] sm:$0xff]
      %v1047 = vld [vmem:[%s357 + $0xa9] sm:$0xff]
      %v1048 = vld [vmem:[%s357 + $0xb1] sm:$0xff]
      %v1049 = vld [vmem:[%s357 + $0xc1] sm:$0xff]
      %v1050 = vld [vmem:[%s357 + $0xc9] sm:$0xff]
      %v1051 = vld [vmem:[%s357 + $0xd9] sm:$0xff]
      %v1052 = vld [vmem:[%s357 + $0xe1] sm:$0xff]
      %v1053 = vld [vmem:[%s357 + $0xf1] sm:$0xff]
      %v1054 = vld [vmem:[%s357 + $0xf9] sm:$0xff]
      %v1055 = vld [vmem:[%s357 + $0x109] sm:$0xff]
      %v1056 = vld [vmem:[%s357 + $0x111] sm:$0xff]
      %v1057 = vld [vmem:[%s357 + $0x121] sm:$0xff]
      %v1058 = vld [vmem:[%s357 + $0x129] sm:$0xff]
      %v1059 = vld [vmem:[%s357 + $0x139] sm:$0xff]
      %v1060 = vld [vmem:[%s357 + $0x141] sm:$0xff]
      %v1061 = vld [vmem:[%s357 + $0x151] sm:$0xff]
      %v1062 = vld [vmem:[%s357 + $0x159] sm:$0xff]
      %v1063 = vld [vmem:[%s357 + $0x169] sm:$0xff]
      %v1064 = vld [vmem:[%s357 + $0x171] sm:$0xff]
      %1097 = vrot.lane.b32.xlu0 %v1033, 16
      %v1098 = vpop.permute.xlu0 %1097
      %1099 = vrot.lane.b32.xlu0 %v1034, 16
      %v1100 = vpop.permute.xlu0 %1099
      %1101 = vrot.lane.b32.xlu0 %v1035, 16
      %v1102 = vpop.permute.xlu0 %1101
      %1103 = vrot.lane.b32.xlu0 %v1036, 16
      %v1104 = vpop.permute.xlu0 %1103
      %1105 = vrot.lane.b32.xlu0 %v1037, 16
      %v1106 = vpop.permute.xlu0 %1105
      %1107 = vrot.lane.b32.xlu0 %v1038, 16
      %v1108 = vpop.permute.xlu0 %1107
      %1109 = vrot.lane.b32.xlu0 %v1039, 16
      %v1110 = vpop.permute.xlu0 %1109
      %1111 = vrot.lane.b32.xlu0 %v1040, 16
      %v1112 = vpop.permute.xlu0 %1111
      %1113 = vrot.lane.b32.xlu0 %v1041, 16
      %v1114 = vpop.permute.xlu0 %1113
      %1115 = vrot.lane.b32.xlu0 %v1042, 16
      %v1116 = vpop.permute.xlu0 %1115
      %1117 = vrot.lane.b32.xlu0 %v1043, 16
      %v1118 = vpop.permute.xlu0 %1117
      %1119 = vrot.lane.b32.xlu0 %v1044, 16
      %v1120 = vpop.permute.xlu0 %1119
      %1121 = vrot.lane.b32.xlu0 %v1045, 16
      %v1122 = vpop.permute.xlu0 %1121
      %1123 = vrot.lane.b32.xlu0 %v1046, 16
      %v1124 = vpop.permute.xlu0 %1123
      %1125 = vrot.lane.b32.xlu0 %v1047, 16
      %v1126 = vpop.permute.xlu0 %1125
      %1127 = vrot.lane.b32.xlu0 %v1048, 16
      %v1128 = vpop.permute.xlu0 %1127
      %1129 = vrot.lane.b32.xlu0 %v1049, 16
      %v1130 = vpop.permute.xlu0 %1129
      %1131 = vrot.lane.b32.xlu0 %v1050, 16
      %v1132 = vpop.permute.xlu0 %1131
      %1133 = vrot.lane.b32.xlu0 %v1051, 16
      %v1134 = vpop.permute.xlu0 %1133
      %1135 = vrot.lane.b32.xlu0 %v1052, 16
      %v1136 = vpop.permute.xlu0 %1135
      %1137 = vrot.lane.b32.xlu0 %v1053, 16
      %v1138 = vpop.permute.xlu0 %1137
      %1139 = vrot.lane.b32.xlu0 %v1054, 16
      %v1140 = vpop.permute.xlu0 %1139
      %1141 = vrot.lane.b32.xlu0 %v1055, 16
      %v1142 = vpop.permute.xlu0 %1141
      %1143 = vrot.lane.b32.xlu0 %v1056, 16
      %v1144 = vpop.permute.xlu0 %1143
      %1145 = vrot.lane.b32.xlu0 %v1057, 16
      %v1146 = vpop.permute.xlu0 %1145
      %1147 = vrot.lane.b32.xlu0 %v1058, 16
      %v1148 = vpop.permute.xlu0 %1147
      %1149 = vrot.lane.b32.xlu0 %v1059, 16
      %v1150 = vpop.permute.xlu0 %1149
      %1151 = vrot.lane.b32.xlu0 %v1060, 16
      %v1152 = vpop.permute.xlu0 %1151
      %1153 = vrot.lane.b32.xlu0 %v1061, 16
      %v1154 = vpop.permute.xlu0 %1153
      %1155 = vrot.lane.b32.xlu0 %v1062, 16
      %v1156 = vpop.permute.xlu0 %1155
      %1157 = vrot.lane.b32.xlu0 %v1063, 16
      %v1158 = vpop.permute.xlu0 %1157
      %1159 = vrot.lane.b32.xlu0 %v1064, 16
      %v1160 = vpop.permute.xlu0 %1159
      %vm1193 = vcmask 162944
      %1194 = vst.msk [vmem:[#allocation3] sm:$0xff] %vm1193, %v1098
      %1195 = vst.msk [vmem:[#allocation3 + $0x8] sm:$0xff] %vm1193, %v1100
      %1196 = vst.msk [vmem:[#allocation3 + $0x10] sm:$0xff] %vm1193, %v1102
      %1197 = vst.msk [vmem:[#allocation3 + $0x18] sm:$0xff] %vm1193, %v1104
      %1198 = vst.msk [vmem:[#allocation3 + $0x20] sm:$0xff] %vm1193, %v1106
      %1199 = vst.msk [vmem:[#allocation3 + $0x28] sm:$0xff] %vm1193, %v1108
      %1200 = vst.msk [vmem:[#allocation3 + $0x30] sm:$0xff] %vm1193, %v1110
      %1201 = vst.msk [vmem:[#allocation3 + $0x38] sm:$0xff] %vm1193, %v1112
      %1202 = vst.msk [vmem:[#allocation3 + $0x40] sm:$0xff] %vm1193, %v1114
      %1203 = vst.msk [vmem:[#allocation3 + $0x48] sm:$0xff] %vm1193, %v1116
      %1204 = vst.msk [vmem:[#allocation3 + $0x50] sm:$0xff] %vm1193, %v1118
      %1205 = vst.msk [vmem:[#allocation3 + $0x58] sm:$0xff] %vm1193, %v1120
      %1206 = vst.msk [vmem:[#allocation3 + $0x60] sm:$0xff] %vm1193, %v1122
      %1207 = vst.msk [vmem:[#allocation3 + $0x68] sm:$0xff] %vm1193, %v1124
      %1208 = vst.msk [vmem:[#allocation3 + $0x70] sm:$0xff] %vm1193, %v1126
      %1209 = vst.msk [vmem:[#allocation3 + $0x78] sm:$0xff] %vm1193, %v1128
      %1210 = vst.msk [vmem:[#allocation3 + $0x80] sm:$0xff] %vm1193, %v1130
      %1211 = vst.msk [vmem:[#allocation3 + $0x88] sm:$0xff] %vm1193, %v1132
      %1212 = vst.msk [vmem:[#allocation3 + $0x90] sm:$0xff] %vm1193, %v1134
      %1213 = vst.msk [vmem:[#allocation3 + $0x98] sm:$0xff] %vm1193, %v1136
      %1214 = vst.msk [vmem:[#allocation3 + $0xa0] sm:$0xff] %vm1193, %v1138
      %1215 = vst.msk [vmem:[#allocation3 + $0xa8] sm:$0xff] %vm1193, %v1140
      %1216 = vst.msk [vmem:[#allocation3 + $0xb0] sm:$0xff] %vm1193, %v1142
      %1217 = vst.msk [vmem:[#allocation3 + $0xb8] sm:$0xff] %vm1193, %v1144
      %1218 = vst.msk [vmem:[#allocation3 + $0xc0] sm:$0xff] %vm1193, %v1146
      %1219 = vst.msk [vmem:[#allocation3 + $0xc8] sm:$0xff] %vm1193, %v1148
      %1220 = vst.msk [vmem:[#allocation3 + $0xd0] sm:$0xff] %vm1193, %v1150
      %1221 = vst.msk [vmem:[#allocation3 + $0xd8] sm:$0xff] %vm1193, %v1152
      %1222 = vst.msk [vmem:[#allocation3 + $0xe0] sm:$0xff] %vm1193, %v1154
      %1223 = vst.msk [vmem:[#allocation3 + $0xe8] sm:$0xff] %vm1193, %v1156
      %1224 = vst.msk [vmem:[#allocation3 + $0xf0] sm:$0xff] %vm1193, %v1158
      %1225 = vst.msk [vmem:[#allocation3 + $0xf8] sm:$0xff] %vm1193, %v1160
      %v1226 = vld [vmem:[%s357 + $0x2] sm:$0xff]
      %v1227 = vld [vmem:[%s357 + $0xa] sm:$0xff]
      %v1228 = vld [vmem:[%s357 + $0x1a] sm:$0xff]
      %v1229 = vld [vmem:[%s357 + $0x22] sm:$0xff]
      %v1230 = vld [vmem:[%s357 + $0x32] sm:$0xff]
      %v1231 = vld [vmem:[%s357 + $0x3a] sm:$0xff]
      %v1232 = vld [vmem:[%s357 + $0x4a] sm:$0xff]
      %v1233 = vld [vmem:[%s357 + $0x52] sm:$0xff]
      %v1234 = vld [vmem:[%s357 + $0x62] sm:$0xff]
      %v1235 = vld [vmem:[%s357 + $0x6a] sm:$0xff]
      %v1236 = vld [vmem:[%s357 + $0x7a] sm:$0xff]
      %v1237 = vld [vmem:[%s357 + $0x82] sm:$0xff]
      %v1238 = vld [vmem:[%s357 + $0x92] sm:$0xff]
      %v1239 = vld [vmem:[%s357 + $0x9a] sm:$0xff]
      %v1240 = vld [vmem:[%s357 + $0xaa] sm:$0xff]
      %v1241 = vld [vmem:[%s357 + $0xb2] sm:$0xff]
      %v1242 = vld [vmem:[%s357 + $0xc2] sm:$0xff]
      %v1243 = vld [vmem:[%s357 + $0xca] sm:$0xff]
      %v1244 = vld [vmem:[%s357 + $0xda] sm:$0xff]
      %v1245 = vld [vmem:[%s357 + $0xe2] sm:$0xff]
      %v1246 = vld [vmem:[%s357 + $0xf2] sm:$0xff]
      %v1247 = vld [vmem:[%s357 + $0xfa] sm:$0xff]
      %v1248 = vld [vmem:[%s357 + $0x10a] sm:$0xff]
      %v1249 = vld [vmem:[%s357 + $0x112] sm:$0xff]
      %v1250 = vld [vmem:[%s357 + $0x122] sm:$0xff]
      %v1251 = vld [vmem:[%s357 + $0x12a] sm:$0xff]
      %v1252 = vld [vmem:[%s357 + $0x13a] sm:$0xff]
      %v1253 = vld [vmem:[%s357 + $0x142] sm:$0xff]
      %v1254 = vld [vmem:[%s357 + $0x152] sm:$0xff]
      %v1255 = vld [vmem:[%s357 + $0x15a] sm:$0xff]
      %v1256 = vld [vmem:[%s357 + $0x16a] sm:$0xff]
      %v1257 = vld [vmem:[%s357 + $0x172] sm:$0xff]
      %1290 = vrot.lane.b32.xlu0 %v1226, 20
      %v1291 = vpop.permute.xlu0 %1290
      %1292 = vrot.lane.b32.xlu0 %v1227, 20
      %v1293 = vpop.permute.xlu0 %1292
      %1294 = vrot.lane.b32.xlu0 %v1228, 20
      %v1295 = vpop.permute.xlu0 %1294
      %1296 = vrot.lane.b32.xlu0 %v1229, 20
      %v1297 = vpop.permute.xlu0 %1296
      %1298 = vrot.lane.b32.xlu0 %v1230, 20
      %v1299 = vpop.permute.xlu0 %1298
      %1300 = vrot.lane.b32.xlu0 %v1231, 20
      %v1301 = vpop.permute.xlu0 %1300
      %1302 = vrot.lane.b32.xlu0 %v1232, 20
      %v1303 = vpop.permute.xlu0 %1302
      %1304 = vrot.lane.b32.xlu0 %v1233, 20
      %v1305 = vpop.permute.xlu0 %1304
      %1306 = vrot.lane.b32.xlu0 %v1234, 20
      %v1307 = vpop.permute.xlu0 %1306
      %1308 = vrot.lane.b32.xlu0 %v1235, 20
      %v1309 = vpop.permute.xlu0 %1308
      %1310 = vrot.lane.b32.xlu0 %v1236, 20
      %v1311 = vpop.permute.xlu0 %1310
      %1312 = vrot.lane.b32.xlu0 %v1237, 20
      %v1313 = vpop.permute.xlu0 %1312
      %1314 = vrot.lane.b32.xlu0 %v1238, 20
      %v1315 = vpop.permute.xlu0 %1314
      %1316 = vrot.lane.b32.xlu0 %v1239, 20
      %v1317 = vpop.permute.xlu0 %1316
      %1318 = vrot.lane.b32.xlu0 %v1240, 20
      %v1319 = vpop.permute.xlu0 %1318
      %1320 = vrot.lane.b32.xlu0 %v1241, 20
      %v1321 = vpop.permute.xlu0 %1320
      %1322 = vrot.lane.b32.xlu0 %v1242, 20
      %v1323 = vpop.permute.xlu0 %1322
      %1324 = vrot.lane.b32.xlu0 %v1243, 20
      %v1325 = vpop.permute.xlu0 %1324
      %1326 = vrot.lane.b32.xlu0 %v1244, 20
      %v1327 = vpop.permute.xlu0 %1326
      %1328 = vrot.lane.b32.xlu0 %v1245, 20
      %v1329 = vpop.permute.xlu0 %1328
      %1330 = vrot.lane.b32.xlu0 %v1246, 20
      %v1331 = vpop.permute.xlu0 %1330
      %1332 = vrot.lane.b32.xlu0 %v1247, 20
      %v1333 = vpop.permute.xlu0 %1332
      %1334 = vrot.lane.b32.xlu0 %v1248, 20
      %v1335 = vpop.permute.xlu0 %1334
      %1336 = vrot.lane.b32.xlu0 %v1249, 20
      %v1337 = vpop.permute.xlu0 %1336
      %1338 = vrot.lane.b32.xlu0 %v1250, 20
      %v1339 = vpop.permute.xlu0 %1338
      %1340 = vrot.lane.b32.xlu0 %v1251, 20
      %v1341 = vpop.permute.xlu0 %1340
      %1342 = vrot.lane.b32.xlu0 %v1252, 20
      %v1343 = vpop.permute.xlu0 %1342
      %1344 = vrot.lane.b32.xlu0 %v1253, 20
      %v1345 = vpop.permute.xlu0 %1344
      %1346 = vrot.lane.b32.xlu0 %v1254, 20
      %v1347 = vpop.permute.xlu0 %1346
      %1348 = vrot.lane.b32.xlu0 %v1255, 20
      %v1349 = vpop.permute.xlu0 %1348
      %1350 = vrot.lane.b32.xlu0 %v1256, 20
      %v1351 = vpop.permute.xlu0 %1350
      %1352 = vrot.lane.b32.xlu0 %v1257, 20
      %v1353 = vpop.permute.xlu0 %1352
      %vm1386 = vcmask 195744
      %1387 = vst.msk [vmem:[#allocation3] sm:$0xff] %vm1386, %v1291
      %1388 = vst.msk [vmem:[#allocation3 + $0x8] sm:$0xff] %vm1386, %v1293
      %1389 = vst.msk [vmem:[#allocation3 + $0x10] sm:$0xff] %vm1386, %v1295
      %1390 = vst.msk [vmem:[#allocation3 + $0x18] sm:$0xff] %vm1386, %v1297
      %1391 = vst.msk [vmem:[#allocation3 + $0x20] sm:$0xff] %vm1386, %v1299
      %1392 = vst.msk [vmem:[#allocation3 + $0x28] sm:$0xff] %vm1386, %v1301
      %1393 = vst.msk [vmem:[#allocation3 + $0x30] sm:$0xff] %vm1386, %v1303
      %1394 = vst.msk [vmem:[#allocation3 + $0x38] sm:$0xff] %vm1386, %v1305
      %1395 = vst.msk [vmem:[#allocation3 + $0x40] sm:$0xff] %vm1386, %v1307
      %1396 = vst.msk [vmem:[#allocation3 + $0x48] sm:$0xff] %vm1386, %v1309
      %1397 = vst.msk [vmem:[#allocation3 + $0x50] sm:$0xff] %vm1386, %v1311
      %1398 = vst.msk [vmem:[#allocation3 + $0x58] sm:$0xff] %vm1386, %v1313
      %1399 = vst.msk [vmem:[#allocation3 + $0x60] sm:$0xff] %vm1386, %v1315
      %1400 = vst.msk [vmem:[#allocation3 + $0x68] sm:$0xff] %vm1386, %v1317
      %1401 = vst.msk [vmem:[#allocation3 + $0x70] sm:$0xff] %vm1386, %v1319
      %1402 = vst.msk [vmem:[#allocation3 + $0x78] sm:$0xff] %vm1386, %v1321
      %1403 = vst.msk [vmem:[#allocation3 + $0x80] sm:$0xff] %vm1386, %v1323
      %1404 = vst.msk [vmem:[#allocation3 + $0x88] sm:$0xff] %vm1386, %v1325
      %1405 = vst.msk [vmem:[#allocation3 + $0x90] sm:$0xff] %vm1386, %v1327
      %1406 = vst.msk [vmem:[#allocation3 + $0x98] sm:$0xff] %vm1386, %v1329
      %1407 = vst.msk [vmem:[#allocation3 + $0xa0] sm:$0xff] %vm1386, %v1331
      %1408 = vst.msk [vmem:[#allocation3 + $0xa8] sm:$0xff] %vm1386, %v1333
      %1409 = vst.msk [vmem:[#allocation3 + $0xb0] sm:$0xff] %vm1386, %v1335
      %1410 = vst.msk [vmem:[#allocation3 + $0xb8] sm:$0xff] %vm1386, %v1337
      %1411 = vst.msk [vmem:[#allocation3 + $0xc0] sm:$0xff] %vm1386, %v1339
      %1412 = vst.msk [vmem:[#allocation3 + $0xc8] sm:$0xff] %vm1386, %v1341
      %1413 = vst.msk [vmem:[#allocation3 + $0xd0] sm:$0xff] %vm1386, %v1343
      %1414 = vst.msk [vmem:[#allocation3 + $0xd8] sm:$0xff] %vm1386, %v1345
      %1415 = vst.msk [vmem:[#allocation3 + $0xe0] sm:$0xff] %vm1386, %v1347
      %1416 = vst.msk [vmem:[#allocation3 + $0xe8] sm:$0xff] %vm1386, %v1349
      %1417 = vst.msk [vmem:[#allocation3 + $0xf0] sm:$0xff] %vm1386, %v1351
      %1418 = vst.msk [vmem:[#allocation3 + $0xf8] sm:$0xff] %vm1386, %v1353
      %s1419 = scalar_lea.vmem [#allocation2], 48
      %v1420 = vld [vmem:[%s1419] sm:$0xff]
      %v1421 = vld [vmem:[%s1419 + $0x8] sm:$0xff]
      %v1422 = vld [vmem:[%s1419 + $0x18] sm:$0xff]
      %v1423 = vld [vmem:[%s1419 + $0x20] sm:$0xff]
      %v1424 = vld [vmem:[%s1419 + $0x30] sm:$0xff]
      %v1425 = vld [vmem:[%s1419 + $0x38] sm:$0xff]
      %v1426 = vld [vmem:[%s1419 + $0x48] sm:$0xff]
      %v1427 = vld [vmem:[%s1419 + $0x50] sm:$0xff]
      %v1428 = vld [vmem:[%s1419 + $0x60] sm:$0xff]
      %v1429 = vld [vmem:[%s1419 + $0x68] sm:$0xff]
      %v1430 = vld [vmem:[%s1419 + $0x78] sm:$0xff]
      %v1431 = vld [vmem:[%s1419 + $0x80] sm:$0xff]
      %v1432 = vld [vmem:[%s1419 + $0x90] sm:$0xff]
      %v1433 = vld [vmem:[%s1419 + $0x98] sm:$0xff]
      %v1434 = vld [vmem:[%s1419 + $0xa8] sm:$0xff]
      %v1435 = vld [vmem:[%s1419 + $0xb0] sm:$0xff]
      %v1436 = vld [vmem:[%s1419 + $0xc0] sm:$0xff]
      %v1437 = vld [vmem:[%s1419 + $0xc8] sm:$0xff]
      %v1438 = vld [vmem:[%s1419 + $0xd8] sm:$0xff]
      %v1439 = vld [vmem:[%s1419 + $0xe0] sm:$0xff]
      %v1440 = vld [vmem:[%s1419 + $0xf0] sm:$0xff]
      %v1441 = vld [vmem:[%s1419 + $0xf8] sm:$0xff]
      %v1442 = vld [vmem:[%s1419 + $0x108] sm:$0xff]
      %v1443 = vld [vmem:[%s1419 + $0x110] sm:$0xff]
      %v1444 = vld [vmem:[%s1419 + $0x120] sm:$0xff]
      %v1445 = vld [vmem:[%s1419 + $0x128] sm:$0xff]
      %v1446 = vld [vmem:[%s1419 + $0x138] sm:$0xff]
      %v1447 = vld [vmem:[%s1419 + $0x140] sm:$0xff]
      %v1448 = vld [vmem:[%s1419 + $0x150] sm:$0xff]
      %v1449 = vld [vmem:[%s1419 + $0x158] sm:$0xff]
      %v1450 = vld [vmem:[%s1419 + $0x168] sm:$0xff]
      %v1451 = vld [vmem:[%s1419 + $0x170] sm:$0xff]
      %1484 = vrot.lane.b32.xlu0 %v1420, 24
      %v1485 = vpop.permute.xlu0 %1484
      %1486 = vrot.lane.b32.xlu0 %v1421, 24
      %v1487 = vpop.permute.xlu0 %1486
      %1488 = vrot.lane.b32.xlu0 %v1422, 24
      %v1489 = vpop.permute.xlu0 %1488
      %1490 = vrot.lane.b32.xlu0 %v1423, 24
      %v1491 = vpop.permute.xlu0 %1490
      %1492 = vrot.lane.b32.xlu0 %v1424, 24
      %v1493 = vpop.permute.xlu0 %1492
      %1494 = vrot.lane.b32.xlu0 %v1425, 24
      %v1495 = vpop.permute.xlu0 %1494
      %1496 = vrot.lane.b32.xlu0 %v1426, 24
      %v1497 = vpop.permute.xlu0 %1496
      %1498 = vrot.lane.b32.xlu0 %v1427, 24
      %v1499 = vpop.permute.xlu0 %1498
      %1500 = vrot.lane.b32.xlu0 %v1428, 24
      %v1501 = vpop.permute.xlu0 %1500
      %1502 = vrot.lane.b32.xlu0 %v1429, 24
      %v1503 = vpop.permute.xlu0 %1502
      %1504 = vrot.lane.b32.xlu0 %v1430, 24
      %v1505 = vpop.permute.xlu0 %1504
      %1506 = vrot.lane.b32.xlu0 %v1431, 24
      %v1507 = vpop.permute.xlu0 %1506
      %1508 = vrot.lane.b32.xlu0 %v1432, 24
      %v1509 = vpop.permute.xlu0 %1508
      %1510 = vrot.lane.b32.xlu0 %v1433, 24
      %v1511 = vpop.permute.xlu0 %1510
      %1512 = vrot.lane.b32.xlu0 %v1434, 24
      %v1513 = vpop.permute.xlu0 %1512
      %1514 = vrot.lane.b32.xlu0 %v1435, 24
      %v1515 = vpop.permute.xlu0 %1514
      %1516 = vrot.lane.b32.xlu0 %v1436, 24
      %v1517 = vpop.permute.xlu0 %1516
      %1518 = vrot.lane.b32.xlu0 %v1437, 24
      %v1519 = vpop.permute.xlu0 %1518
      %1520 = vrot.lane.b32.xlu0 %v1438, 24
      %v1521 = vpop.permute.xlu0 %1520
      %1522 = vrot.lane.b32.xlu0 %v1439, 24
      %v1523 = vpop.permute.xlu0 %1522
      %1524 = vrot.lane.b32.xlu0 %v1440, 24
      %v1525 = vpop.permute.xlu0 %1524
      %1526 = vrot.lane.b32.xlu0 %v1441, 24
      %v1527 = vpop.permute.xlu0 %1526
      %1528 = vrot.lane.b32.xlu0 %v1442, 24
      %v1529 = vpop.permute.xlu0 %1528
      %1530 = vrot.lane.b32.xlu0 %v1443, 24
      %v1531 = vpop.permute.xlu0 %1530
      %1532 = vrot.lane.b32.xlu0 %v1444, 24
      %v1533 = vpop.permute.xlu0 %1532
      %1534 = vrot.lane.b32.xlu0 %v1445, 24
      %v1535 = vpop.permute.xlu0 %1534
      %1536 = vrot.lane.b32.xlu0 %v1446, 24
      %v1537 = vpop.permute.xlu0 %1536
      %1538 = vrot.lane.b32.xlu0 %v1447, 24
      %v1539 = vpop.permute.xlu0 %1538
      %1540 = vrot.lane.b32.xlu0 %v1448, 24
      %v1541 = vpop.permute.xlu0 %1540
      %1542 = vrot.lane.b32.xlu0 %v1449, 24
      %v1543 = vpop.permute.xlu0 %1542
      %1544 = vrot.lane.b32.xlu0 %v1450, 24
      %v1545 = vpop.permute.xlu0 %1544
      %1546 = vrot.lane.b32.xlu0 %v1451, 24
      %v1547 = vpop.permute.xlu0 %1546
      %vm1580 = vcmask 228544
      %1581 = vst.msk [vmem:[#allocation3] sm:$0xff] %vm1580, %v1485
      %1582 = vst.msk [vmem:[#allocation3 + $0x8] sm:$0xff] %vm1580, %v1487
      %1583 = vst.msk [vmem:[#allocation3 + $0x10] sm:$0xff] %vm1580, %v1489
      %1584 = vst.msk [vmem:[#allocation3 + $0x18] sm:$0xff] %vm1580, %v1491
      %1585 = vst.msk [vmem:[#allocation3 + $0x20] sm:$0xff] %vm1580, %v1493
      %1586 = vst.msk [vmem:[#allocation3 + $0x28] sm:$0xff] %vm1580, %v1495
      %1587 = vst.msk [vmem:[#allocation3 + $0x30] sm:$0xff] %vm1580, %v1497
      %1588 = vst.msk [vmem:[#allocation3 + $0x38] sm:$0xff] %vm1580, %v1499
      %1589 = vst.msk [vmem:[#allocation3 + $0x40] sm:$0xff] %vm1580, %v1501
      %1590 = vst.msk [vmem:[#allocation3 + $0x48] sm:$0xff] %vm1580, %v1503
      %1591 = vst.msk [vmem:[#allocation3 + $0x50] sm:$0xff] %vm1580, %v1505
      %1592 = vst.msk [vmem:[#allocation3 + $0x58] sm:$0xff] %vm1580, %v1507
      %1593 = vst.msk [vmem:[#allocation3 + $0x60] sm:$0xff] %vm1580, %v1509
      %1594 = vst.msk [vmem:[#allocation3 + $0x68] sm:$0xff] %vm1580, %v1511
      %1595 = vst.msk [vmem:[#allocation3 + $0x70] sm:$0xff] %vm1580, %v1513
      %1596 = vst.msk [vmem:[#allocation3 + $0x78] sm:$0xff] %vm1580, %v1515
      %1597 = vst.msk [vmem:[#allocation3 + $0x80] sm:$0xff] %vm1580, %v1517
      %1598 = vst.msk [vmem:[#allocation3 + $0x88] sm:$0xff] %vm1580, %v1519
      %1599 = vst.msk [vmem:[#allocation3 + $0x90] sm:$0xff] %vm1580, %v1521
      %1600 = vst.msk [vmem:[#allocation3 + $0x98] sm:$0xff] %vm1580, %v1523
      %1601 = vst.msk [vmem:[#allocation3 + $0xa0] sm:$0xff] %vm1580, %v1525
      %1602 = vst.msk [vmem:[#allocation3 + $0xa8] sm:$0xff] %vm1580, %v1527
      %1603 = vst.msk [vmem:[#allocation3 + $0xb0] sm:$0xff] %vm1580, %v1529
      %1604 = vst.msk [vmem:[#allocation3 + $0xb8] sm:$0xff] %vm1580, %v1531
      %1605 = vst.msk [vmem:[#allocation3 + $0xc0] sm:$0xff] %vm1580, %v1533
      %1606 = vst.msk [vmem:[#allocation3 + $0xc8] sm:$0xff] %vm1580, %v1535
      %1607 = vst.msk [vmem:[#allocation3 + $0xd0] sm:$0xff] %vm1580, %v1537
      %1608 = vst.msk [vmem:[#allocation3 + $0xd8] sm:$0xff] %vm1580, %v1539
      %1609 = vst.msk [vmem:[#allocation3 + $0xe0] sm:$0xff] %vm1580, %v1541
      %1610 = vst.msk [vmem:[#allocation3 + $0xe8] sm:$0xff] %vm1580, %v1543
      %1611 = vst.msk [vmem:[#allocation3 + $0xf0] sm:$0xff] %vm1580, %v1545
      %1612 = vst.msk [vmem:[#allocation3 + $0xf8] sm:$0xff] %vm1580, %v1547
      %v1613 = vld [vmem:[%s1419 + $0x1] sm:$0xff]
      %v1614 = vld [vmem:[%s1419 + $0x9] sm:$0xff]
      %v1615 = vld [vmem:[%s1419 + $0x19] sm:$0xff]
      %v1616 = vld [vmem:[%s1419 + $0x21] sm:$0xff]
      %v1617 = vld [vmem:[%s1419 + $0x31] sm:$0xff]
      %v1618 = vld [vmem:[%s1419 + $0x39] sm:$0xff]
      %v1619 = vld [vmem:[%s1419 + $0x49] sm:$0xff]
      %v1620 = vld [vmem:[%s1419 + $0x51] sm:$0xff]
      %v1621 = vld [vmem:[%s1419 + $0x61] sm:$0xff]
      %v1622 = vld [vmem:[%s1419 + $0x69] sm:$0xff]
      %v1623 = vld [vmem:[%s1419 + $0x79] sm:$0xff]
      %v1624 = vld [vmem:[%s1419 + $0x81] sm:$0xff]
      %v1625 = vld [vmem:[%s1419 + $0x91] sm:$0xff]
      %v1626 = vld [vmem:[%s1419 + $0x99] sm:$0xff]
      %v1627 = vld [vmem:[%s1419 + $0xa9] sm:$0xff]
      %v1628 = vld [vmem:[%s1419 + $0xb1] sm:$0xff]
      %v1629 = vld [vmem:[%s1419 + $0xc1] sm:$0xff]
      %v1630 = vld [vmem:[%s1419 + $0xc9] sm:$0xff]
      %v1631 = vld [vmem:[%s1419 + $0xd9] sm:$0xff]
      %v1632 = vld [vmem:[%s1419 + $0xe1] sm:$0xff]
      %v1633 = vld [vmem:[%s1419 + $0xf1] sm:$0xff]
      %v1634 = vld [vmem:[%s1419 + $0xf9] sm:$0xff]
      %v1635 = vld [vmem:[%s1419 + $0x109] sm:$0xff]
      %v1636 = vld [vmem:[%s1419 + $0x111] sm:$0xff]
      %v1637 = vld [vmem:[%s1419 + $0x121] sm:$0xff]
      %v1638 = vld [vmem:[%s1419 + $0x129] sm:$0xff]
      %v1639 = vld [vmem:[%s1419 + $0x139] sm:$0xff]
      %v1640 = vld [vmem:[%s1419 + $0x141] sm:$0xff]
      %v1641 = vld [vmem:[%s1419 + $0x151] sm:$0xff]
      %v1642 = vld [vmem:[%s1419 + $0x159] sm:$0xff]
      %v1643 = vld [vmem:[%s1419 + $0x169] sm:$0xff]
      %v1644 = vld [vmem:[%s1419 + $0x171] sm:$0xff]
      %1677 = vrot.lane.b32.xlu0 %v1613, 28
      %v1678 = vpop.permute.xlu0 %1677
      %1679 = vrot.lane.b32.xlu0 %v1614, 28
      %v1680 = vpop.permute.xlu0 %1679
      %1681 = vrot.lane.b32.xlu0 %v1615, 28
      %v1682 = vpop.permute.xlu0 %1681
      %1683 = vrot.lane.b32.xlu0 %v1616, 28
      %v1684 = vpop.permute.xlu0 %1683
      %1685 = vrot.lane.b32.xlu0 %v1617, 28
      %v1686 = vpop.permute.xlu0 %1685
      %1687 = vrot.lane.b32.xlu0 %v1618, 28
      %v1688 = vpop.permute.xlu0 %1687
      %1689 = vrot.lane.b32.xlu0 %v1619, 28
      %v1690 = vpop.permute.xlu0 %1689
      %1691 = vrot.lane.b32.xlu0 %v1620, 28
      %v1692 = vpop.permute.xlu0 %1691
      %1693 = vrot.lane.b32.xlu0 %v1621, 28
      %v1694 = vpop.permute.xlu0 %1693
      %1695 = vrot.lane.b32.xlu0 %v1622, 28
      %v1696 = vpop.permute.xlu0 %1695
      %1697 = vrot.lane.b32.xlu0 %v1623, 28
      %v1698 = vpop.permute.xlu0 %1697
      %1699 = vrot.lane.b32.xlu0 %v1624, 28
      %v1700 = vpop.permute.xlu0 %1699
      %1701 = vrot.lane.b32.xlu0 %v1625, 28
      %v1702 = vpop.permute.xlu0 %1701
      %1703 = vrot.lane.b32.xlu0 %v1626, 28
      %v1704 = vpop.permute.xlu0 %1703
      %1705 = vrot.lane.b32.xlu0 %v1627, 28
      %v1706 = vpop.permute.xlu0 %1705
      %1707 = vrot.lane.b32.xlu0 %v1628, 28
      %v1708 = vpop.permute.xlu0 %1707
      %1709 = vrot.lane.b32.xlu0 %v1629, 28
      %v1710 = vpop.permute.xlu0 %1709
      %1711 = vrot.lane.b32.xlu0 %v1630, 28
      %v1712 = vpop.permute.xlu0 %1711
      %1713 = vrot.lane.b32.xlu0 %v1631, 28
      %v1714 = vpop.permute.xlu0 %1713
      %1715 = vrot.lane.b32.xlu0 %v1632, 28
      %v1716 = vpop.permute.xlu0 %1715
      %1717 = vrot.lane.b32.xlu0 %v1633, 28
      %v1718 = vpop.permute.xlu0 %1717
      %1719 = vrot.lane.b32.xlu0 %v1634, 28
      %v1720 = vpop.permute.xlu0 %1719
      %1721 = vrot.lane.b32.xlu0 %v1635, 28
      %v1722 = vpop.permute.xlu0 %1721
      %1723 = vrot.lane.b32.xlu0 %v1636, 28
      %v1724 = vpop.permute.xlu0 %1723
      %1725 = vrot.lane.b32.xlu0 %v1637, 28
      %v1726 = vpop.permute.xlu0 %1725
      %1727 = vrot.lane.b32.xlu0 %v1638, 28
      %v1728 = vpop.permute.xlu0 %1727
      %1729 = vrot.lane.b32.xlu0 %v1639, 28
      %v1730 = vpop.permute.xlu0 %1729
      %1731 = vrot.lane.b32.xlu0 %v1640, 28
      %v1732 = vpop.permute.xlu0 %1731
      %1733 = vrot.lane.b32.xlu0 %v1641, 28
      %v1734 = vpop.permute.xlu0 %1733
      %1735 = vrot.lane.b32.xlu0 %v1642, 28
      %v1736 = vpop.permute.xlu0 %1735
      %1737 = vrot.lane.b32.xlu0 %v1643, 28
      %v1738 = vpop.permute.xlu0 %1737
      %1739 = vrot.lane.b32.xlu0 %v1644, 28
      %v1740 = vpop.permute.xlu0 %1739
      %vm1773 = vcmask 261344
      %1774 = vst.msk [vmem:[#allocation3] sm:$0xff] %vm1773, %v1678
      %1775 = vst.msk [vmem:[#allocation3 + $0x8] sm:$0xff] %vm1773, %v1680
      %1776 = vst.msk [vmem:[#allocation3 + $0x10] sm:$0xff] %vm1773, %v1682
      %1777 = vst.msk [vmem:[#allocation3 + $0x18] sm:$0xff] %vm1773, %v1684
      %1778 = vst.msk [vmem:[#allocation3 + $0x20] sm:$0xff] %vm1773, %v1686
      %1779 = vst.msk [vmem:[#allocation3 + $0x28] sm:$0xff] %vm1773, %v1688
      %1780 = vst.msk [vmem:[#allocation3 + $0x30] sm:$0xff] %vm1773, %v1690
      %1781 = vst.msk [vmem:[#allocation3 + $0x38] sm:$0xff] %vm1773, %v1692
      %1782 = vst.msk [vmem:[#allocation3 + $0x40] sm:$0xff] %vm1773, %v1694
      %1783 = vst.msk [vmem:[#allocation3 + $0x48] sm:$0xff] %vm1773, %v1696
      %1784 = vst.msk [vmem:[#allocation3 + $0x50] sm:$0xff] %vm1773, %v1698
      %1785 = vst.msk [vmem:[#allocation3 + $0x58] sm:$0xff] %vm1773, %v1700
      %1786 = vst.msk [vmem:[#allocation3 + $0x60] sm:$0xff] %vm1773, %v1702
      %1787 = vst.msk [vmem:[#allocation3 + $0x68] sm:$0xff] %vm1773, %v1704
      %1788 = vst.msk [vmem:[#allocation3 + $0x70] sm:$0xff] %vm1773, %v1706
      %1789 = vst.msk [vmem:[#allocation3 + $0x78] sm:$0xff] %vm1773, %v1708
      %1790 = vst.msk [vmem:[#allocation3 + $0x80] sm:$0xff] %vm1773, %v1710
      %1791 = vst.msk [vmem:[#allocation3 + $0x88] sm:$0xff] %vm1773, %v1712
      %1792 = vst.msk [vmem:[#allocation3 + $0x90] sm:$0xff] %vm1773, %v1714
      %1793 = vst.msk [vmem:[#allocation3 + $0x98] sm:$0xff] %vm1773, %v1716
      %1794 = vst.msk [vmem:[#allocation3 + $0xa0] sm:$0xff] %vm1773, %v1718
      %1795 = vst.msk [vmem:[#allocation3 + $0xa8] sm:$0xff] %vm1773, %v1720
      %1796 = vst.msk [vmem:[#allocation3 + $0xb0] sm:$0xff] %vm1773, %v1722
      %1797 = vst.msk [vmem:[#allocation3 + $0xb8] sm:$0xff] %vm1773, %v1724
      %1798 = vst.msk [vmem:[#allocation3 + $0xc0] sm:$0xff] %vm1773, %v1726
      %1799 = vst.msk [vmem:[#allocation3 + $0xc8] sm:$0xff] %vm1773, %v1728
      %1800 = vst.msk [vmem:[#allocation3 + $0xd0] sm:$0xff] %vm1773, %v1730
      %1801 = vst.msk [vmem:[#allocation3 + $0xd8] sm:$0xff] %vm1773, %v1732
      %1802 = vst.msk [vmem:[#allocation3 + $0xe0] sm:$0xff] %vm1773, %v1734
      %1803 = vst.msk [vmem:[#allocation3 + $0xe8] sm:$0xff] %vm1773, %v1736
      %1804 = vst.msk [vmem:[#allocation3 + $0xf0] sm:$0xff] %vm1773, %v1738
      %1805 = vst.msk [vmem:[#allocation3 + $0xf8] sm:$0xff] %vm1773, %v1740
      %v1806 = vld [vmem:[%s1419 + $0x2] sm:$0xff]
      %v1807 = vld [vmem:[%s1419 + $0xa] sm:$0xff]
      %v1808 = vld [vmem:[%s1419 + $0x1a] sm:$0xff]
      %v1809 = vld [vmem:[%s1419 + $0x22] sm:$0xff]
      %v1810 = vld [vmem:[%s1419 + $0x32] sm:$0xff]
      %v1811 = vld [vmem:[%s1419 + $0x3a] sm:$0xff]
      %v1812 = vld [vmem:[%s1419 + $0x4a] sm:$0xff]
      %v1813 = vld [vmem:[%s1419 + $0x52] sm:$0xff]
      %v1814 = vld [vmem:[%s1419 + $0x62] sm:$0xff]
      %v1815 = vld [vmem:[%s1419 + $0x6a] sm:$0xff]
      %v1816 = vld [vmem:[%s1419 + $0x7a] sm:$0xff]
      %v1817 = vld [vmem:[%s1419 + $0x82] sm:$0xff]
      %v1818 = vld [vmem:[%s1419 + $0x92] sm:$0xff]
      %v1819 = vld [vmem:[%s1419 + $0x9a] sm:$0xff]
      %v1820 = vld [vmem:[%s1419 + $0xaa] sm:$0xff]
      %v1821 = vld [vmem:[%s1419 + $0xb2] sm:$0xff]
      %v1822 = vld [vmem:[%s1419 + $0xc2] sm:$0xff]
      %v1823 = vld [vmem:[%s1419 + $0xca] sm:$0xff]
      %v1824 = vld [vmem:[%s1419 + $0xda] sm:$0xff]
      %v1825 = vld [vmem:[%s1419 + $0xe2] sm:$0xff]
      %v1826 = vld [vmem:[%s1419 + $0xf2] sm:$0xff]
      %v1827 = vld [vmem:[%s1419 + $0xfa] sm:$0xff]
      %v1828 = vld [vmem:[%s1419 + $0x10a] sm:$0xff]
      %v1829 = vld [vmem:[%s1419 + $0x112] sm:$0xff]
      %v1830 = vld [vmem:[%s1419 + $0x122] sm:$0xff]
      %v1831 = vld [vmem:[%s1419 + $0x12a] sm:$0xff]
      %v1832 = vld [vmem:[%s1419 + $0x13a] sm:$0xff]
      %v1833 = vld [vmem:[%s1419 + $0x142] sm:$0xff]
      %v1834 = vld [vmem:[%s1419 + $0x152] sm:$0xff]
      %v1835 = vld [vmem:[%s1419 + $0x15a] sm:$0xff]
      %v1836 = vld [vmem:[%s1419 + $0x16a] sm:$0xff]
      %v1837 = vld [vmem:[%s1419 + $0x172] sm:$0xff]
      %1870 = vrot.lane.b32.xlu0 %v1806, 32
      %v1871 = vpop.permute.xlu0 %1870
      %1872 = vrot.lane.b32.xlu0 %v1807, 32
      %v1873 = vpop.permute.xlu0 %1872
      %1874 = vrot.lane.b32.xlu0 %v1808, 32
      %v1875 = vpop.permute.xlu0 %1874
      %1876 = vrot.lane.b32.xlu0 %v1809, 32
      %v1877 = vpop.permute.xlu0 %1876
      %1878 = vrot.lane.b32.xlu0 %v1810, 32
      %v1879 = vpop.permute.xlu0 %1878
      %1880 = vrot.lane.b32.xlu0 %v1811, 32
      %v1881 = vpop.permute.xlu0 %1880
      %1882 = vrot.lane.b32.xlu0 %v1812, 32
      %v1883 = vpop.permute.xlu0 %1882
      %1884 = vrot.lane.b32.xlu0 %v1813, 32
      %v1885 = vpop.permute.xlu0 %1884
      %1886 = vrot.lane.b32.xlu0 %v1814, 32
      %v1887 = vpop.permute.xlu0 %1886
      %1888 = vrot.lane.b32.xlu0 %v1815, 32
      %v1889 = vpop.permute.xlu0 %1888
      %1890 = vrot.lane.b32.xlu0 %v1816, 32
      %v1891 = vpop.permute.xlu0 %1890
      %1892 = vrot.lane.b32.xlu0 %v1817, 32
      %v1893 = vpop.permute.xlu0 %1892
      %1894 = vrot.lane.b32.xlu0 %v1818, 32
      %v1895 = vpop.permute.xlu0 %1894
      %1896 = vrot.lane.b32.xlu0 %v1819, 32
      %v1897 = vpop.permute.xlu0 %1896
      %1898 = vrot.lane.b32.xlu0 %v1820, 32
      %v1899 = vpop.permute.xlu0 %1898
      %1900 = vrot.lane.b32.xlu0 %v1821, 32
      %v1901 = vpop.permute.xlu0 %1900
      %1902 = vrot.lane.b32.xlu0 %v1822, 32
      %v1903 = vpop.permute.xlu0 %1902
      %1904 = vrot.lane.b32.xlu0 %v1823, 32
      %v1905 = vpop.permute.xlu0 %1904
      %1906 = vrot.lane.b32.xlu0 %v1824, 32
      %v1907 = vpop.permute.xlu0 %1906
      %1908 = vrot.lane.b32.xlu0 %v1825, 32
      %v1909 = vpop.permute.xlu0 %1908
      %1910 = vrot.lane.b32.xlu0 %v1826, 32
      %v1911 = vpop.permute.xlu0 %1910
      %1912 = vrot.lane.b32.xlu0 %v1827, 32
      %v1913 = vpop.permute.xlu0 %1912
      %1914 = vrot.lane.b32.xlu0 %v1828, 32
      %v1915 = vpop.permute.xlu0 %1914
      %1916 = vrot.lane.b32.xlu0 %v1829, 32
      %v1917 = vpop.permute.xlu0 %1916
      %1918 = vrot.lane.b32.xlu0 %v1830, 32
      %v1919 = vpop.permute.xlu0 %1918
      %1920 = vrot.lane.b32.xlu0 %v1831, 32
      %v1921 = vpop.permute.xlu0 %1920
      %1922 = vrot.lane.b32.xlu0 %v1832, 32
      %v1923 = vpop.permute.xlu0 %1922
      %1924 = vrot.lane.b32.xlu0 %v1833, 32
      %v1925 = vpop.permute.xlu0 %1924
      %1926 = vrot.lane.b32.xlu0 %v1834, 32
      %v1927 = vpop.permute.xlu0 %1926
      %1928 = vrot.lane.b32.xlu0 %v1835, 32
      %v1929 = vpop.permute.xlu0 %1928
      %1930 = vrot.lane.b32.xlu0 %v1836, 32
      %v1931 = vpop.permute.xlu0 %1930
      %1932 = vrot.lane.b32.xlu0 %v1837, 32
      %v1933 = vpop.permute.xlu0 %1932
      %vm1966 = vcmask 294144
      %1967 = vst.msk [vmem:[#allocation3] sm:$0xff] %vm1966, %v1871
      %1968 = vst.msk [vmem:[#allocation3 + $0x8] sm:$0xff] %vm1966, %v1873
      %1969 = vst.msk [vmem:[#allocation3 + $0x10] sm:$0xff] %vm1966, %v1875
      %1970 = vst.msk [vmem:[#allocation3 + $0x18] sm:$0xff] %vm1966, %v1877
      %1971 = vst.msk [vmem:[#allocation3 + $0x20] sm:$0xff] %vm1966, %v1879
      %1972 = vst.msk [vmem:[#allocation3 + $0x28] sm:$0xff] %vm1966, %v1881
      %1973 = vst.msk [vmem:[#allocation3 + $0x30] sm:$0xff] %vm1966, %v1883
      %1974 = vst.msk [vmem:[#allocation3 + $0x38] sm:$0xff] %vm1966, %v1885
      %1975 = vst.msk [vmem:[#allocation3 + $0x40] sm:$0xff] %vm1966, %v1887
      %1976 = vst.msk [vmem:[#allocation3 + $0x48] sm:$0xff] %vm1966, %v1889
      %1977 = vst.msk [vmem:[#allocation3 + $0x50] sm:$0xff] %vm1966, %v1891
      %1978 = vst.msk [vmem:[#allocation3 + $0x58] sm:$0xff] %vm1966, %v1893
      %1979 = vst.msk [vmem:[#allocation3 + $0x60] sm:$0xff] %vm1966, %v1895
      %1980 = vst.msk [vmem:[#allocation3 + $0x68] sm:$0xff] %vm1966, %v1897
      %1981 = vst.msk [vmem:[#allocation3 + $0x70] sm:$0xff] %vm1966, %v1899
      %1982 = vst.msk [vmem:[#allocation3 + $0x78] sm:$0xff] %vm1966, %v1901
      %1983 = vst.msk [vmem:[#allocation3 + $0x80] sm:$0xff] %vm1966, %v1903
      %1984 = vst.msk [vmem:[#allocation3 + $0x88] sm:$0xff] %vm1966, %v1905
      %1985 = vst.msk [vmem:[#allocation3 + $0x90] sm:$0xff] %vm1966, %v1907
      %1986 = vst.msk [vmem:[#allocation3 + $0x98] sm:$0xff] %vm1966, %v1909
      %1987 = vst.msk [vmem:[#allocation3 + $0xa0] sm:$0xff] %vm1966, %v1911
      %1988 = vst.msk [vmem:[#allocation3 + $0xa8] sm:$0xff] %vm1966, %v1913
      %1989 = vst.msk [vmem:[#allocation3 + $0xb0] sm:$0xff] %vm1966, %v1915
      %1990 = vst.msk [vmem:[#allocation3 + $0xb8] sm:$0xff] %vm1966, %v1917
      %1991 = vst.msk [vmem:[#allocation3 + $0xc0] sm:$0xff] %vm1966, %v1919
      %1992 = vst.msk [vmem:[#allocation3 + $0xc8] sm:$0xff] %vm1966, %v1921
      %1993 = vst.msk [vmem:[#allocation3 + $0xd0] sm:$0xff] %vm1966, %v1923
      %1994 = vst.msk [vmem:[#allocation3 + $0xd8] sm:$0xff] %vm1966, %v1925
      %1995 = vst.msk [vmem:[#allocation3 + $0xe0] sm:$0xff] %vm1966, %v1927
      %1996 = vst.msk [vmem:[#allocation3 + $0xe8] sm:$0xff] %vm1966, %v1929
      %1997 = vst.msk [vmem:[#allocation3 + $0xf0] sm:$0xff] %vm1966, %v1931
      %1998 = vst.msk [vmem:[#allocation3 + $0xf8] sm:$0xff] %vm1966, %v1933
      %v1999 = vld [vmem:[#allocation3] sm:$0xff]
      %v2000 = vld [vmem:[#allocation3 + $0x8] sm:$0xff]
      %v2001 = vld [vmem:[#allocation3 + $0x10] sm:$0xff]
      %v2002 = vld [vmem:[#allocation3 + $0x18] sm:$0xff]
      %v2003 = vld [vmem:[#allocation3 + $0x20] sm:$0xff]
      %v2004 = vld [vmem:[#allocation3 + $0x28] sm:$0xff]
      %v2005 = vld [vmem:[#allocation3 + $0x30] sm:$0xff]
      %v2006 = vld [vmem:[#allocation3 + $0x38] sm:$0xff]
      %v2007 = vld [vmem:[#allocation3 + $0x40] sm:$0xff]
      %v2008 = vld [vmem:[#allocation3 + $0x48] sm:$0xff]
      %v2009 = vld [vmem:[#allocation3 + $0x50] sm:$0xff]
      %v2010 = vld [vmem:[#allocation3 + $0x58] sm:$0xff]
      %v2011 = vld [vmem:[#allocation3 + $0x60] sm:$0xff]
      %v2012 = vld [vmem:[#allocation3 + $0x68] sm:$0xff]
      %v2013 = vld [vmem:[#allocation3 + $0x70] sm:$0xff]
      %v2014 = vld [vmem:[#allocation3 + $0x78] sm:$0xff]
      %v2015 = vld [vmem:[#allocation3 + $0x80] sm:$0xff]
      %v2016 = vld [vmem:[#allocation3 + $0x88] sm:$0xff]
      %v2017 = vld [vmem:[#allocation3 + $0x90] sm:$0xff]
      %v2018 = vld [vmem:[#allocation3 + $0x98] sm:$0xff]
      %v2019 = vld [vmem:[#allocation3 + $0xa0] sm:$0xff]
      %v2020 = vld [vmem:[#allocation3 + $0xa8] sm:$0xff]
      %v2021 = vld [vmem:[#allocation3 + $0xb0] sm:$0xff]
      %v2022 = vld [vmem:[#allocation3 + $0xb8] sm:$0xff]
      %v2023 = vld [vmem:[#allocation3 + $0xc0] sm:$0xff]
      %v2024 = vld [vmem:[#allocation3 + $0xc8] sm:$0xff]
      %v2025 = vld [vmem:[#allocation3 + $0xd0] sm:$0xff]
      %v2026 = vld [vmem:[#allocation3 + $0xd8] sm:$0xff]
      %v2027 = vld [vmem:[#allocation3 + $0xe0] sm:$0xff]
      %v2028 = vld [vmem:[#allocation3 + $0xe8] sm:$0xff]
      %v2029 = vld [vmem:[#allocation3 + $0xf0] sm:$0xff]
      %v2030 = vld [vmem:[#allocation3 + $0xf8] sm:$0xff]
      %v2031 = vld [vmem:[%s1] sm:$0xff]
      %v2032 = vld [vmem:[%s1 + $0x8] sm:$0xff]
      %v2033 = vld [vmem:[%s1 + $0x10] sm:$0xff]
      %v2034 = vld [vmem:[%s1 + $0x18] sm:$0xff]
      %v2035 = vld [vmem:[%s1 + $0x20] sm:$0xf]
      %vm2036 = vcmask 293888
      %v2038 = vsel %vm2036, %v1999, 0
      %v2041 = vsel %vm2036, %v2000, 0
      %v2044 = vsel %vm2036, %v2001, 0
      %v2047 = vsel %vm2036, %v2002, 0
      %v2050 = vsel %vm2036, %v2003, 0
      %v2053 = vsel %vm2036, %v2004, 0
      %v2056 = vsel %vm2036, %v2005, 0
      %v2059 = vsel %vm2036, %v2006, 0
      %v2062 = vsel %vm2036, %v2007, 0
      %v2065 = vsel %vm2036, %v2008, 0
      %v2068 = vsel %vm2036, %v2009, 0
      %v2071 = vsel %vm2036, %v2010, 0
      %v2074 = vsel %vm2036, %v2011, 0
      %v2077 = vsel %vm2036, %v2012, 0
      %v2080 = vsel %vm2036, %v2013, 0
      %v2083 = vsel %vm2036, %v2014, 0
      %v2086 = vsel %vm2036, %v2015, 0
      %v2089 = vsel %vm2036, %v2016, 0
      %v2092 = vsel %vm2036, %v2017, 0
      %v2095 = vsel %vm2036, %v2018, 0
      %v2098 = vsel %vm2036, %v2019, 0
      %v2101 = vsel %vm2036, %v2020, 0
      %v2104 = vsel %vm2036, %v2021, 0
      %v2107 = vsel %vm2036, %v2022, 0
      %v2110 = vsel %vm2036, %v2023, 0
      %v2113 = vsel %vm2036, %v2024, 0
      %v2116 = vsel %vm2036, %v2025, 0
      %v2119 = vsel %vm2036, %v2026, 0
      %v2122 = vsel %vm2036, %v2027, 0
      %v2125 = vsel %vm2036, %v2028, 0
      %v2128 = vsel %vm2036, %v2029, 0
      %v2131 = vsel %vm2036, %v2030, 0
      %vm2133 = vcmask 1043456
      %v2135 = vsel %vm2133, %v2035, 0
      %2137 = vmatprep.subr.mxu0 0.0
      %2138 = vmatpush1.msra.mxu0 %v2031
      %2139 = vmatprep.subr.mxu0 0.0
      %2140 = vmatpush1.msra.mxu0 %v2032
      %2141 = vmatprep.subr.mxu0 0.0
      %2142 = vmatpush1.msra.mxu0 %v2033
      %2143 = vmatprep.subr.mxu0 0.0
      %2144 = vmatpush1.msra.mxu0 %v2034
      %2145 = vmatprep.subr.mxu0 0.0
      %2146 = vmatpush1.msra.mxu0 %v2135
      %2147 = vmatprep.subr.mxu0 0.0
      %2148 = vmatpush1.msra.mxu0 0.0
      %2149 = vmatprep.subr.mxu0 0.0
      %2150 = vmatpush1.msra.mxu0 0.0
      %2151 = vmatprep.subr.mxu0 0.0
      %2152 = vmatpush1.msra.mxu0 0.0
      %2153 = vmatprep.subr.mxu0 0.0
      %2154 = vmatpush1.msra.mxu0 0.0
      %2155 = vmatprep.subr.mxu0 0.0
      %2156 = vmatpush1.msra.mxu0 0.0
      %2157 = vmatprep.subr.mxu0 0.0
      %2158 = vmatpush1.msra.mxu0 0.0
      %2159 = vmatprep.subr.mxu0 0.0
      %2160 = vmatpush1.msra.mxu0 0.0
      %2161 = vmatprep.subr.mxu0 0.0
      %2162 = vmatpush1.msra.mxu0 0.0
      %2163 = vmatprep.subr.mxu0 0.0
      %2164 = vmatpush1.msra.mxu0 0.0
      %2165 = vmatprep.subr.mxu0 0.0
      %2166 = vmatpush1.msra.mxu0 0.0
      %2167 = vmatprep.subr.mxu0 0.0
      %2168 = vmatpush1.msra.mxu0 0.0
      %2169 = vmatprep.subr.mxu0 0.0
      %2170 = vmatpush1.msra.mxu0 0.0
      %2171 = vmatprep.subr.mxu0 0.0
      %2172 = vmatpush1.msra.mxu0 0.0
      %2173 = vmatprep.subr.mxu0 0.0
      %2174 = vmatpush1.msra.mxu0 0.0
      %2175 = vmatprep.subr.mxu0 0.0
      %2176 = vmatpush1.msra.mxu0 0.0
      %2177 = vmatprep.subr.mxu0 0.0
      %2178 = vmatpush1.msra.mxu0 0.0
      %2179 = vmatprep.subr.mxu0 0.0
      %2180 = vmatpush1.msra.mxu0 0.0
      %2181 = vmatprep.subr.mxu0 0.0
      %2182 = vmatpush1.msra.mxu0 0.0
      %2183 = vmatprep.subr.mxu0 0.0
      %2184 = vmatpush1.msra.mxu0 0.0
      %2185 = vmatprep.subr.mxu0 0.0
      %2186 = vmatpush1.msra.mxu0 0.0
      %2187 = vmatprep.subr.mxu0 0.0
      %2188 = vmatpush1.msra.mxu0 0.0
      %2189 = vmatprep.subr.mxu0 0.0
      %2190 = vmatpush1.msra.mxu0 0.0
      %2191 = vmatprep.subr.mxu0 0.0
      %2192 = vmatpush1.msra.mxu0 0.0
      %2193 = vmatprep.subr.mxu0 0.0
      %2194 = vmatpush1.msra.mxu0 0.0
      %2195 = vmatprep.subr.mxu0 0.0
      %2196 = vmatpush1.msra.mxu0 0.0
      %2197 = vmatprep.subr.mxu0 0.0
      %2198 = vmatpush1.msra.mxu0 0.0
      %2199 = vmatprep.subr.mxu0 0.0
      %2200 = vmatpush1.msra.mxu0 0.0
      %2201 = vmatprep.mubr.f32.mxu0 0.0
      %2202 = vmatmul.mubr.f32.gmra.mrb[0].mxu0 %v2038
      %v2203 = vpop.f32.mrb[0].mxu0
      %v2204 = vadd.f32 0.0, %v2203
      %v2205 = vpop.f32.mrb[0].mxu0
      %2206 = vmatprep.mubr.f32.mxu0 0.0
      %2207 = vmatmul.mubr.f32.gmra.mrb[0].mxu0 %v2041
      %v2208 = vpop.f32.mrb[0].mxu0
      %v2209 = vadd.f32 0.0, %v2208
      %v2210 = vpop.f32.mrb[0].mxu0
      %2211 = vmatprep.mubr.f32.mxu0 0.0
      %2212 = vmatmul.mubr.f32.gmra.mrb[0].mxu0 %v2044
      %v2213 = vpop.f32.mrb[0].mxu0
      %v2214 = vadd.f32 0.0, %v2213
      %v2215 = vpop.f32.mrb[0].mxu0
      %2216 = vmatprep.mubr.f32.mxu0 0.0
      %2217 = vmatmul.mubr.f32.gmra.mrb[0].mxu0 %v2047
      %v2218 = vpop.f32.mrb[0].mxu0
      %v2219 = vadd.f32 0.0, %v2218
      %v2220 = vpop.f32.mrb[0].mxu0
      %2221 = vmatprep.mubr.f32.mxu0 0.0
      %2222 = vmatmul.mubr.f32.gmra.mrb[0].mxu0 %v2050
      %v2223 = vpop.f32.mrb[0].mxu0
      %v2224 = vadd.f32 0.0, %v2223
      %v2225 = vpop.f32.mrb[0].mxu0
      %2226 = vmatprep.mubr.f32.mxu0 0.0
      %2227 = vmatmul.mubr.f32.gmra.mrb[0].mxu0 %v2053
      %v2228 = vpop.f32.mrb[0].mxu0
      %v2229 = vadd.f32 0.0, %v2228
      %v2230 = vpop.f32.mrb[0].mxu0
      %2231 = vmatprep.mubr.f32.mxu0 0.0
      %2232 = vmatmul.mubr.f32.gmra.mrb[0].mxu0 %v2056
      %v2233 = vpop.f32.mrb[0].mxu0
      %v2234 = vadd.f32 0.0, %v2233
      %v2235 = vpop.f32.mrb[0].mxu0
      %2236 = vmatprep.mubr.f32.mxu0 0.0
      %2237 = vmatmul.mubr.f32.gmra.mrb[0].mxu0 %v2059
      %v2238 = vpop.f32.mrb[0].mxu0
      %v2239 = vadd.f32 0.0, %v2238
      %v2240 = vpop.f32.mrb[0].mxu0
      %2241 = vmatprep.mubr.f32.mxu0 0.0
      %2242 = vmatmul.mubr.f32.gmra.mrb[0].mxu0 %v2062
      %v2243 = vpop.f32.mrb[0].mxu0
      %v2244 = vadd.f32 0.0, %v2243
      %v2245 = vpop.f32.mrb[0].mxu0
      %2246 = vmatprep.mubr.f32.mxu0 0.0
      %2247 = vmatmul.mubr.f32.gmra.mrb[0].mxu0 %v2065
      %v2248 = vpop.f32.mrb[0].mxu0
      %v2249 = vadd.f32 0.0, %v2248
      %v2250 = vpop.f32.mrb[0].mxu0
      %2251 = vmatprep.mubr.f32.mxu0 0.0
      %2252 = vmatmul.mubr.f32.gmra.mrb[0].mxu0 %v2068
      %v2253 = vpop.f32.mrb[0].mxu0
      %v2254 = vadd.f32 0.0, %v2253
      %v2255 = vpop.f32.mrb[0].mxu0
      %2256 = vmatprep.mubr.f32.mxu0 0.0
      %2257 = vmatmul.mubr.f32.gmra.mrb[0].mxu0 %v2071
      %v2258 = vpop.f32.mrb[0].mxu0
      %v2259 = vadd.f32 0.0, %v2258
      %v2260 = vpop.f32.mrb[0].mxu0
      %2261 = vmatprep.mubr.f32.mxu0 0.0
      %2262 = vmatmul.mubr.f32.gmra.mrb[0].mxu0 %v2074
      %v2263 = vpop.f32.mrb[0].mxu0
      %v2264 = vadd.f32 0.0, %v2263
      %v2265 = vpop.f32.mrb[0].mxu0
      %2266 = vmatprep.mubr.f32.mxu0 0.0
      %2267 = vmatmul.mubr.f32.gmra.mrb[0].mxu0 %v2077
      %v2268 = vpop.f32.mrb[0].mxu0
      %v2269 = vadd.f32 0.0, %v2268
      %v2270 = vpop.f32.mrb[0].mxu0
      %2271 = vmatprep.mubr.f32.mxu0 0.0
      %2272 = vmatmul.mubr.f32.gmra.mrb[0].mxu0 %v2080
      %v2273 = vpop.f32.mrb[0].mxu0
      %v2274 = vadd.f32 0.0, %v2273
      %v2275 = vpop.f32.mrb[0].mxu0
      %2276 = vmatprep.mubr.f32.mxu0 0.0
      %2277 = vmatmul.mubr.f32.gmra.mrb[0].mxu0 %v2083
      %v2278 = vpop.f32.mrb[0].mxu0
      %v2279 = vadd.f32 0.0, %v2278
      %v2280 = vpop.f32.mrb[0].mxu0
      %2281 = vmatprep.mubr.f32.mxu0 0.0
      %2282 = vmatmul.mubr.f32.gmra.mrb[0].mxu0 %v2086
      %v2283 = vpop.f32.mrb[0].mxu0
      %v2284 = vadd.f32 0.0, %v2283
      %v2285 = vpop.f32.mrb[0].mxu0
      %2286 = vmatprep.mubr.f32.mxu0 0.0
      %2287 = vmatmul.mubr.f32.gmra.mrb[0].mxu0 %v2089
      %v2288 = vpop.f32.mrb[0].mxu0
      %v2289 = vadd.f32 0.0, %v2288
      %v2290 = vpop.f32.mrb[0].mxu0
      %2291 = vmatprep.mubr.f32.mxu0 0.0
      %2292 = vmatmul.mubr.f32.gmra.mrb[0].mxu0 %v2092
      %v2293 = vpop.f32.mrb[0].mxu0
      %v2294 = vadd.f32 0.0, %v2293
      %v2295 = vpop.f32.mrb[0].mxu0
      %2296 = vmatprep.mubr.f32.mxu0 0.0
      %2297 = vmatmul.mubr.f32.gmra.mrb[0].mxu0 %v2095
      %v2298 = vpop.f32.mrb[0].mxu0
      %v2299 = vadd.f32 0.0, %v2298
      %v2300 = vpop.f32.mrb[0].mxu0
      %2301 = vmatprep.mubr.f32.mxu0 0.0
      %2302 = vmatmul.mubr.f32.gmra.mrb[0].mxu0 %v2098
      %v2303 = vpop.f32.mrb[0].mxu0
      %v2304 = vadd.f32 0.0, %v2303
      %v2305 = vpop.f32.mrb[0].mxu0
      %2306 = vmatprep.mubr.f32.mxu0 0.0
      %2307 = vmatmul.mubr.f32.gmra.mrb[0].mxu0 %v2101
      %v2308 = vpop.f32.mrb[0].mxu0
      %v2309 = vadd.f32 0.0, %v2308
      %v2310 = vpop.f32.mrb[0].mxu0
      %2311 = vmatprep.mubr.f32.mxu0 0.0
      %2312 = vmatmul.mubr.f32.gmra.mrb[0].mxu0 %v2104
      %v2313 = vpop.f32.mrb[0].mxu0
      %v2314 = vadd.f32 0.0, %v2313
      %v2315 = vpop.f32.mrb[0].mxu0
      %2316 = vmatprep.mubr.f32.mxu0 0.0
      %2317 = vmatmul.mubr.f32.gmra.mrb[0].mxu0 %v2107
      %v2318 = vpop.f32.mrb[0].mxu0
      %v2319 = vadd.f32 0.0, %v2318
      %v2320 = vpop.f32.mrb[0].mxu0
      %2321 = vmatprep.mubr.f32.mxu0 0.0
      %2322 = vmatmul.mubr.f32.gmra.mrb[0].mxu0 %v2110
      %v2323 = vpop.f32.mrb[0].mxu0
      %v2324 = vadd.f32 0.0, %v2323
      %v2325 = vpop.f32.mrb[0].mxu0
      %2326 = vmatprep.mubr.f32.mxu0 0.0
      %2327 = vmatmul.mubr.f32.gmra.mrb[0].mxu0 %v2113
      %v2328 = vpop.f32.mrb[0].mxu0
      %v2329 = vadd.f32 0.0, %v2328
      %v2330 = vpop.f32.mrb[0].mxu0
      %2331 = vmatprep.mubr.f32.mxu0 0.0
      %2332 = vmatmul.mubr.f32.gmra.mrb[0].mxu0 %v2116
      %v2333 = vpop.f32.mrb[0].mxu0
      %v2334 = vadd.f32 0.0, %v2333
      %v2335 = vpop.f32.mrb[0].mxu0
      %2336 = vmatprep.mubr.f32.mxu0 0.0
      %2337 = vmatmul.mubr.f32.gmra.mrb[0].mxu0 %v2119
      %v2338 = vpop.f32.mrb[0].mxu0
      %v2339 = vadd.f32 0.0, %v2338
      %v2340 = vpop.f32.mrb[0].mxu0
      %2341 = vmatprep.mubr.f32.mxu0 0.0
      %2342 = vmatmul.mubr.f32.gmra.mrb[0].mxu0 %v2122
      %v2343 = vpop.f32.mrb[0].mxu0
      %v2344 = vadd.f32 0.0, %v2343
      %v2345 = vpop.f32.mrb[0].mxu0
      %2346 = vmatprep.mubr.f32.mxu0 0.0
      %2347 = vmatmul.mubr.f32.gmra.mrb[0].mxu0 %v2125
      %v2348 = vpop.f32.mrb[0].mxu0
      %v2349 = vadd.f32 0.0, %v2348
      %v2350 = vpop.f32.mrb[0].mxu0
      %2351 = vmatprep.mubr.f32.mxu0 0.0
      %2352 = vmatmul.mubr.f32.gmra.mrb[0].mxu0 %v2128
      %v2353 = vpop.f32.mrb[0].mxu0
      %v2354 = vadd.f32 0.0, %v2353
      %v2355 = vpop.f32.mrb[0].mxu0
      %2356 = vmatprep.mubr.f32.mxu0 0.0
      %2357 = vmatmul.mubr.f32.gmra.mrb[0].mxu0 %v2131
      %v2358 = vpop.f32.mrb[0].mxu0
      %v2359 = vadd.f32 0.0, %v2358
      %v2360 = vpop.f32.mrb[0].mxu0
      %2361 = vdwg.mxu0
      %v2362 = vld [vmem:[%s3] sm:$0x1]
      %v2364 = vlaneseq
      %v2365 = vshrl.u32 %v2364, 7
      %v2366 = vsub.s32 0, %v2365
      %v2367 = vrot.slane %v2362, %v2366
      %v2369 = vmul.f32 %v2204, %v2367
      %v2370 = vmul.f32 %v2209, %v2367
      %v2371 = vmul.f32 %v2214, %v2367
      %v2372 = vmul.f32 %v2219, %v2367
      %v2373 = vmul.f32 %v2224, %v2367
      %v2374 = vmul.f32 %v2229, %v2367
      %v2375 = vmul.f32 %v2234, %v2367
      %v2376 = vmul.f32 %v2239, %v2367
      %v2377 = vmul.f32 %v2244, %v2367
      %v2378 = vmul.f32 %v2249, %v2367
      %v2379 = vmul.f32 %v2254, %v2367
      %v2380 = vmul.f32 %v2259, %v2367
      %v2381 = vmul.f32 %v2264, %v2367
      %v2382 = vmul.f32 %v2269, %v2367
      %v2383 = vmul.f32 %v2274, %v2367
      %v2384 = vmul.f32 %v2279, %v2367
      %v2385 = vmul.f32 %v2284, %v2367
      %v2386 = vmul.f32 %v2289, %v2367
      %v2387 = vmul.f32 %v2294, %v2367
      %v2388 = vmul.f32 %v2299, %v2367
      %v2389 = vmul.f32 %v2304, %v2367
      %v2390 = vmul.f32 %v2309, %v2367
      %v2391 = vmul.f32 %v2314, %v2367
      %v2392 = vmul.f32 %v2319, %v2367
      %v2393 = vmul.f32 %v2324, %v2367
      %v2394 = vmul.f32 %v2329, %v2367
      %v2395 = vmul.f32 %v2334, %v2367
      %v2396 = vmul.f32 %v2339, %v2367
      %v2397 = vmul.f32 %v2344, %v2367
      %v2398 = vmul.f32 %v2349, %v2367
      %v2399 = vmul.f32 %v2354, %v2367
      %v2400 = vmul.f32 %v2359, %v2367
      %v2401 = vld [vmem:[%s4] sm:$0x1]
      %v2403 = vlaneseq
      %v2404 = vshrl.u32 %v2403, 7
      %v2405 = vsub.s32 0, %v2404
      %v2406 = vrot.slane %v2401, %v2405
      %v2408 = vadd.f32 %v2369, %v2406
      %v2409 = vadd.f32 %v2370, %v2406
      %v2410 = vadd.f32 %v2371, %v2406
      %v2411 = vadd.f32 %v2372, %v2406
      %v2412 = vadd.f32 %v2373, %v2406
      %v2413 = vadd.f32 %v2374, %v2406
      %v2414 = vadd.f32 %v2375, %v2406
      %v2415 = vadd.f32 %v2376, %v2406
      %v2416 = vadd.f32 %v2377, %v2406
      %v2417 = vadd.f32 %v2378, %v2406
      %v2418 = vadd.f32 %v2379, %v2406
      %v2419 = vadd.f32 %v2380, %v2406
      %v2420 = vadd.f32 %v2381, %v2406
      %v2421 = vadd.f32 %v2382, %v2406
      %v2422 = vadd.f32 %v2383, %v2406
      %v2423 = vadd.f32 %v2384, %v2406
      %v2424 = vadd.f32 %v2385, %v2406
      %v2425 = vadd.f32 %v2386, %v2406
      %v2426 = vadd.f32 %v2387, %v2406
      %v2427 = vadd.f32 %v2388, %v2406
      %v2428 = vadd.f32 %v2389, %v2406
      %v2429 = vadd.f32 %v2390, %v2406
      %v2430 = vadd.f32 %v2391, %v2406
      %v2431 = vadd.f32 %v2392, %v2406
      %v2432 = vadd.f32 %v2393, %v2406
      %v2433 = vadd.f32 %v2394, %v2406
      %v2434 = vadd.f32 %v2395, %v2406
      %v2435 = vadd.f32 %v2396, %v2406
      %v2436 = vadd.f32 %v2397, %v2406
      %v2437 = vadd.f32 %v2398, %v2406
      %v2438 = vadd.f32 %v2399, %v2406
      %v2439 = vadd.f32 %v2400, %v2406
      %v2440 = vmax.f32 %v2408, 0.0
      %v2441 = vmax.f32 %v2409, 0.0
      %v2442 = vmax.f32 %v2410, 0.0
      %v2443 = vmax.f32 %v2411, 0.0
      %v2444 = vmax.f32 %v2412, 0.0
      %v2445 = vmax.f32 %v2413, 0.0
      %v2446 = vmax.f32 %v2414, 0.0
      %v2447 = vmax.f32 %v2415, 0.0
      %v2448 = vmax.f32 %v2416, 0.0
      %v2449 = vmax.f32 %v2417, 0.0
      %v2450 = vmax.f32 %v2418, 0.0
      %v2451 = vmax.f32 %v2419, 0.0
      %v2452 = vmax.f32 %v2420, 0.0
      %v2453 = vmax.f32 %v2421, 0.0
      %v2454 = vmax.f32 %v2422, 0.0
      %v2455 = vmax.f32 %v2423, 0.0
      %v2456 = vmax.f32 %v2424, 0.0
      %v2457 = vmax.f32 %v2425, 0.0
      %v2458 = vmax.f32 %v2426, 0.0
      %v2459 = vmax.f32 %v2427, 0.0
      %v2460 = vmax.f32 %v2428, 0.0
      %v2461 = vmax.f32 %v2429, 0.0
      %v2462 = vmax.f32 %v2430, 0.0
      %v2463 = vmax.f32 %v2431, 0.0
      %v2464 = vmax.f32 %v2432, 0.0
      %v2465 = vmax.f32 %v2433, 0.0
      %v2466 = vmax.f32 %v2434, 0.0
      %v2467 = vmax.f32 %v2435, 0.0
      %v2468 = vmax.f32 %v2436, 0.0
      %v2469 = vmax.f32 %v2437, 0.0
      %v2470 = vmax.f32 %v2438, 0.0
      %v2471 = vmax.f32 %v2439, 0.0
      %2472 = vst.msk [vmem:[%s357 + $0x1] sm:$0xff] %vm279, %v2440
      %2473 = vst.msk [vmem:[%s357 + $0x9] sm:$0xff] %vm279, %v2441
      %2474 = vst.msk [vmem:[%s357 + $0x19] sm:$0xff] %vm279, %v2442
      %2475 = vst.msk [vmem:[%s357 + $0x21] sm:$0xff] %vm279, %v2443
      %2476 = vst.msk [vmem:[%s357 + $0x31] sm:$0xff] %vm279, %v2444
      %2477 = vst.msk [vmem:[%s357 + $0x39] sm:$0xff] %vm279, %v2445
      %2478 = vst.msk [vmem:[%s357 + $0x49] sm:$0xff] %vm279, %v2446
      %2479 = vst.msk [vmem:[%s357 + $0x51] sm:$0xff] %vm279, %v2447
      %2480 = vst.msk [vmem:[%s357 + $0x61] sm:$0xff] %vm279, %v2448
      %2481 = vst.msk [vmem:[%s357 + $0x69] sm:$0xff] %vm279, %v2449
      %2482 = vst.msk [vmem:[%s357 + $0x79] sm:$0xff] %vm279, %v2450
      %2483 = vst.msk [vmem:[%s357 + $0x81] sm:$0xff] %vm279, %v2451
      %2484 = vst.msk [vmem:[%s357 + $0x91] sm:$0xff] %vm279, %v2452
      %2485 = vst.msk [vmem:[%s357 + $0x99] sm:$0xff] %vm279, %v2453
      %2486 = vst.msk [vmem:[%s357 + $0xa9] sm:$0xff] %vm279, %v2454
      %2487 = vst.msk [vmem:[%s357 + $0xb1] sm:$0xff] %vm279, %v2455
      %2488 = vst.msk [vmem:[%s357 + $0xc1] sm:$0xff] %vm279, %v2456
      %2489 = vst.msk [vmem:[%s357 + $0xc9] sm:$0xff] %vm279, %v2457
      %2490 = vst.msk [vmem:[%s357 + $0xd9] sm:$0xff] %vm279, %v2458
      %2491 = vst.msk [vmem:[%s357 + $0xe1] sm:$0xff] %vm279, %v2459
      %2492 = vst.msk [vmem:[%s357 + $0xf1] sm:$0xff] %vm279, %v2460
      %2493 = vst.msk [vmem:[%s357 + $0xf9] sm:$0xff] %vm279, %v2461
      %2494 = vst.msk [vmem:[%s357 + $0x109] sm:$0xff] %vm279, %v2462
      %2495 = vst.msk [vmem:[%s357 + $0x111] sm:$0xff] %vm279, %v2463
      %2496 = vst.msk [vmem:[%s357 + $0x121] sm:$0xff] %vm279, %v2464
      %2497 = vst.msk [vmem:[%s357 + $0x129] sm:$0xff] %vm279, %v2465
      %2498 = vst.msk [vmem:[%s357 + $0x139] sm:$0xff] %vm279, %v2466
      %2499 = vst.msk [vmem:[%s357 + $0x141] sm:$0xff] %vm279, %v2467
      %2500 = vst.msk [vmem:[%s357 + $0x151] sm:$0xff] %vm279, %v2468
      %2501 = vst.msk [vmem:[%s357 + $0x159] sm:$0xff] %vm279, %v2469
      %2502 = vst.msk [vmem:[%s357 + $0x169] sm:$0xff] %vm279, %v2470
      %2503 = vst.msk [vmem:[%s357 + $0x171] sm:$0xff] %vm279, %v2471
      %v2504 = vld [vmem:[#allocation2] sm:$0xff]
      %v2505 = vld [vmem:[#allocation2 + $0x8] sm:$0xff]
      %v2506 = vld [vmem:[#allocation2 + $0x18] sm:$0xff]
      %v2507 = vld [vmem:[#allocation2 + $0x20] sm:$0xff]
      %v2508 = vld [vmem:[#allocation2 + $0x30] sm:$0xff]
      %v2509 = vld [vmem:[#allocation2 + $0x38] sm:$0xff]
      %v2510 = vld [vmem:[#allocation2 + $0x48] sm:$0xff]
      %v2511 = vld [vmem:[#allocation2 + $0x50] sm:$0xff]
      %v2512 = vld [vmem:[#allocation2 + $0x60] sm:$0xff]
      %v2513 = vld [vmem:[#allocation2 + $0x68] sm:$0xff]
      %v2514 = vld [vmem:[#allocation2 + $0x78] sm:$0xff]
      %v2515 = vld [vmem:[#allocation2 + $0x80] sm:$0xff]
      %v2516 = vld [vmem:[#allocation2 + $0x90] sm:$0xff]
      %v2517 = vld [vmem:[#allocation2 + $0x98] sm:$0xff]
      %v2518 = vld [vmem:[#allocation2 + $0xa8] sm:$0xff]
      %v2519 = vld [vmem:[#allocation2 + $0xb0] sm:$0xff]
      %v2520 = vld [vmem:[#allocation2 + $0xc0] sm:$0xff]
      %v2521 = vld [vmem:[#allocation2 + $0xc8] sm:$0xff]
      %v2522 = vld [vmem:[#allocation2 + $0xd8] sm:$0xff]
      %v2523 = vld [vmem:[#allocation2 + $0xe0] sm:$0xff]
      %v2524 = vld [vmem:[#allocation2 + $0xf0] sm:$0xff]
      %v2525 = vld [vmem:[#allocation2 + $0xf8] sm:$0xff]
      %v2526 = vld [vmem:[#allocation2 + $0x108] sm:$0xff]
      %v2527 = vld [vmem:[#allocation2 + $0x110] sm:$0xff]
      %v2528 = vld [vmem:[#allocation2 + $0x120] sm:$0xff]
      %v2529 = vld [vmem:[#allocation2 + $0x128] sm:$0xff]
      %v2530 = vld [vmem:[#allocation2 + $0x138] sm:$0xff]
      %v2531 = vld [vmem:[#allocation2 + $0x140] sm:$0xff]
      %v2532 = vld [vmem:[#allocation2 + $0x150] sm:$0xff]
      %v2533 = vld [vmem:[#allocation2 + $0x158] sm:$0xff]
      %v2534 = vld [vmem:[#allocation2 + $0x168] sm:$0xff]
      %v2535 = vld [vmem:[#allocation2 + $0x170] sm:$0xff]
      %2536 = vst.msk [vmem:[#allocation3] sm:$0xff] %vm279, %v2504
      %2537 = vst.msk [vmem:[#allocation3 + $0x8] sm:$0xff] %vm279, %v2505
      %2538 = vst.msk [vmem:[#allocation3 + $0x10] sm:$0xff] %vm279, %v2506
      %2539 = vst.msk [vmem:[#allocation3 + $0x18] sm:$0xff] %vm279, %v2507
      %2540 = vst.msk [vmem:[#allocation3 + $0x20] sm:$0xff] %vm279, %v2508
      %2541 = vst.msk [vmem:[#allocation3 + $0x28] sm:$0xff] %vm279, %v2509
      %2542 = vst.msk [vmem:[#allocation3 + $0x30] sm:$0xff] %vm279, %v2510
      %2543 = vst.msk [vmem:[#allocation3 + $0x38] sm:$0xff] %vm279, %v2511
      %2544 = vst.msk [vmem:[#allocation3 + $0x40] sm:$0xff] %vm279, %v2512
      %2545 = vst.msk [vmem:[#allocation3 + $0x48] sm:$0xff] %vm279, %v2513
      %2546 = vst.msk [vmem:[#allocation3 + $0x50] sm:$0xff] %vm279, %v2514
      %2547 = vst.msk [vmem:[#allocation3 + $0x58] sm:$0xff] %vm279, %v2515
      %2548 = vst.msk [vmem:[#allocation3 + $0x60] sm:$0xff] %vm279, %v2516
      %2549 = vst.msk [vmem:[#allocation3 + $0x68] sm:$0xff] %vm279, %v2517
      %2550 = vst.msk [vmem:[#allocation3 + $0x70] sm:$0xff] %vm279, %v2518
      %2551 = vst.msk [vmem:[#allocation3 + $0x78] sm:$0xff] %vm279, %v2519
      %2552 = vst.msk [vmem:[#allocation3 + $0x80] sm:$0xff] %vm279, %v2520
      %2553 = vst.msk [vmem:[#allocation3 + $0x88] sm:$0xff] %vm279, %v2521
      %2554 = vst.msk [vmem:[#allocation3 + $0x90] sm:$0xff] %vm279, %v2522
      %2555 = vst.msk [vmem:[#allocation3 + $0x98] sm:$0xff] %vm279, %v2523
      %2556 = vst.msk [vmem:[#allocation3 + $0xa0] sm:$0xff] %vm279, %v2524
      %2557 = vst.msk [vmem:[#allocation3 + $0xa8] sm:$0xff] %vm279, %v2525
      %2558 = vst.msk [vmem:[#allocation3 + $0xb0] sm:$0xff] %vm279, %v2526
      %2559 = vst.msk [vmem:[#allocation3 + $0xb8] sm:$0xff] %vm279, %v2527
      %2560 = vst.msk [vmem:[#allocation3 + $0xc0] sm:$0xff] %vm279, %v2528
      %2561 = vst.msk [vmem:[#allocation3 + $0xc8] sm:$0xff] %vm279, %v2529
      %2562 = vst.msk [vmem:[#allocation3 + $0xd0] sm:$0xff] %vm279, %v2530
      %2563 = vst.msk [vmem:[#allocation3 + $0xd8] sm:$0xff] %vm279, %v2531
      %2564 = vst.msk [vmem:[#allocation3 + $0xe0] sm:$0xff] %vm279, %v2532
      %2565 = vst.msk [vmem:[#allocation3 + $0xe8] sm:$0xff] %vm279, %v2533
      %2566 = vst.msk [vmem:[#allocation3 + $0xf0] sm:$0xff] %vm279, %v2534
      %2567 = vst.msk [vmem:[#allocation3 + $0xf8] sm:$0xff] %vm279, %v2535
      %v2568 = vld [vmem:[#allocation2 + $0x1] sm:$0xff]
      %v2569 = vld [vmem:[#allocation2 + $0x9] sm:$0xff]
      %v2570 = vld [vmem:[#allocation2 + $0x19] sm:$0xff]
      %v2571 = vld [vmem:[#allocation2 + $0x21] sm:$0xff]
      %v2572 = vld [vmem:[#allocation2 + $0x31] sm:$0xff]
      %v2573 = vld [vmem:[#allocation2 + $0x39] sm:$0xff]
      %v2574 = vld [vmem:[#allocation2 + $0x49] sm:$0xff]
      %v2575 = vld [vmem:[#allocation2 + $0x51] sm:$0xff]
      %v2576 = vld [vmem:[#allocation2 + $0x61] sm:$0xff]
      %v2577 = vld [vmem:[#allocation2 + $0x69] sm:$0xff]
      %v2578 = vld [vmem:[#allocation2 + $0x79] sm:$0xff]
      %v2579 = vld [vmem:[#allocation2 + $0x81] sm:$0xff]
      %v2580 = vld [vmem:[#allocation2 + $0x91] sm:$0xff]
      %v2581 = vld [vmem:[#allocation2 + $0x99] sm:$0xff]
      %v2582 = vld [vmem:[#allocation2 + $0xa9] sm:$0xff]
      %v2583 = vld [vmem:[#allocation2 + $0xb1] sm:$0xff]
      %v2584 = vld [vmem:[#allocation2 + $0xc1] sm:$0xff]
      %v2585 = vld [vmem:[#allocation2 + $0xc9] sm:$0xff]
      %v2586 = vld [vmem:[#allocation2 + $0xd9] sm:$0xff]
      %v2587 = vld [vmem:[#allocation2 + $0xe1] sm:$0xff]
      %v2588 = vld [vmem:[#allocation2 + $0xf1] sm:$0xff]
      %v2589 = vld [vmem:[#allocation2 + $0xf9] sm:$0xff]
      %v2590 = vld [vmem:[#allocation2 + $0x109] sm:$0xff]
      %v2591 = vld [vmem:[#allocation2 + $0x111] sm:$0xff]
      %v2592 = vld [vmem:[#allocation2 + $0x121] sm:$0xff]
      %v2593 = vld [vmem:[#allocation2 + $0x129] sm:$0xff]
      %v2594 = vld [vmem:[#allocation2 + $0x139] sm:$0xff]
      %v2595 = vld [vmem:[#allocation2 + $0x141] sm:$0xff]
      %v2596 = vld [vmem:[#allocation2 + $0x151] sm:$0xff]
      %v2597 = vld [vmem:[#allocation2 + $0x159] sm:$0xff]
      %v2598 = vld [vmem:[#allocation2 + $0x169] sm:$0xff]
      %v2599 = vld [vmem:[#allocation2 + $0x171] sm:$0xff]
      %2632 = vrot.lane.b32.xlu0 %v2568, 4
      %v2633 = vpop.permute.xlu0 %2632
      %2634 = vrot.lane.b32.xlu0 %v2569, 4
      %v2635 = vpop.permute.xlu0 %2634
      %2636 = vrot.lane.b32.xlu0 %v2570, 4
      %v2637 = vpop.permute.xlu0 %2636
      %2638 = vrot.lane.b32.xlu0 %v2571, 4
      %v2639 = vpop.permute.xlu0 %2638
      %2640 = vrot.lane.b32.xlu0 %v2572, 4
      %v2641 = vpop.permute.xlu0 %2640
      %2642 = vrot.lane.b32.xlu0 %v2573, 4
      %v2643 = vpop.permute.xlu0 %2642
      %2644 = vrot.lane.b32.xlu0 %v2574, 4
      %v2645 = vpop.permute.xlu0 %2644
      %2646 = vrot.lane.b32.xlu0 %v2575, 4
      %v2647 = vpop.permute.xlu0 %2646
      %2648 = vrot.lane.b32.xlu0 %v2576, 4
      %v2649 = vpop.permute.xlu0 %2648
      %2650 = vrot.lane.b32.xlu0 %v2577, 4
      %v2651 = vpop.permute.xlu0 %2650
      %2652 = vrot.lane.b32.xlu0 %v2578, 4
      %v2653 = vpop.permute.xlu0 %2652
      %2654 = vrot.lane.b32.xlu0 %v2579, 4
      %v2655 = vpop.permute.xlu0 %2654
      %2656 = vrot.lane.b32.xlu0 %v2580, 4
      %v2657 = vpop.permute.xlu0 %2656
      %2658 = vrot.lane.b32.xlu0 %v2581, 4
      %v2659 = vpop.permute.xlu0 %2658
      %2660 = vrot.lane.b32.xlu0 %v2582, 4
      %v2661 = vpop.permute.xlu0 %2660
      %2662 = vrot.lane.b32.xlu0 %v2583, 4
      %v2663 = vpop.permute.xlu0 %2662
      %2664 = vrot.lane.b32.xlu0 %v2584, 4
      %v2665 = vpop.permute.xlu0 %2664
      %2666 = vrot.lane.b32.xlu0 %v2585, 4
      %v2667 = vpop.permute.xlu0 %2666
      %2668 = vrot.lane.b32.xlu0 %v2586, 4
      %v2669 = vpop.permute.xlu0 %2668
      %2670 = vrot.lane.b32.xlu0 %v2587, 4
      %v2671 = vpop.permute.xlu0 %2670
      %2672 = vrot.lane.b32.xlu0 %v2588, 4
      %v2673 = vpop.permute.xlu0 %2672
      %2674 = vrot.lane.b32.xlu0 %v2589, 4
      %v2675 = vpop.permute.xlu0 %2674
      %2676 = vrot.lane.b32.xlu0 %v2590, 4
      %v2677 = vpop.permute.xlu0 %2676
      %2678 = vrot.lane.b32.xlu0 %v2591, 4
      %v2679 = vpop.permute.xlu0 %2678
      %2680 = vrot.lane.b32.xlu0 %v2592, 4
      %v2681 = vpop.permute.xlu0 %2680
      %2682 = vrot.lane.b32.xlu0 %v2593, 4
      %v2683 = vpop.permute.xlu0 %2682
      %2684 = vrot.lane.b32.xlu0 %v2594, 4
      %v2685 = vpop.permute.xlu0 %2684
      %2686 = vrot.lane.b32.xlu0 %v2595, 4
      %v2687 = vpop.permute.xlu0 %2686
      %2688 = vrot.lane.b32.xlu0 %v2596, 4
      %v2689 = vpop.permute.xlu0 %2688
      %2690 = vrot.lane.b32.xlu0 %v2597, 4
      %v2691 = vpop.permute.xlu0 %2690
      %2692 = vrot.lane.b32.xlu0 %v2598, 4
      %v2693 = vpop.permute.xlu0 %2692
      %2694 = vrot.lane.b32.xlu0 %v2599, 4
      %v2695 = vpop.permute.xlu0 %2694
      %2728 = vst.msk [vmem:[#allocation3] sm:$0xff] %vm614, %v2633
      %2729 = vst.msk [vmem:[#allocation3 + $0x8] sm:$0xff] %vm614, %v2635
      %2730 = vst.msk [vmem:[#allocation3 + $0x10] sm:$0xff] %vm614, %v2637
      %2731 = vst.msk [vmem:[#allocation3 + $0x18] sm:$0xff] %vm614, %v2639
      %2732 = vst.msk [vmem:[#allocation3 + $0x20] sm:$0xff] %vm614, %v2641
      %2733 = vst.msk [vmem:[#allocation3 + $0x28] sm:$0xff] %vm614, %v2643
      %2734 = vst.msk [vmem:[#allocation3 + $0x30] sm:$0xff] %vm614, %v2645
      %2735 = vst.msk [vmem:[#allocation3 + $0x38] sm:$0xff] %vm614, %v2647
      %2736 = vst.msk [vmem:[#allocation3 + $0x40] sm:$0xff] %vm614, %v2649
      %2737 = vst.msk [vmem:[#allocation3 + $0x48] sm:$0xff] %vm614, %v2651
      %2738 = vst.msk [vmem:[#allocation3 + $0x50] sm:$0xff] %vm614, %v2653
      %2739 = vst.msk [vmem:[#allocation3 + $0x58] sm:$0xff] %vm614, %v2655
      %2740 = vst.msk [vmem:[#allocation3 + $0x60] sm:$0xff] %vm614, %v2657
      %2741 = vst.msk [vmem:[#allocation3 + $0x68] sm:$0xff] %vm614, %v2659
      %2742 = vst.msk [vmem:[#allocation3 + $0x70] sm:$0xff] %vm614, %v2661
      %2743 = vst.msk [vmem:[#allocation3 + $0x78] sm:$0xff] %vm614, %v2663
      %2744 = vst.msk [vmem:[#allocation3 + $0x80] sm:$0xff] %vm614, %v2665
      %2745 = vst.msk [vmem:[#allocation3 + $0x88] sm:$0xff] %vm614, %v2667
      %2746 = vst.msk [vmem:[#allocation3 + $0x90] sm:$0xff] %vm614, %v2669
      %2747 = vst.msk [vmem:[#allocation3 + $0x98] sm:$0xff] %vm614, %v2671
      %2748 = vst.msk [vmem:[#allocation3 + $0xa0] sm:$0xff] %vm614, %v2673
      %2749 = vst.msk [vmem:[#allocation3 + $0xa8] sm:$0xff] %vm614, %v2675
      %2750 = vst.msk [vmem:[#allocation3 + $0xb0] sm:$0xff] %vm614, %v2677
      %2751 = vst.msk [vmem:[#allocation3 + $0xb8] sm:$0xff] %vm614, %v2679
      %2752 = vst.msk [vmem:[#allocation3 + $0xc0] sm:$0xff] %vm614, %v2681
      %2753 = vst.msk [vmem:[#allocation3 + $0xc8] sm:$0xff] %vm614, %v2683
      %2754 = vst.msk [vmem:[#allocation3 + $0xd0] sm:$0xff] %vm614, %v2685
      %2755 = vst.msk [vmem:[#allocation3 + $0xd8] sm:$0xff] %vm614, %v2687
      %2756 = vst.msk [vmem:[#allocation3 + $0xe0] sm:$0xff] %vm614, %v2689
      %2757 = vst.msk [vmem:[#allocation3 + $0xe8] sm:$0xff] %vm614, %v2691
      %2758 = vst.msk [vmem:[#allocation3 + $0xf0] sm:$0xff] %vm614, %v2693
      %2759 = vst.msk [vmem:[#allocation3 + $0xf8] sm:$0xff] %vm614, %v2695
      %v2760 = vld [vmem:[#allocation2 + $0x2] sm:$0xff]
      %v2761 = vld [vmem:[#allocation2 + $0xa] sm:$0xff]
      %v2762 = vld [vmem:[#allocation2 + $0x1a] sm:$0xff]
      %v2763 = vld [vmem:[#allocation2 + $0x22] sm:$0xff]
      %v2764 = vld [vmem:[#allocation2 + $0x32] sm:$0xff]
      %v2765 = vld [vmem:[#allocation2 + $0x3a] sm:$0xff]
      %v2766 = vld [vmem:[#allocation2 + $0x4a] sm:$0xff]
      %v2767 = vld [vmem:[#allocation2 + $0x52] sm:$0xff]
      %v2768 = vld [vmem:[#allocation2 + $0x62] sm:$0xff]
      %v2769 = vld [vmem:[#allocation2 + $0x6a] sm:$0xff]
      %v2770 = vld [vmem:[#allocation2 + $0x7a] sm:$0xff]
      %v2771 = vld [vmem:[#allocation2 + $0x82] sm:$0xff]
      %v2772 = vld [vmem:[#allocation2 + $0x92] sm:$0xff]
      %v2773 = vld [vmem:[#allocation2 + $0x9a] sm:$0xff]
      %v2774 = vld [vmem:[#allocation2 + $0xaa] sm:$0xff]
      %v2775 = vld [vmem:[#allocation2 + $0xb2] sm:$0xff]
      %v2776 = vld [vmem:[#allocation2 + $0xc2] sm:$0xff]
      %v2777 = vld [vmem:[#allocation2 + $0xca] sm:$0xff]
      %v2778 = vld [vmem:[#allocation2 + $0xda] sm:$0xff]
      %v2779 = vld [vmem:[#allocation2 + $0xe2] sm:$0xff]
      %v2780 = vld [vmem:[#allocation2 + $0xf2] sm:$0xff]
      %v2781 = vld [vmem:[#allocation2 + $0xfa] sm:$0xff]
      %v2782 = vld [vmem:[#allocation2 + $0x10a] sm:$0xff]
      %v2783 = vld [vmem:[#allocation2 + $0x112] sm:$0xff]
      %v2784 = vld [vmem:[#allocation2 + $0x122] sm:$0xff]
      %v2785 = vld [vmem:[#allocation2 + $0x12a] sm:$0xff]
      %v2786 = vld [vmem:[#allocation2 + $0x13a] sm:$0xff]
      %v2787 = vld [vmem:[#allocation2 + $0x142] sm:$0xff]
      %v2788 = vld [vmem:[#allocation2 + $0x152] sm:$0xff]
      %v2789 = vld [vmem:[#allocation2 + $0x15a] sm:$0xff]
      %v2790 = vld [vmem:[#allocation2 + $0x16a] sm:$0xff]
      %v2791 = vld [vmem:[#allocation2 + $0x172] sm:$0xff]
      %2824 = vrot.lane.b32.xlu0 %v2760, 8
      %v2825 = vpop.permute.xlu0 %2824
      %2826 = vrot.lane.b32.xlu0 %v2761, 8
      %v2827 = vpop.permute.xlu0 %2826
      %2828 = vrot.lane.b32.xlu0 %v2762, 8
      %v2829 = vpop.permute.xlu0 %2828
      %2830 = vrot.lane.b32.xlu0 %v2763, 8
      %v2831 = vpop.permute.xlu0 %2830
      %2832 = vrot.lane.b32.xlu0 %v2764, 8
      %v2833 = vpop.permute.xlu0 %2832
      %2834 = vrot.lane.b32.xlu0 %v2765, 8
      %v2835 = vpop.permute.xlu0 %2834
      %2836 = vrot.lane.b32.xlu0 %v2766, 8
      %v2837 = vpop.permute.xlu0 %2836
      %2838 = vrot.lane.b32.xlu0 %v2767, 8
      %v2839 = vpop.permute.xlu0 %2838
      %2840 = vrot.lane.b32.xlu0 %v2768, 8
      %v2841 = vpop.permute.xlu0 %2840
      %2842 = vrot.lane.b32.xlu0 %v2769, 8
      %v2843 = vpop.permute.xlu0 %2842
      %2844 = vrot.lane.b32.xlu0 %v2770, 8
      %v2845 = vpop.permute.xlu0 %2844
      %2846 = vrot.lane.b32.xlu0 %v2771, 8
      %v2847 = vpop.permute.xlu0 %2846
      %2848 = vrot.lane.b32.xlu0 %v2772, 8
      %v2849 = vpop.permute.xlu0 %2848
      %2850 = vrot.lane.b32.xlu0 %v2773, 8
      %v2851 = vpop.permute.xlu0 %2850
      %2852 = vrot.lane.b32.xlu0 %v2774, 8
      %v2853 = vpop.permute.xlu0 %2852
      %2854 = vrot.lane.b32.xlu0 %v2775, 8
      %v2855 = vpop.permute.xlu0 %2854
      %2856 = vrot.lane.b32.xlu0 %v2776, 8
      %v2857 = vpop.permute.xlu0 %2856
      %2858 = vrot.lane.b32.xlu0 %v2777, 8
      %v2859 = vpop.permute.xlu0 %2858
      %2860 = vrot.lane.b32.xlu0 %v2778, 8
      %v2861 = vpop.permute.xlu0 %2860
      %2862 = vrot.lane.b32.xlu0 %v2779, 8
      %v2863 = vpop.permute.xlu0 %2862
      %2864 = vrot.lane.b32.xlu0 %v2780, 8
      %v2865 = vpop.permute.xlu0 %2864
      %2866 = vrot.lane.b32.xlu0 %v2781, 8
      %v2867 = vpop.permute.xlu0 %2866
      %2868 = vrot.lane.b32.xlu0 %v2782, 8
      %v2869 = vpop.permute.xlu0 %2868
      %2870 = vrot.lane.b32.xlu0 %v2783, 8
      %v2871 = vpop.permute.xlu0 %2870
      %2872 = vrot.lane.b32.xlu0 %v2784, 8
      %v2873 = vpop.permute.xlu0 %2872
      %2874 = vrot.lane.b32.xlu0 %v2785, 8
      %v2875 = vpop.permute.xlu0 %2874
      %2876 = vrot.lane.b32.xlu0 %v2786, 8
      %v2877 = vpop.permute.xlu0 %2876
      %2878 = vrot.lane.b32.xlu0 %v2787, 8
      %v2879 = vpop.permute.xlu0 %2878
      %2880 = vrot.lane.b32.xlu0 %v2788, 8
      %v2881 = vpop.permute.xlu0 %2880
      %2882 = vrot.lane.b32.xlu0 %v2789, 8
      %v2883 = vpop.permute.xlu0 %2882
      %2884 = vrot.lane.b32.xlu0 %v2790, 8
      %v2885 = vpop.permute.xlu0 %2884
      %2886 = vrot.lane.b32.xlu0 %v2791, 8
      %v2887 = vpop.permute.xlu0 %2886
      %2920 = vst.msk [vmem:[#allocation3] sm:$0xff] %vm807, %v2825
      %2921 = vst.msk [vmem:[#allocation3 + $0x8] sm:$0xff] %vm807, %v2827
      %2922 = vst.msk [vmem:[#allocation3 + $0x10] sm:$0xff] %vm807, %v2829
      %2923 = vst.msk [vmem:[#allocation3 + $0x18] sm:$0xff] %vm807, %v2831
      %2924 = vst.msk [vmem:[#allocation3 + $0x20] sm:$0xff] %vm807, %v2833
      %2925 = vst.msk [vmem:[#allocation3 + $0x28] sm:$0xff] %vm807, %v2835
      %2926 = vst.msk [vmem:[#allocation3 + $0x30] sm:$0xff] %vm807, %v2837
      %2927 = vst.msk [vmem:[#allocation3 + $0x38] sm:$0xff] %vm807, %v2839
      %2928 = vst.msk [vmem:[#allocation3 + $0x40] sm:$0xff] %vm807, %v2841
      %2929 = vst.msk [vmem:[#allocation3 + $0x48] sm:$0xff] %vm807, %v2843
      %2930 = vst.msk [vmem:[#allocation3 + $0x50] sm:$0xff] %vm807, %v2845
      %2931 = vst.msk [vmem:[#allocation3 + $0x58] sm:$0xff] %vm807, %v2847
      %2932 = vst.msk [vmem:[#allocation3 + $0x60] sm:$0xff] %vm807, %v2849
      %2933 = vst.msk [vmem:[#allocation3 + $0x68] sm:$0xff] %vm807, %v2851
      %2934 = vst.msk [vmem:[#allocation3 + $0x70] sm:$0xff] %vm807, %v2853
      %2935 = vst.msk [vmem:[#allocation3 + $0x78] sm:$0xff] %vm807, %v2855
      %2936 = vst.msk [vmem:[#allocation3 + $0x80] sm:$0xff] %vm807, %v2857
      %2937 = vst.msk [vmem:[#allocation3 + $0x88] sm:$0xff] %vm807, %v2859
      %2938 = vst.msk [vmem:[#allocation3 + $0x90] sm:$0xff] %vm807, %v2861
      %2939 = vst.msk [vmem:[#allocation3 + $0x98] sm:$0xff] %vm807, %v2863
      %2940 = vst.msk [vmem:[#allocation3 + $0xa0] sm:$0xff] %vm807, %v2865
      %2941 = vst.msk [vmem:[#allocation3 + $0xa8] sm:$0xff] %vm807, %v2867
      %2942 = vst.msk [vmem:[#allocation3 + $0xb0] sm:$0xff] %vm807, %v2869
      %2943 = vst.msk [vmem:[#allocation3 + $0xb8] sm:$0xff] %vm807, %v2871
      %2944 = vst.msk [vmem:[#allocation3 + $0xc0] sm:$0xff] %vm807, %v2873
      %2945 = vst.msk [vmem:[#allocation3 + $0xc8] sm:$0xff] %vm807, %v2875
      %2946 = vst.msk [vmem:[#allocation3 + $0xd0] sm:$0xff] %vm807, %v2877
      %2947 = vst.msk [vmem:[#allocation3 + $0xd8] sm:$0xff] %vm807, %v2879
      %2948 = vst.msk [vmem:[#allocation3 + $0xe0] sm:$0xff] %vm807, %v2881
      %2949 = vst.msk [vmem:[#allocation3 + $0xe8] sm:$0xff] %vm807, %v2883
      %2950 = vst.msk [vmem:[#allocation3 + $0xf0] sm:$0xff] %vm807, %v2885
      %2951 = vst.msk [vmem:[#allocation3 + $0xf8] sm:$0xff] %vm807, %v2887
      %v2952 = vld [vmem:[%s357] sm:$0xff]
      %v2953 = vld [vmem:[%s357 + $0x8] sm:$0xff]
      %v2954 = vld [vmem:[%s357 + $0x18] sm:$0xff]
      %v2955 = vld [vmem:[%s357 + $0x20] sm:$0xff]
      %v2956 = vld [vmem:[%s357 + $0x30] sm:$0xff]
      %v2957 = vld [vmem:[%s357 + $0x38] sm:$0xff]
      %v2958 = vld [vmem:[%s357 + $0x48] sm:$0xff]
      %v2959 = vld [vmem:[%s357 + $0x50] sm:$0xff]
      %v2960 = vld [vmem:[%s357 + $0x60] sm:$0xff]
      %v2961 = vld [vmem:[%s357 + $0x68] sm:$0xff]
      %v2962 = vld [vmem:[%s357 + $0x78] sm:$0xff]
      %v2963 = vld [vmem:[%s357 + $0x80] sm:$0xff]
      %v2964 = vld [vmem:[%s357 + $0x90] sm:$0xff]
      %v2965 = vld [vmem:[%s357 + $0x98] sm:$0xff]
      %v2966 = vld [vmem:[%s357 + $0xa8] sm:$0xff]
      %v2967 = vld [vmem:[%s357 + $0xb0] sm:$0xff]
      %v2968 = vld [vmem:[%s357 + $0xc0] sm:$0xff]
      %v2969 = vld [vmem:[%s357 + $0xc8] sm:$0xff]
      %v2970 = vld [vmem:[%s357 + $0xd8] sm:$0xff]
      %v2971 = vld [vmem:[%s357 + $0xe0] sm:$0xff]
      %v2972 = vld [vmem:[%s357 + $0xf0] sm:$0xff]
      %v2973 = vld [vmem:[%s357 + $0xf8] sm:$0xff]
      %v2974 = vld [vmem:[%s357 + $0x108] sm:$0xff]
      %v2975 = vld [vmem:[%s357 + $0x110] sm:$0xff]
      %v2976 = vld [vmem:[%s357 + $0x120] sm:$0xff]
      %v2977 = vld [vmem:[%s357 + $0x128] sm:$0xff]
      %v2978 = vld [vmem:[%s357 + $0x138] sm:$0xff]
      %v2979 = vld [vmem:[%s357 + $0x140] sm:$0xff]
      %v2980 = vld [vmem:[%s357 + $0x150] sm:$0xff]
      %v2981 = vld [vmem:[%s357 + $0x158] sm:$0xff]
      %v2982 = vld [vmem:[%s357 + $0x168] sm:$0xff]
      %v2983 = vld [vmem:[%s357 + $0x170] sm:$0xff]
      %3016 = vrot.lane.b32.xlu0 %v2952, 12
      %v3017 = vpop.permute.xlu0 %3016
      %3018 = vrot.lane.b32.xlu0 %v2953, 12
      %v3019 = vpop.permute.xlu0 %3018
      %3020 = vrot.lane.b32.xlu0 %v2954, 12
      %v3021 = vpop.permute.xlu0 %3020
      %3022 = vrot.lane.b32.xlu0 %v2955, 12
      %v3023 = vpop.permute.xlu0 %3022
      %3024 = vrot.lane.b32.xlu0 %v2956, 12
      %v3025 = vpop.permute.xlu0 %3024
      %3026 = vrot.lane.b32.xlu0 %v2957, 12
      %v3027 = vpop.permute.xlu0 %3026
      %3028 = vrot.lane.b32.xlu0 %v2958, 12
      %v3029 = vpop.permute.xlu0 %3028
      %3030 = vrot.lane.b32.xlu0 %v2959, 12
      %v3031 = vpop.permute.xlu0 %3030
      %3032 = vrot.lane.b32.xlu0 %v2960, 12
      %v3033 = vpop.permute.xlu0 %3032
      %3034 = vrot.lane.b32.xlu0 %v2961, 12
      %v3035 = vpop.permute.xlu0 %3034
      %3036 = vrot.lane.b32.xlu0 %v2962, 12
      %v3037 = vpop.permute.xlu0 %3036
      %3038 = vrot.lane.b32.xlu0 %v2963, 12
      %v3039 = vpop.permute.xlu0 %3038
      %3040 = vrot.lane.b32.xlu0 %v2964, 12
      %v3041 = vpop.permute.xlu0 %3040
      %3042 = vrot.lane.b32.xlu0 %v2965, 12
      %v3043 = vpop.permute.xlu0 %3042
      %3044 = vrot.lane.b32.xlu0 %v2966, 12
      %v3045 = vpop.permute.xlu0 %3044
      %3046 = vrot.lane.b32.xlu0 %v2967, 12
      %v3047 = vpop.permute.xlu0 %3046
      %3048 = vrot.lane.b32.xlu0 %v2968, 12
      %v3049 = vpop.permute.xlu0 %3048
      %3050 = vrot.lane.b32.xlu0 %v2969, 12
      %v3051 = vpop.permute.xlu0 %3050
      %3052 = vrot.lane.b32.xlu0 %v2970, 12
      %v3053 = vpop.permute.xlu0 %3052
      %3054 = vrot.lane.b32.xlu0 %v2971, 12
      %v3055 = vpop.permute.xlu0 %3054
      %3056 = vrot.lane.b32.xlu0 %v2972, 12
      %v3057 = vpop.permute.xlu0 %3056
      %3058 = vrot.lane.b32.xlu0 %v2973, 12
      %v3059 = vpop.permute.xlu0 %3058
      %3060 = vrot.lane.b32.xlu0 %v2974, 12
      %v3061 = vpop.permute.xlu0 %3060
      %3062 = vrot.lane.b32.xlu0 %v2975, 12
      %v3063 = vpop.permute.xlu0 %3062
      %3064 = vrot.lane.b32.xlu0 %v2976, 12
      %v3065 = vpop.permute.xlu0 %3064
      %3066 = vrot.lane.b32.xlu0 %v2977, 12
      %v3067 = vpop.permute.xlu0 %3066
      %3068 = vrot.lane.b32.xlu0 %v2978, 12
      %v3069 = vpop.permute.xlu0 %3068
      %3070 = vrot.lane.b32.xlu0 %v2979, 12
      %v3071 = vpop.permute.xlu0 %3070
      %3072 = vrot.lane.b32.xlu0 %v2980, 12
      %v3073 = vpop.permute.xlu0 %3072
      %3074 = vrot.lane.b32.xlu0 %v2981, 12
      %v3075 = vpop.permute.xlu0 %3074
      %3076 = vrot.lane.b32.xlu0 %v2982, 12
      %v3077 = vpop.permute.xlu0 %3076
      %3078 = vrot.lane.b32.xlu0 %v2983, 12
      %v3079 = vpop.permute.xlu0 %3078
      %3112 = vst.msk [vmem:[#allocation3] sm:$0xff] %vm1000, %v3017
      %3113 = vst.msk [vmem:[#allocation3 + $0x8] sm:$0xff] %vm1000, %v3019
      %3114 = vst.msk [vmem:[#allocation3 + $0x10] sm:$0xff] %vm1000, %v3021
      %3115 = vst.msk [vmem:[#allocation3 + $0x18] sm:$0xff] %vm1000, %v3023
      %3116 = vst.msk [vmem:[#allocation3 + $0x20] sm:$0xff] %vm1000, %v3025
      %3117 = vst.msk [vmem:[#allocation3 + $0x28] sm:$0xff] %vm1000, %v3027
      %3118 = vst.msk [vmem:[#allocation3 + $0x30] sm:$0xff] %vm1000, %v3029
      %3119 = vst.msk [vmem:[#allocation3 + $0x38] sm:$0xff] %vm1000, %v3031
      %3120 = vst.msk [vmem:[#allocation3 + $0x40] sm:$0xff] %vm1000, %v3033
      %3121 = vst.msk [vmem:[#allocation3 + $0x48] sm:$0xff] %vm1000, %v3035
      %3122 = vst.msk [vmem:[#allocation3 + $0x50] sm:$0xff] %vm1000, %v3037
      %3123 = vst.msk [vmem:[#allocation3 + $0x58] sm:$0xff] %vm1000, %v3039
      %3124 = vst.msk [vmem:[#allocation3 + $0x60] sm:$0xff] %vm1000, %v3041
      %3125 = vst.msk [vmem:[#allocation3 + $0x68] sm:$0xff] %vm1000, %v3043
      %3126 = vst.msk [vmem:[#allocation3 + $0x70] sm:$0xff] %vm1000, %v3045
      %3127 = vst.msk [vmem:[#allocation3 + $0x78] sm:$0xff] %vm1000, %v3047
      %3128 = vst.msk [vmem:[#allocation3 + $0x80] sm:$0xff] %vm1000, %v3049
      %3129 = vst.msk [vmem:[#allocation3 + $0x88] sm:$0xff] %vm1000, %v3051
      %3130 = vst.msk [vmem:[#allocation3 + $0x90] sm:$0xff] %vm1000, %v3053
      %3131 = vst.msk [vmem:[#allocation3 + $0x98] sm:$0xff] %vm1000, %v3055
      %3132 = vst.msk [vmem:[#allocation3 + $0xa0] sm:$0xff] %vm1000, %v3057
      %3133 = vst.msk [vmem:[#allocation3 + $0xa8] sm:$0xff] %vm1000, %v3059
      %3134 = vst.msk [vmem:[#allocation3 + $0xb0] sm:$0xff] %vm1000, %v3061
      %3135 = vst.msk [vmem:[#allocation3 + $0xb8] sm:$0xff] %vm1000, %v3063
      %3136 = vst.msk [vmem:[#allocation3 + $0xc0] sm:$0xff] %vm1000, %v3065
      %3137 = vst.msk [vmem:[#allocation3 + $0xc8] sm:$0xff] %vm1000, %v3067
      %3138 = vst.msk [vmem:[#allocation3 + $0xd0] sm:$0xff] %vm1000, %v3069
      %3139 = vst.msk [vmem:[#allocation3 + $0xd8] sm:$0xff] %vm1000, %v3071
      %3140 = vst.msk [vmem:[#allocation3 + $0xe0] sm:$0xff] %vm1000, %v3073
      %3141 = vst.msk [vmem:[#allocation3 + $0xe8] sm:$0xff] %vm1000, %v3075
      %3142 = vst.msk [vmem:[#allocation3 + $0xf0] sm:$0xff] %vm1000, %v3077
      %3143 = vst.msk [vmem:[#allocation3 + $0xf8] sm:$0xff] %vm1000, %v3079
      %v3144 = vld [vmem:[%s357 + $0x1] sm:$0xff]
      %v3145 = vld [vmem:[%s357 + $0x9] sm:$0xff]
      %v3146 = vld [vmem:[%s357 + $0x19] sm:$0xff]
      %v3147 = vld [vmem:[%s357 + $0x21] sm:$0xff]
      %v3148 = vld [vmem:[%s357 + $0x31] sm:$0xff]
      %v3149 = vld [vmem:[%s357 + $0x39] sm:$0xff]
      %v3150 = vld [vmem:[%s357 + $0x49] sm:$0xff]
      %v3151 = vld [vmem:[%s357 + $0x51] sm:$0xff]
      %v3152 = vld [vmem:[%s357 + $0x61] sm:$0xff]
      %v3153 = vld [vmem:[%s357 + $0x69] sm:$0xff]
      %v3154 = vld [vmem:[%s357 + $0x79] sm:$0xff]
      %v3155 = vld [vmem:[%s357 + $0x81] sm:$0xff]
      %v3156 = vld [vmem:[%s357 + $0x91] sm:$0xff]
      %v3157 = vld [vmem:[%s357 + $0x99] sm:$0xff]
      %v3158 = vld [vmem:[%s357 + $0xa9] sm:$0xff]
      %v3159 = vld [vmem:[%s357 + $0xb1] sm:$0xff]
      %v3160 = vld [vmem:[%s357 + $0xc1] sm:$0xff]
      %v3161 = vld [vmem:[%s357 + $0xc9] sm:$0xff]
      %v3162 = vld [vmem:[%s357 + $0xd9] sm:$0xff]
      %v3163 = vld [vmem:[%s357 + $0xe1] sm:$0xff]
      %v3164 = vld [vmem:[%s357 + $0xf1] sm:$0xff]
      %v3165 = vld [vmem:[%s357 + $0xf9] sm:$0xff]
      %v3166 = vld [vmem:[%s357 + $0x109] sm:$0xff]
      %v3167 = vld [vmem:[%s357 + $0x111] sm:$0xff]
      %v3168 = vld [vmem:[%s357 + $0x121] sm:$0xff]
      %v3169 = vld [vmem:[%s357 + $0x129] sm:$0xff]
      %v3170 = vld [vmem:[%s357 + $0x139] sm:$0xff]
      %v3171 = vld [vmem:[%s357 + $0x141] sm:$0xff]
      %v3172 = vld [vmem:[%s357 + $0x151] sm:$0xff]
      %v3173 = vld [vmem:[%s357 + $0x159] sm:$0xff]
      %v3174 = vld [vmem:[%s357 + $0x169] sm:$0xff]
      %v3175 = vld [vmem:[%s357 + $0x171] sm:$0xff]
      %3208 = vrot.lane.b32.xlu0 %v3144, 16
      %v3209 = vpop.permute.xlu0 %3208
      %3210 = vrot.lane.b32.xlu0 %v3145, 16
      %v3211 = vpop.permute.xlu0 %3210
      %3212 = vrot.lane.b32.xlu0 %v3146, 16
      %v3213 = vpop.permute.xlu0 %3212
      %3214 = vrot.lane.b32.xlu0 %v3147, 16
      %v3215 = vpop.permute.xlu0 %3214
      %3216 = vrot.lane.b32.xlu0 %v3148, 16
      %v3217 = vpop.permute.xlu0 %3216
      %3218 = vrot.lane.b32.xlu0 %v3149, 16
      %v3219 = vpop.permute.xlu0 %3218
      %3220 = vrot.lane.b32.xlu0 %v3150, 16
      %v3221 = vpop.permute.xlu0 %3220
      %3222 = vrot.lane.b32.xlu0 %v3151, 16
      %v3223 = vpop.permute.xlu0 %3222
      %3224 = vrot.lane.b32.xlu0 %v3152, 16
      %v3225 = vpop.permute.xlu0 %3224
      %3226 = vrot.lane.b32.xlu0 %v3153, 16
      %v3227 = vpop.permute.xlu0 %3226
      %3228 = vrot.lane.b32.xlu0 %v3154, 16
      %v3229 = vpop.permute.xlu0 %3228
      %3230 = vrot.lane.b32.xlu0 %v3155, 16
      %v3231 = vpop.permute.xlu0 %3230
      %3232 = vrot.lane.b32.xlu0 %v3156, 16
      %v3233 = vpop.permute.xlu0 %3232
      %3234 = vrot.lane.b32.xlu0 %v3157, 16
      %v3235 = vpop.permute.xlu0 %3234
      %3236 = vrot.lane.b32.xlu0 %v3158, 16
      %v3237 = vpop.permute.xlu0 %3236
      %3238 = vrot.lane.b32.xlu0 %v3159, 16
      %v3239 = vpop.permute.xlu0 %3238
      %3240 = vrot.lane.b32.xlu0 %v3160, 16
      %v3241 = vpop.permute.xlu0 %3240
      %3242 = vrot.lane.b32.xlu0 %v3161, 16
      %v3243 = vpop.permute.xlu0 %3242
      %3244 = vrot.lane.b32.xlu0 %v3162, 16
      %v3245 = vpop.permute.xlu0 %3244
      %3246 = vrot.lane.b32.xlu0 %v3163, 16
      %v3247 = vpop.permute.xlu0 %3246
      %3248 = vrot.lane.b32.xlu0 %v3164, 16
      %v3249 = vpop.permute.xlu0 %3248
      %3250 = vrot.lane.b32.xlu0 %v3165, 16
      %v3251 = vpop.permute.xlu0 %3250
      %3252 = vrot.lane.b32.xlu0 %v3166, 16
      %v3253 = vpop.permute.xlu0 %3252
      %3254 = vrot.lane.b32.xlu0 %v3167, 16
      %v3255 = vpop.permute.xlu0 %3254
      %3256 = vrot.lane.b32.xlu0 %v3168, 16
      %v3257 = vpop.permute.xlu0 %3256
      %3258 = vrot.lane.b32.xlu0 %v3169, 16
      %v3259 = vpop.permute.xlu0 %3258
      %3260 = vrot.lane.b32.xlu0 %v3170, 16
      %v3261 = vpop.permute.xlu0 %3260
      %3262 = vrot.lane.b32.xlu0 %v3171, 16
      %v3263 = vpop.permute.xlu0 %3262
      %3264 = vrot.lane.b32.xlu0 %v3172, 16
      %v3265 = vpop.permute.xlu0 %3264
      %3266 = vrot.lane.b32.xlu0 %v3173, 16
      %v3267 = vpop.permute.xlu0 %3266
      %3268 = vrot.lane.b32.xlu0 %v3174, 16
      %v3269 = vpop.permute.xlu0 %3268
      %3270 = vrot.lane.b32.xlu0 %v3175, 16
      %v3271 = vpop.permute.xlu0 %3270
      %3304 = vst.msk [vmem:[#allocation3] sm:$0xff] %vm1193, %v3209
      %3305 = vst.msk [vmem:[#allocation3 + $0x8] sm:$0xff] %vm1193, %v3211
      %3306 = vst.msk [vmem:[#allocation3 + $0x10] sm:$0xff] %vm1193, %v3213
      %3307 = vst.msk [vmem:[#allocation3 + $0x18] sm:$0xff] %vm1193, %v3215
      %3308 = vst.msk [vmem:[#allocation3 + $0x20] sm:$0xff] %vm1193, %v3217
      %3309 = vst.msk [vmem:[#allocation3 + $0x28] sm:$0xff] %vm1193, %v3219
      %3310 = vst.msk [vmem:[#allocation3 + $0x30] sm:$0xff] %vm1193, %v3221
      %3311 = vst.msk [vmem:[#allocation3 + $0x38] sm:$0xff] %vm1193, %v3223
      %3312 = vst.msk [vmem:[#allocation3 + $0x40] sm:$0xff] %vm1193, %v3225
      %3313 = vst.msk [vmem:[#allocation3 + $0x48] sm:$0xff] %vm1193, %v3227
      %3314 = vst.msk [vmem:[#allocation3 + $0x50] sm:$0xff] %vm1193, %v3229
      %3315 = vst.msk [vmem:[#allocation3 + $0x58] sm:$0xff] %vm1193, %v3231
      %3316 = vst.msk [vmem:[#allocation3 + $0x60] sm:$0xff] %vm1193, %v3233
      %3317 = vst.msk [vmem:[#allocation3 + $0x68] sm:$0xff] %vm1193, %v3235
      %3318 = vst.msk [vmem:[#allocation3 + $0x70] sm:$0xff] %vm1193, %v3237
      %3319 = vst.msk [vmem:[#allocation3 + $0x78] sm:$0xff] %vm1193, %v3239
      %3320 = vst.msk [vmem:[#allocation3 + $0x80] sm:$0xff] %vm1193, %v3241
      %3321 = vst.msk [vmem:[#allocation3 + $0x88] sm:$0xff] %vm1193, %v3243
      %3322 = vst.msk [vmem:[#allocation3 + $0x90] sm:$0xff] %vm1193, %v3245
      %3323 = vst.msk [vmem:[#allocation3 + $0x98] sm:$0xff] %vm1193, %v3247
      %3324 = vst.msk [vmem:[#allocation3 + $0xa0] sm:$0xff] %vm1193, %v3249
      %3325 = vst.msk [vmem:[#allocation3 + $0xa8] sm:$0xff] %vm1193, %v3251
      %3326 = vst.msk [vmem:[#allocation3 + $0xb0] sm:$0xff] %vm1193, %v3253
      %3327 = vst.msk [vmem:[#allocation3 + $0xb8] sm:$0xff] %vm1193, %v3255
      %3328 = vst.msk [vmem:[#allocation3 + $0xc0] sm:$0xff] %vm1193, %v3257
      %3329 = vst.msk [vmem:[#allocation3 + $0xc8] sm:$0xff] %vm1193, %v3259
      %3330 = vst.msk [vmem:[#allocation3 + $0xd0] sm:$0xff] %vm1193, %v3261
      %3331 = vst.msk [vmem:[#allocation3 + $0xd8] sm:$0xff] %vm1193, %v3263
      %3332 = vst.msk [vmem:[#allocation3 + $0xe0] sm:$0xff] %vm1193, %v3265
      %3333 = vst.msk [vmem:[#allocation3 + $0xe8] sm:$0xff] %vm1193, %v3267
      %3334 = vst.msk [vmem:[#allocation3 + $0xf0] sm:$0xff] %vm1193, %v3269
      %3335 = vst.msk [vmem:[#allocation3 + $0xf8] sm:$0xff] %vm1193, %v3271
      %v3336 = vld [vmem:[%s357 + $0x2] sm:$0xff]
      %v3337 = vld [vmem:[%s357 + $0xa] sm:$0xff]
      %v3338 = vld [vmem:[%s357 + $0x1a] sm:$0xff]
      %v3339 = vld [vmem:[%s357 + $0x22] sm:$0xff]
      %v3340 = vld [vmem:[%s357 + $0x32] sm:$0xff]
      %v3341 = vld [vmem:[%s357 + $0x3a] sm:$0xff]
      %v3342 = vld [vmem:[%s357 + $0x4a] sm:$0xff]
      %v3343 = vld [vmem:[%s357 + $0x52] sm:$0xff]
      %v3344 = vld [vmem:[%s357 + $0x62] sm:$0xff]
      %v3345 = vld [vmem:[%s357 + $0x6a] sm:$0xff]
      %v3346 = vld [vmem:[%s357 + $0x7a] sm:$0xff]
      %v3347 = vld [vmem:[%s357 + $0x82] sm:$0xff]
      %v3348 = vld [vmem:[%s357 + $0x92] sm:$0xff]
      %v3349 = vld [vmem:[%s357 + $0x9a] sm:$0xff]
      %v3350 = vld [vmem:[%s357 + $0xaa] sm:$0xff]
      %v3351 = vld [vmem:[%s357 + $0xb2] sm:$0xff]
      %v3352 = vld [vmem:[%s357 + $0xc2] sm:$0xff]
      %v3353 = vld [vmem:[%s357 + $0xca] sm:$0xff]
      %v3354 = vld [vmem:[%s357 + $0xda] sm:$0xff]
      %v3355 = vld [vmem:[%s357 + $0xe2] sm:$0xff]
      %v3356 = vld [vmem:[%s357 + $0xf2] sm:$0xff]
      %v3357 = vld [vmem:[%s357 + $0xfa] sm:$0xff]
      %v3358 = vld [vmem:[%s357 + $0x10a] sm:$0xff]
      %v3359 = vld [vmem:[%s357 + $0x112] sm:$0xff]
      %v3360 = vld [vmem:[%s357 + $0x122] sm:$0xff]
      %v3361 = vld [vmem:[%s357 + $0x12a] sm:$0xff]
      %v3362 = vld [vmem:[%s357 + $0x13a] sm:$0xff]
      %v3363 = vld [vmem:[%s357 + $0x142] sm:$0xff]
      %v3364 = vld [vmem:[%s357 + $0x152] sm:$0xff]
      %v3365 = vld [vmem:[%s357 + $0x15a] sm:$0xff]
      %v3366 = vld [vmem:[%s357 + $0x16a] sm:$0xff]
      %v3367 = vld [vmem:[%s357 + $0x172] sm:$0xff]
      %3400 = vrot.lane.b32.xlu0 %v3336, 20
      %v3401 = vpop.permute.xlu0 %3400
      %3402 = vrot.lane.b32.xlu0 %v3337, 20
      %v3403 = vpop.permute.xlu0 %3402
      %3404 = vrot.lane.b32.xlu0 %v3338, 20
      %v3405 = vpop.permute.xlu0 %3404
      %3406 = vrot.lane.b32.xlu0 %v3339, 20
      %v3407 = vpop.permute.xlu0 %3406
      %3408 = vrot.lane.b32.xlu0 %v3340, 20
      %v3409 = vpop.permute.xlu0 %3408
      %3410 = vrot.lane.b32.xlu0 %v3341, 20
      %v3411 = vpop.permute.xlu0 %3410
      %3412 = vrot.lane.b32.xlu0 %v3342, 20
      %v3413 = vpop.permute.xlu0 %3412
      %3414 = vrot.lane.b32.xlu0 %v3343, 20
      %v3415 = vpop.permute.xlu0 %3414
      %3416 = vrot.lane.b32.xlu0 %v3344, 20
      %v3417 = vpop.permute.xlu0 %3416
      %3418 = vrot.lane.b32.xlu0 %v3345, 20
      %v3419 = vpop.permute.xlu0 %3418
      %3420 = vrot.lane.b32.xlu0 %v3346, 20
      %v3421 = vpop.permute.xlu0 %3420
      %3422 = vrot.lane.b32.xlu0 %v3347, 20
      %v3423 = vpop.permute.xlu0 %3422
      %3424 = vrot.lane.b32.xlu0 %v3348, 20
      %v3425 = vpop.permute.xlu0 %3424
      %3426 = vrot.lane.b32.xlu0 %v3349, 20
      %v3427 = vpop.permute.xlu0 %3426
      %3428 = vrot.lane.b32.xlu0 %v3350, 20
      %v3429 = vpop.permute.xlu0 %3428
      %3430 = vrot.lane.b32.xlu0 %v3351, 20
      %v3431 = vpop.permute.xlu0 %3430
      %3432 = vrot.lane.b32.xlu0 %v3352, 20
      %v3433 = vpop.permute.xlu0 %3432
      %3434 = vrot.lane.b32.xlu0 %v3353, 20
      %v3435 = vpop.permute.xlu0 %3434
      %3436 = vrot.lane.b32.xlu0 %v3354, 20
      %v3437 = vpop.permute.xlu0 %3436
      %3438 = vrot.lane.b32.xlu0 %v3355, 20
      %v3439 = vpop.permute.xlu0 %3438
      %3440 = vrot.lane.b32.xlu0 %v3356, 20
      %v3441 = vpop.permute.xlu0 %3440
      %3442 = vrot.lane.b32.xlu0 %v3357, 20
      %v3443 = vpop.permute.xlu0 %3442
      %3444 = vrot.lane.b32.xlu0 %v3358, 20
      %v3445 = vpop.permute.xlu0 %3444
      %3446 = vrot.lane.b32.xlu0 %v3359, 20
      %v3447 = vpop.permute.xlu0 %3446
      %3448 = vrot.lane.b32.xlu0 %v3360, 20
      %v3449 = vpop.permute.xlu0 %3448
      %3450 = vrot.lane.b32.xlu0 %v3361, 20
      %v3451 = vpop.permute.xlu0 %3450
      %3452 = vrot.lane.b32.xlu0 %v3362, 20
      %v3453 = vpop.permute.xlu0 %3452
      %3454 = vrot.lane.b32.xlu0 %v3363, 20
      %v3455 = vpop.permute.xlu0 %3454
      %3456 = vrot.lane.b32.xlu0 %v3364, 20
      %v3457 = vpop.permute.xlu0 %3456
      %3458 = vrot.lane.b32.xlu0 %v3365, 20
      %v3459 = vpop.permute.xlu0 %3458
      %3460 = vrot.lane.b32.xlu0 %v3366, 20
      %v3461 = vpop.permute.xlu0 %3460
      %3462 = vrot.lane.b32.xlu0 %v3367, 20
      %v3463 = vpop.permute.xlu0 %3462
      %3496 = vst.msk [vmem:[#allocation3] sm:$0xff] %vm1386, %v3401
      %3497 = vst.msk [vmem:[#allocation3 + $0x8] sm:$0xff] %vm1386, %v3403
      %3498 = vst.msk [vmem:[#allocation3 + $0x10] sm:$0xff] %vm1386, %v3405
      %3499 = vst.msk [vmem:[#allocation3 + $0x18] sm:$0xff] %vm1386, %v3407
      %3500 = vst.msk [vmem:[#allocation3 + $0x20] sm:$0xff] %vm1386, %v3409
      %3501 = vst.msk [vmem:[#allocation3 + $0x28] sm:$0xff] %vm1386, %v3411
      %3502 = vst.msk [vmem:[#allocation3 + $0x30] sm:$0xff] %vm1386, %v3413
      %3503 = vst.msk [vmem:[#allocation3 + $0x38] sm:$0xff] %vm1386, %v3415
      %3504 = vst.msk [vmem:[#allocation3 + $0x40] sm:$0xff] %vm1386, %v3417
      %3505 = vst.msk [vmem:[#allocation3 + $0x48] sm:$0xff] %vm1386, %v3419
      %3506 = vst.msk [vmem:[#allocation3 + $0x50] sm:$0xff] %vm1386, %v3421
      %3507 = vst.msk [vmem:[#allocation3 + $0x58] sm:$0xff] %vm1386, %v3423
      %3508 = vst.msk [vmem:[#allocation3 + $0x60] sm:$0xff] %vm1386, %v3425
      %3509 = vst.msk [vmem:[#allocation3 + $0x68] sm:$0xff] %vm1386, %v3427
      %3510 = vst.msk [vmem:[#allocation3 + $0x70] sm:$0xff] %vm1386, %v3429
      %3511 = vst.msk [vmem:[#allocation3 + $0x78] sm:$0xff] %vm1386, %v3431
      %3512 = vst.msk [vmem:[#allocation3 + $0x80] sm:$0xff] %vm1386, %v3433
      %3513 = vst.msk [vmem:[#allocation3 + $0x88] sm:$0xff] %vm1386, %v3435
      %3514 = vst.msk [vmem:[#allocation3 + $0x90] sm:$0xff] %vm1386, %v3437
      %3515 = vst.msk [vmem:[#allocation3 + $0x98] sm:$0xff] %vm1386, %v3439
      %3516 = vst.msk [vmem:[#allocation3 + $0xa0] sm:$0xff] %vm1386, %v3441
      %3517 = vst.msk [vmem:[#allocation3 + $0xa8] sm:$0xff] %vm1386, %v3443
      %3518 = vst.msk [vmem:[#allocation3 + $0xb0] sm:$0xff] %vm1386, %v3445
      %3519 = vst.msk [vmem:[#allocation3 + $0xb8] sm:$0xff] %vm1386, %v3447
      %3520 = vst.msk [vmem:[#allocation3 + $0xc0] sm:$0xff] %vm1386, %v3449
      %3521 = vst.msk [vmem:[#allocation3 + $0xc8] sm:$0xff] %vm1386, %v3451
      %3522 = vst.msk [vmem:[#allocation3 + $0xd0] sm:$0xff] %vm1386, %v3453
      %3523 = vst.msk [vmem:[#allocation3 + $0xd8] sm:$0xff] %vm1386, %v3455
      %3524 = vst.msk [vmem:[#allocation3 + $0xe0] sm:$0xff] %vm1386, %v3457
      %3525 = vst.msk [vmem:[#allocation3 + $0xe8] sm:$0xff] %vm1386, %v3459
      %3526 = vst.msk [vmem:[#allocation3 + $0xf0] sm:$0xff] %vm1386, %v3461
      %3527 = vst.msk [vmem:[#allocation3 + $0xf8] sm:$0xff] %vm1386, %v3463
      %v3528 = vld [vmem:[%s1419] sm:$0xff]
      %v3529 = vld [vmem:[%s1419 + $0x8] sm:$0xff]
      %v3530 = vld [vmem:[%s1419 + $0x18] sm:$0xff]
      %v3531 = vld [vmem:[%s1419 + $0x20] sm:$0xff]
      %v3532 = vld [vmem:[%s1419 + $0x30] sm:$0xff]
      %v3533 = vld [vmem:[%s1419 + $0x38] sm:$0xff]
      %v3534 = vld [vmem:[%s1419 + $0x48] sm:$0xff]
      %v3535 = vld [vmem:[%s1419 + $0x50] sm:$0xff]
      %v3536 = vld [vmem:[%s1419 + $0x60] sm:$0xff]
      %v3537 = vld [vmem:[%s1419 + $0x68] sm:$0xff]
      %v3538 = vld [vmem:[%s1419 + $0x78] sm:$0xff]
      %v3539 = vld [vmem:[%s1419 + $0x80] sm:$0xff]
      %v3540 = vld [vmem:[%s1419 + $0x90] sm:$0xff]
      %v3541 = vld [vmem:[%s1419 + $0x98] sm:$0xff]
      %v3542 = vld [vmem:[%s1419 + $0xa8] sm:$0xff]
      %v3543 = vld [vmem:[%s1419 + $0xb0] sm:$0xff]
      %v3544 = vld [vmem:[%s1419 + $0xc0] sm:$0xff]
      %v3545 = vld [vmem:[%s1419 + $0xc8] sm:$0xff]
      %v3546 = vld [vmem:[%s1419 + $0xd8] sm:$0xff]
      %v3547 = vld [vmem:[%s1419 + $0xe0] sm:$0xff]
      %v3548 = vld [vmem:[%s1419 + $0xf0] sm:$0xff]
      %v3549 = vld [vmem:[%s1419 + $0xf8] sm:$0xff]
      %v3550 = vld [vmem:[%s1419 + $0x108] sm:$0xff]
      %v3551 = vld [vmem:[%s1419 + $0x110] sm:$0xff]
      %v3552 = vld [vmem:[%s1419 + $0x120] sm:$0xff]
      %v3553 = vld [vmem:[%s1419 + $0x128] sm:$0xff]
      %v3554 = vld [vmem:[%s1419 + $0x138] sm:$0xff]
      %v3555 = vld [vmem:[%s1419 + $0x140] sm:$0xff]
      %v3556 = vld [vmem:[%s1419 + $0x150] sm:$0xff]
      %v3557 = vld [vmem:[%s1419 + $0x158] sm:$0xff]
      %v3558 = vld [vmem:[%s1419 + $0x168] sm:$0xff]
      %v3559 = vld [vmem:[%s1419 + $0x170] sm:$0xff]
      %3592 = vrot.lane.b32.xlu0 %v3528, 24
      %v3593 = vpop.permute.xlu0 %3592
      %3594 = vrot.lane.b32.xlu0 %v3529, 24
      %v3595 = vpop.permute.xlu0 %3594
      %3596 = vrot.lane.b32.xlu0 %v3530, 24
      %v3597 = vpop.permute.xlu0 %3596
      %3598 = vrot.lane.b32.xlu0 %v3531, 24
      %v3599 = vpop.permute.xlu0 %3598
      %3600 = vrot.lane.b32.xlu0 %v3532, 24
      %v3601 = vpop.permute.xlu0 %3600
      %3602 = vrot.lane.b32.xlu0 %v3533, 24
      %v3603 = vpop.permute.xlu0 %3602
      %3604 = vrot.lane.b32.xlu0 %v3534, 24
      %v3605 = vpop.permute.xlu0 %3604
      %3606 = vrot.lane.b32.xlu0 %v3535, 24
      %v3607 = vpop.permute.xlu0 %3606
      %3608 = vrot.lane.b32.xlu0 %v3536, 24
      %v3609 = vpop.permute.xlu0 %3608
      %3610 = vrot.lane.b32.xlu0 %v3537, 24
      %v3611 = vpop.permute.xlu0 %3610
      %3612 = vrot.lane.b32.xlu0 %v3538, 24
      %v3613 = vpop.permute.xlu0 %3612
      %3614 = vrot.lane.b32.xlu0 %v3539, 24
      %v3615 = vpop.permute.xlu0 %3614
      %3616 = vrot.lane.b32.xlu0 %v3540, 24
      %v3617 = vpop.permute.xlu0 %3616
      %3618 = vrot.lane.b32.xlu0 %v3541, 24
      %v3619 = vpop.permute.xlu0 %3618
      %3620 = vrot.lane.b32.xlu0 %v3542, 24
      %v3621 = vpop.permute.xlu0 %3620
      %3622 = vrot.lane.b32.xlu0 %v3543, 24
      %v3623 = vpop.permute.xlu0 %3622
      %3624 = vrot.lane.b32.xlu0 %v3544, 24
      %v3625 = vpop.permute.xlu0 %3624
      %3626 = vrot.lane.b32.xlu0 %v3545, 24
      %v3627 = vpop.permute.xlu0 %3626
      %3628 = vrot.lane.b32.xlu0 %v3546, 24
      %v3629 = vpop.permute.xlu0 %3628
      %3630 = vrot.lane.b32.xlu0 %v3547, 24
      %v3631 = vpop.permute.xlu0 %3630
      %3632 = vrot.lane.b32.xlu0 %v3548, 24
      %v3633 = vpop.permute.xlu0 %3632
      %3634 = vrot.lane.b32.xlu0 %v3549, 24
      %v3635 = vpop.permute.xlu0 %3634
      %3636 = vrot.lane.b32.xlu0 %v3550, 24
      %v3637 = vpop.permute.xlu0 %3636
      %3638 = vrot.lane.b32.xlu0 %v3551, 24
      %v3639 = vpop.permute.xlu0 %3638
      %3640 = vrot.lane.b32.xlu0 %v3552, 24
      %v3641 = vpop.permute.xlu0 %3640
      %3642 = vrot.lane.b32.xlu0 %v3553, 24
      %v3643 = vpop.permute.xlu0 %3642
      %3644 = vrot.lane.b32.xlu0 %v3554, 24
      %v3645 = vpop.permute.xlu0 %3644
      %3646 = vrot.lane.b32.xlu0 %v3555, 24
      %v3647 = vpop.permute.xlu0 %3646
      %3648 = vrot.lane.b32.xlu0 %v3556, 24
      %v3649 = vpop.permute.xlu0 %3648
      %3650 = vrot.lane.b32.xlu0 %v3557, 24
      %v3651 = vpop.permute.xlu0 %3650
      %3652 = vrot.lane.b32.xlu0 %v3558, 24
      %v3653 = vpop.permute.xlu0 %3652
      %3654 = vrot.lane.b32.xlu0 %v3559, 24
      %v3655 = vpop.permute.xlu0 %3654
      %3688 = vst.msk [vmem:[#allocation3] sm:$0xff] %vm1580, %v3593
      %3689 = vst.msk [vmem:[#allocation3 + $0x8] sm:$0xff] %vm1580, %v3595
      %3690 = vst.msk [vmem:[#allocation3 + $0x10] sm:$0xff] %vm1580, %v3597
      %3691 = vst.msk [vmem:[#allocation3 + $0x18] sm:$0xff] %vm1580, %v3599
      %3692 = vst.msk [vmem:[#allocation3 + $0x20] sm:$0xff] %vm1580, %v3601
      %3693 = vst.msk [vmem:[#allocation3 + $0x28] sm:$0xff] %vm1580, %v3603
      %3694 = vst.msk [vmem:[#allocation3 + $0x30] sm:$0xff] %vm1580, %v3605
      %3695 = vst.msk [vmem:[#allocation3 + $0x38] sm:$0xff] %vm1580, %v3607
      %3696 = vst.msk [vmem:[#allocation3 + $0x40] sm:$0xff] %vm1580, %v3609
      %3697 = vst.msk [vmem:[#allocation3 + $0x48] sm:$0xff] %vm1580, %v3611
      %3698 = vst.msk [vmem:[#allocation3 + $0x50] sm:$0xff] %vm1580, %v3613
      %3699 = vst.msk [vmem:[#allocation3 + $0x58] sm:$0xff] %vm1580, %v3615
      %3700 = vst.msk [vmem:[#allocation3 + $0x60] sm:$0xff] %vm1580, %v3617
      %3701 = vst.msk [vmem:[#allocation3 + $0x68] sm:$0xff] %vm1580, %v3619
      %3702 = vst.msk [vmem:[#allocation3 + $0x70] sm:$0xff] %vm1580, %v3621
      %3703 = vst.msk [vmem:[#allocation3 + $0x78] sm:$0xff] %vm1580, %v3623
      %3704 = vst.msk [vmem:[#allocation3 + $0x80] sm:$0xff] %vm1580, %v3625
      %3705 = vst.msk [vmem:[#allocation3 + $0x88] sm:$0xff] %vm1580, %v3627
      %3706 = vst.msk [vmem:[#allocation3 + $0x90] sm:$0xff] %vm1580, %v3629
      %3707 = vst.msk [vmem:[#allocation3 + $0x98] sm:$0xff] %vm1580, %v3631
      %3708 = vst.msk [vmem:[#allocation3 + $0xa0] sm:$0xff] %vm1580, %v3633
      %3709 = vst.msk [vmem:[#allocation3 + $0xa8] sm:$0xff] %vm1580, %v3635
      %3710 = vst.msk [vmem:[#allocation3 + $0xb0] sm:$0xff] %vm1580, %v3637
      %3711 = vst.msk [vmem:[#allocation3 + $0xb8] sm:$0xff] %vm1580, %v3639
      %3712 = vst.msk [vmem:[#allocation3 + $0xc0] sm:$0xff] %vm1580, %v3641
      %3713 = vst.msk [vmem:[#allocation3 + $0xc8] sm:$0xff] %vm1580, %v3643
      %3714 = vst.msk [vmem:[#allocation3 + $0xd0] sm:$0xff] %vm1580, %v3645
      %3715 = vst.msk [vmem:[#allocation3 + $0xd8] sm:$0xff] %vm1580, %v3647
      %3716 = vst.msk [vmem:[#allocation3 + $0xe0] sm:$0xff] %vm1580, %v3649
      %3717 = vst.msk [vmem:[#allocation3 + $0xe8] sm:$0xff] %vm1580, %v3651
      %3718 = vst.msk [vmem:[#allocation3 + $0xf0] sm:$0xff] %vm1580, %v3653
      %3719 = vst.msk [vmem:[#allocation3 + $0xf8] sm:$0xff] %vm1580, %v3655
      %v3720 = vld [vmem:[%s1419 + $0x1] sm:$0xff]
      %v3721 = vld [vmem:[%s1419 + $0x9] sm:$0xff]
      %v3722 = vld [vmem:[%s1419 + $0x19] sm:$0xff]
      %v3723 = vld [vmem:[%s1419 + $0x21] sm:$0xff]
      %v3724 = vld [vmem:[%s1419 + $0x31] sm:$0xff]
      %v3725 = vld [vmem:[%s1419 + $0x39] sm:$0xff]
      %v3726 = vld [vmem:[%s1419 + $0x49] sm:$0xff]
      %v3727 = vld [vmem:[%s1419 + $0x51] sm:$0xff]
      %v3728 = vld [vmem:[%s1419 + $0x61] sm:$0xff]
      %v3729 = vld [vmem:[%s1419 + $0x69] sm:$0xff]
      %v3730 = vld [vmem:[%s1419 + $0x79] sm:$0xff]
      %v3731 = vld [vmem:[%s1419 + $0x81] sm:$0xff]
      %v3732 = vld [vmem:[%s1419 + $0x91] sm:$0xff]
      %v3733 = vld [vmem:[%s1419 + $0x99] sm:$0xff]
      %v3734 = vld [vmem:[%s1419 + $0xa9] sm:$0xff]
      %v3735 = vld [vmem:[%s1419 + $0xb1] sm:$0xff]
      %v3736 = vld [vmem:[%s1419 + $0xc1] sm:$0xff]
      %v3737 = vld [vmem:[%s1419 + $0xc9] sm:$0xff]
      %v3738 = vld [vmem:[%s1419 + $0xd9] sm:$0xff]
      %v3739 = vld [vmem:[%s1419 + $0xe1] sm:$0xff]
      %v3740 = vld [vmem:[%s1419 + $0xf1] sm:$0xff]
      %v3741 = vld [vmem:[%s1419 + $0xf9] sm:$0xff]
      %v3742 = vld [vmem:[%s1419 + $0x109] sm:$0xff]
      %v3743 = vld [vmem:[%s1419 + $0x111] sm:$0xff]
      %v3744 = vld [vmem:[%s1419 + $0x121] sm:$0xff]
      %v3745 = vld [vmem:[%s1419 + $0x129] sm:$0xff]
      %v3746 = vld [vmem:[%s1419 + $0x139] sm:$0xff]
      %v3747 = vld [vmem:[%s1419 + $0x141] sm:$0xff]
      %v3748 = vld [vmem:[%s1419 + $0x151] sm:$0xff]
      %v3749 = vld [vmem:[%s1419 + $0x159] sm:$0xff]
      %v3750 = vld [vmem:[%s1419 + $0x169] sm:$0xff]
      %v3751 = vld [vmem:[%s1419 + $0x171] sm:$0xff]
      %3784 = vrot.lane.b32.xlu0 %v3720, 28
      %v3785 = vpop.permute.xlu0 %3784
      %3786 = vrot.lane.b32.xlu0 %v3721, 28
      %v3787 = vpop.permute.xlu0 %3786
      %3788 = vrot.lane.b32.xlu0 %v3722, 28
      %v3789 = vpop.permute.xlu0 %3788
      %3790 = vrot.lane.b32.xlu0 %v3723, 28
      %v3791 = vpop.permute.xlu0 %3790
      %3792 = vrot.lane.b32.xlu0 %v3724, 28
      %v3793 = vpop.permute.xlu0 %3792
      %3794 = vrot.lane.b32.xlu0 %v3725, 28
      %v3795 = vpop.permute.xlu0 %3794
      %3796 = vrot.lane.b32.xlu0 %v3726, 28
      %v3797 = vpop.permute.xlu0 %3796
      %3798 = vrot.lane.b32.xlu0 %v3727, 28
      %v3799 = vpop.permute.xlu0 %3798
      %3800 = vrot.lane.b32.xlu0 %v3728, 28
      %v3801 = vpop.permute.xlu0 %3800
      %3802 = vrot.lane.b32.xlu0 %v3729, 28
      %v3803 = vpop.permute.xlu0 %3802
      %3804 = vrot.lane.b32.xlu0 %v3730, 28
      %v3805 = vpop.permute.xlu0 %3804
      %3806 = vrot.lane.b32.xlu0 %v3731, 28
      %v3807 = vpop.permute.xlu0 %3806
      %3808 = vrot.lane.b32.xlu0 %v3732, 28
      %v3809 = vpop.permute.xlu0 %3808
      %3810 = vrot.lane.b32.xlu0 %v3733, 28
      %v3811 = vpop.permute.xlu0 %3810
      %3812 = vrot.lane.b32.xlu0 %v3734, 28
      %v3813 = vpop.permute.xlu0 %3812
      %3814 = vrot.lane.b32.xlu0 %v3735, 28
      %v3815 = vpop.permute.xlu0 %3814
      %3816 = vrot.lane.b32.xlu0 %v3736, 28
      %v3817 = vpop.permute.xlu0 %3816
      %3818 = vrot.lane.b32.xlu0 %v3737, 28
      %v3819 = vpop.permute.xlu0 %3818
      %3820 = vrot.lane.b32.xlu0 %v3738, 28
      %v3821 = vpop.permute.xlu0 %3820
      %3822 = vrot.lane.b32.xlu0 %v3739, 28
      %v3823 = vpop.permute.xlu0 %3822
      %3824 = vrot.lane.b32.xlu0 %v3740, 28
      %v3825 = vpop.permute.xlu0 %3824
      %3826 = vrot.lane.b32.xlu0 %v3741, 28
      %v3827 = vpop.permute.xlu0 %3826
      %3828 = vrot.lane.b32.xlu0 %v3742, 28
      %v3829 = vpop.permute.xlu0 %3828
      %3830 = vrot.lane.b32.xlu0 %v3743, 28
      %v3831 = vpop.permute.xlu0 %3830
      %3832 = vrot.lane.b32.xlu0 %v3744, 28
      %v3833 = vpop.permute.xlu0 %3832
      %3834 = vrot.lane.b32.xlu0 %v3745, 28
      %v3835 = vpop.permute.xlu0 %3834
      %3836 = vrot.lane.b32.xlu0 %v3746, 28
      %v3837 = vpop.permute.xlu0 %3836
      %3838 = vrot.lane.b32.xlu0 %v3747, 28
      %v3839 = vpop.permute.xlu0 %3838
      %3840 = vrot.lane.b32.xlu0 %v3748, 28
      %v3841 = vpop.permute.xlu0 %3840
      %3842 = vrot.lane.b32.xlu0 %v3749, 28
      %v3843 = vpop.permute.xlu0 %3842
      %3844 = vrot.lane.b32.xlu0 %v3750, 28
      %v3845 = vpop.permute.xlu0 %3844
      %3846 = vrot.lane.b32.xlu0 %v3751, 28
      %v3847 = vpop.permute.xlu0 %3846
      %3880 = vst.msk [vmem:[#allocation3] sm:$0xff] %vm1773, %v3785
      %3881 = vst.msk [vmem:[#allocation3 + $0x8] sm:$0xff] %vm1773, %v3787
      %3882 = vst.msk [vmem:[#allocation3 + $0x10] sm:$0xff] %vm1773, %v3789
      %3883 = vst.msk [vmem:[#allocation3 + $0x18] sm:$0xff] %vm1773, %v3791
      %3884 = vst.msk [vmem:[#allocation3 + $0x20] sm:$0xff] %vm1773, %v3793
      %3885 = vst.msk [vmem:[#allocation3 + $0x28] sm:$0xff] %vm1773, %v3795
      %3886 = vst.msk [vmem:[#allocation3 + $0x30] sm:$0xff] %vm1773, %v3797
      %3887 = vst.msk [vmem:[#allocation3 + $0x38] sm:$0xff] %vm1773, %v3799
      %3888 = vst.msk [vmem:[#allocation3 + $0x40] sm:$0xff] %vm1773, %v3801
      %3889 = vst.msk [vmem:[#allocation3 + $0x48] sm:$0xff] %vm1773, %v3803
      %3890 = vst.msk [vmem:[#allocation3 + $0x50] sm:$0xff] %vm1773, %v3805
      %3891 = vst.msk [vmem:[#allocation3 + $0x58] sm:$0xff] %vm1773, %v3807
      %3892 = vst.msk [vmem:[#allocation3 + $0x60] sm:$0xff] %vm1773, %v3809
      %3893 = vst.msk [vmem:[#allocation3 + $0x68] sm:$0xff] %vm1773, %v3811
      %3894 = vst.msk [vmem:[#allocation3 + $0x70] sm:$0xff] %vm1773, %v3813
      %3895 = vst.msk [vmem:[#allocation3 + $0x78] sm:$0xff] %vm1773, %v3815
      %3896 = vst.msk [vmem:[#allocation3 + $0x80] sm:$0xff] %vm1773, %v3817
      %3897 = vst.msk [vmem:[#allocation3 + $0x88] sm:$0xff] %vm1773, %v3819
      %3898 = vst.msk [vmem:[#allocation3 + $0x90] sm:$0xff] %vm1773, %v3821
      %3899 = vst.msk [vmem:[#allocation3 + $0x98] sm:$0xff] %vm1773, %v3823
      %3900 = vst.msk [vmem:[#allocation3 + $0xa0] sm:$0xff] %vm1773, %v3825
      %3901 = vst.msk [vmem:[#allocation3 + $0xa8] sm:$0xff] %vm1773, %v3827
      %3902 = vst.msk [vmem:[#allocation3 + $0xb0] sm:$0xff] %vm1773, %v3829
      %3903 = vst.msk [vmem:[#allocation3 + $0xb8] sm:$0xff] %vm1773, %v3831
      %3904 = vst.msk [vmem:[#allocation3 + $0xc0] sm:$0xff] %vm1773, %v3833
      %3905 = vst.msk [vmem:[#allocation3 + $0xc8] sm:$0xff] %vm1773, %v3835
      %3906 = vst.msk [vmem:[#allocation3 + $0xd0] sm:$0xff] %vm1773, %v3837
      %3907 = vst.msk [vmem:[#allocation3 + $0xd8] sm:$0xff] %vm1773, %v3839
      %3908 = vst.msk [vmem:[#allocation3 + $0xe0] sm:$0xff] %vm1773, %v3841
      %3909 = vst.msk [vmem:[#allocation3 + $0xe8] sm:$0xff] %vm1773, %v3843
      %3910 = vst.msk [vmem:[#allocation3 + $0xf0] sm:$0xff] %vm1773, %v3845
      %3911 = vst.msk [vmem:[#allocation3 + $0xf8] sm:$0xff] %vm1773, %v3847
      %v3912 = vld [vmem:[%s1419 + $0x2] sm:$0xff]
      %v3913 = vld [vmem:[%s1419 + $0xa] sm:$0xff]
      %v3914 = vld [vmem:[%s1419 + $0x1a] sm:$0xff]
      %v3915 = vld [vmem:[%s1419 + $0x22] sm:$0xff]
      %v3916 = vld [vmem:[%s1419 + $0x32] sm:$0xff]
      %v3917 = vld [vmem:[%s1419 + $0x3a] sm:$0xff]
      %v3918 = vld [vmem:[%s1419 + $0x4a] sm:$0xff]
      %v3919 = vld [vmem:[%s1419 + $0x52] sm:$0xff]
      %v3920 = vld [vmem:[%s1419 + $0x62] sm:$0xff]
      %v3921 = vld [vmem:[%s1419 + $0x6a] sm:$0xff]
      %v3922 = vld [vmem:[%s1419 + $0x7a] sm:$0xff]
      %v3923 = vld [vmem:[%s1419 + $0x82] sm:$0xff]
      %v3924 = vld [vmem:[%s1419 + $0x92] sm:$0xff]
      %v3925 = vld [vmem:[%s1419 + $0x9a] sm:$0xff]
      %v3926 = vld [vmem:[%s1419 + $0xaa] sm:$0xff]
      %v3927 = vld [vmem:[%s1419 + $0xb2] sm:$0xff]
      %v3928 = vld [vmem:[%s1419 + $0xc2] sm:$0xff]
      %v3929 = vld [vmem:[%s1419 + $0xca] sm:$0xff]
      %v3930 = vld [vmem:[%s1419 + $0xda] sm:$0xff]
      %v3931 = vld [vmem:[%s1419 + $0xe2] sm:$0xff]
      %v3932 = vld [vmem:[%s1419 + $0xf2] sm:$0xff]
      %v3933 = vld [vmem:[%s1419 + $0xfa] sm:$0xff]
      %v3934 = vld [vmem:[%s1419 + $0x10a] sm:$0xff]
      %v3935 = vld [vmem:[%s1419 + $0x112] sm:$0xff]
      %v3936 = vld [vmem:[%s1419 + $0x122] sm:$0xff]
      %v3937 = vld [vmem:[%s1419 + $0x12a] sm:$0xff]
      %v3938 = vld [vmem:[%s1419 + $0x13a] sm:$0xff]
      %v3939 = vld [vmem:[%s1419 + $0x142] sm:$0xff]
      %v3940 = vld [vmem:[%s1419 + $0x152] sm:$0xff]
      %v3941 = vld [vmem:[%s1419 + $0x15a] sm:$0xff]
      %v3942 = vld [vmem:[%s1419 + $0x16a] sm:$0xff]
      %v3943 = vld [vmem:[%s1419 + $0x172] sm:$0xff]
      %3976 = vrot.lane.b32.xlu0 %v3912, 32
      %v3977 = vpop.permute.xlu0 %3976
      %3978 = vrot.lane.b32.xlu0 %v3913, 32
      %v3979 = vpop.permute.xlu0 %3978
      %3980 = vrot.lane.b32.xlu0 %v3914, 32
      %v3981 = vpop.permute.xlu0 %3980
      %3982 = vrot.lane.b32.xlu0 %v3915, 32
      %v3983 = vpop.permute.xlu0 %3982
      %3984 = vrot.lane.b32.xlu0 %v3916, 32
      %v3985 = vpop.permute.xlu0 %3984
      %3986 = vrot.lane.b32.xlu0 %v3917, 32
      %v3987 = vpop.permute.xlu0 %3986
      %3988 = vrot.lane.b32.xlu0 %v3918, 32
      %v3989 = vpop.permute.xlu0 %3988
      %3990 = vrot.lane.b32.xlu0 %v3919, 32
      %v3991 = vpop.permute.xlu0 %3990
      %3992 = vrot.lane.b32.xlu0 %v3920, 32
      %v3993 = vpop.permute.xlu0 %3992
      %3994 = vrot.lane.b32.xlu0 %v3921, 32
      %v3995 = vpop.permute.xlu0 %3994
      %3996 = vrot.lane.b32.xlu0 %v3922, 32
      %v3997 = vpop.permute.xlu0 %3996
      %3998 = vrot.lane.b32.xlu0 %v3923, 32
      %v3999 = vpop.permute.xlu0 %3998
      %4000 = vrot.lane.b32.xlu0 %v3924, 32
      %v4001 = vpop.permute.xlu0 %4000
      %4002 = vrot.lane.b32.xlu0 %v3925, 32
      %v4003 = vpop.permute.xlu0 %4002
      %4004 = vrot.lane.b32.xlu0 %v3926, 32
      %v4005 = vpop.permute.xlu0 %4004
      %4006 = vrot.lane.b32.xlu0 %v3927, 32
      %v4007 = vpop.permute.xlu0 %4006
      %4008 = vrot.lane.b32.xlu0 %v3928, 32
      %v4009 = vpop.permute.xlu0 %4008
      %4010 = vrot.lane.b32.xlu0 %v3929, 32
      %v4011 = vpop.permute.xlu0 %4010
      %4012 = vrot.lane.b32.xlu0 %v3930, 32
      %v4013 = vpop.permute.xlu0 %4012
      %4014 = vrot.lane.b32.xlu0 %v3931, 32
      %v4015 = vpop.permute.xlu0 %4014
      %4016 = vrot.lane.b32.xlu0 %v3932, 32
      %v4017 = vpop.permute.xlu0 %4016
      %4018 = vrot.lane.b32.xlu0 %v3933, 32
      %v4019 = vpop.permute.xlu0 %4018
      %4020 = vrot.lane.b32.xlu0 %v3934, 32
      %v4021 = vpop.permute.xlu0 %4020
      %4022 = vrot.lane.b32.xlu0 %v3935, 32
      %v4023 = vpop.permute.xlu0 %4022
      %4024 = vrot.lane.b32.xlu0 %v3936, 32
      %v4025 = vpop.permute.xlu0 %4024
      %4026 = vrot.lane.b32.xlu0 %v3937, 32
      %v4027 = vpop.permute.xlu0 %4026
      %4028 = vrot.lane.b32.xlu0 %v3938, 32
      %v4029 = vpop.permute.xlu0 %4028
      %4030 = vrot.lane.b32.xlu0 %v3939, 32
      %v4031 = vpop.permute.xlu0 %4030
      %4032 = vrot.lane.b32.xlu0 %v3940, 32
      %v4033 = vpop.permute.xlu0 %4032
      %4034 = vrot.lane.b32.xlu0 %v3941, 32
      %v4035 = vpop.permute.xlu0 %4034
      %4036 = vrot.lane.b32.xlu0 %v3942, 32
      %v4037 = vpop.permute.xlu0 %4036
      %4038 = vrot.lane.b32.xlu0 %v3943, 32
      %v4039 = vpop.permute.xlu0 %4038
      %4072 = vst.msk [vmem:[#allocation3] sm:$0xff] %vm1966, %v3977
      %4073 = vst.msk [vmem:[#allocation3 + $0x8] sm:$0xff] %vm1966, %v3979
      %4074 = vst.msk [vmem:[#allocation3 + $0x10] sm:$0xff] %vm1966, %v3981
      %4075 = vst.msk [vmem:[#allocation3 + $0x18] sm:$0xff] %vm1966, %v3983
      %4076 = vst.msk [vmem:[#allocation3 + $0x20] sm:$0xff] %vm1966, %v3985
      %4077 = vst.msk [vmem:[#allocation3 + $0x28] sm:$0xff] %vm1966, %v3987
      %4078 = vst.msk [vmem:[#allocation3 + $0x30] sm:$0xff] %vm1966, %v3989
      %4079 = vst.msk [vmem:[#allocation3 + $0x38] sm:$0xff] %vm1966, %v3991
      %4080 = vst.msk [vmem:[#allocation3 + $0x40] sm:$0xff] %vm1966, %v3993
      %4081 = vst.msk [vmem:[#allocation3 + $0x48] sm:$0xff] %vm1966, %v3995
      %4082 = vst.msk [vmem:[#allocation3 + $0x50] sm:$0xff] %vm1966, %v3997
      %4083 = vst.msk [vmem:[#allocation3 + $0x58] sm:$0xff] %vm1966, %v3999
      %4084 = vst.msk [vmem:[#allocation3 + $0x60] sm:$0xff] %vm1966, %v4001
      %4085 = vst.msk [vmem:[#allocation3 + $0x68] sm:$0xff] %vm1966, %v4003
      %4086 = vst.msk [vmem:[#allocation3 + $0x70] sm:$0xff] %vm1966, %v4005
      %4087 = vst.msk [vmem:[#allocation3 + $0x78] sm:$0xff] %vm1966, %v4007
      %4088 = vst.msk [vmem:[#allocation3 + $0x80] sm:$0xff] %vm1966, %v4009
      %4089 = vst.msk [vmem:[#allocation3 + $0x88] sm:$0xff] %vm1966, %v4011
      %4090 = vst.msk [vmem:[#allocation3 + $0x90] sm:$0xff] %vm1966, %v4013
      %4091 = vst.msk [vmem:[#allocation3 + $0x98] sm:$0xff] %vm1966, %v4015
      %4092 = vst.msk [vmem:[#allocation3 + $0xa0] sm:$0xff] %vm1966, %v4017
      %4093 = vst.msk [vmem:[#allocation3 + $0xa8] sm:$0xff] %vm1966, %v4019
      %4094 = vst.msk [vmem:[#allocation3 + $0xb0] sm:$0xff] %vm1966, %v4021
      %4095 = vst.msk [vmem:[#allocation3 + $0xb8] sm:$0xff] %vm1966, %v4023
      %4096 = vst.msk [vmem:[#allocation3 + $0xc0] sm:$0xff] %vm1966, %v4025
      %4097 = vst.msk [vmem:[#allocation3 + $0xc8] sm:$0xff] %vm1966, %v4027
      %4098 = vst.msk [vmem:[#allocation3 + $0xd0] sm:$0xff] %vm1966, %v4029
      %4099 = vst.msk [vmem:[#allocation3 + $0xd8] sm:$0xff] %vm1966, %v4031
      %4100 = vst.msk [vmem:[#allocation3 + $0xe0] sm:$0xff] %vm1966, %v4033
      %4101 = vst.msk [vmem:[#allocation3 + $0xe8] sm:$0xff] %vm1966, %v4035
      %4102 = vst.msk [vmem:[#allocation3 + $0xf0] sm:$0xff] %vm1966, %v4037
      %4103 = vst.msk [vmem:[#allocation3 + $0xf8] sm:$0xff] %vm1966, %v4039
      %v4104 = vld [vmem:[#allocation3] sm:$0xff]
      %v4105 = vld [vmem:[#allocation3 + $0x8] sm:$0xff]
      %v4106 = vld [vmem:[#allocation3 + $0x10] sm:$0xff]
      %v4107 = vld [vmem:[#allocation3 + $0x18] sm:$0xff]
      %v4108 = vld [vmem:[#allocation3 + $0x20] sm:$0xff]
      %v4109 = vld [vmem:[#allocation3 + $0x28] sm:$0xff]
      %v4110 = vld [vmem:[#allocation3 + $0x30] sm:$0xff]
      %v4111 = vld [vmem:[#allocation3 + $0x38] sm:$0xff]
      %v4112 = vld [vmem:[#allocation3 + $0x40] sm:$0xff]
      %v4113 = vld [vmem:[#allocation3 + $0x48] sm:$0xff]
      %v4114 = vld [vmem:[#allocation3 + $0x50] sm:$0xff]
      %v4115 = vld [vmem:[#allocation3 + $0x58] sm:$0xff]
      %v4116 = vld [vmem:[#allocation3 + $0x60] sm:$0xff]
      %v4117 = vld [vmem:[#allocation3 + $0x68] sm:$0xff]
      %v4118 = vld [vmem:[#allocation3 + $0x70] sm:$0xff]
      %v4119 = vld [vmem:[#allocation3 + $0x78] sm:$0xff]
      %v4120 = vld [vmem:[#allocation3 + $0x80] sm:$0xff]
      %v4121 = vld [vmem:[#allocation3 + $0x88] sm:$0xff]
      %v4122 = vld [vmem:[#allocation3 + $0x90] sm:$0xff]
      %v4123 = vld [vmem:[#allocation3 + $0x98] sm:$0xff]
      %v4124 = vld [vmem:[#allocation3 + $0xa0] sm:$0xff]
      %v4125 = vld [vmem:[#allocation3 + $0xa8] sm:$0xff]
      %v4126 = vld [vmem:[#allocation3 + $0xb0] sm:$0xff]
      %v4127 = vld [vmem:[#allocation3 + $0xb8] sm:$0xff]
      %v4128 = vld [vmem:[#allocation3 + $0xc0] sm:$0xff]
      %v4129 = vld [vmem:[#allocation3 + $0xc8] sm:$0xff]
      %v4130 = vld [vmem:[#allocation3 + $0xd0] sm:$0xff]
      %v4131 = vld [vmem:[#allocation3 + $0xd8] sm:$0xff]
      %v4132 = vld [vmem:[#allocation3 + $0xe0] sm:$0xff]
      %v4133 = vld [vmem:[#allocation3 + $0xe8] sm:$0xff]
      %v4134 = vld [vmem:[#allocation3 + $0xf0] sm:$0xff]
      %v4135 = vld [vmem:[#allocation3 + $0xf8] sm:$0xff]
      %v4136 = vld [vmem:[%s2] sm:$0xff]
      %v4137 = vld [vmem:[%s2 + $0x8] sm:$0xff]
      %v4138 = vld [vmem:[%s2 + $0x10] sm:$0xff]
      %v4139 = vld [vmem:[%s2 + $0x18] sm:$0xff]
      %v4140 = vld [vmem:[%s2 + $0x20] sm:$0xf]
      %v4142 = vsel %vm2036, %v4104, 0
      %v4145 = vsel %vm2036, %v4105, 0
      %v4148 = vsel %vm2036, %v4106, 0
      %v4151 = vsel %vm2036, %v4107, 0
      %v4154 = vsel %vm2036, %v4108, 0
      %v4157 = vsel %vm2036, %v4109, 0
      %v4160 = vsel %vm2036, %v4110, 0
      %v4163 = vsel %vm2036, %v4111, 0
      %v4166 = vsel %vm2036, %v4112, 0
      %v4169 = vsel %vm2036, %v4113, 0
      %v4172 = vsel %vm2036, %v4114, 0
      %v4175 = vsel %vm2036, %v4115, 0
      %v4178 = vsel %vm2036, %v4116, 0
      %v4181 = vsel %vm2036, %v4117, 0
      %v4184 = vsel %vm2036, %v4118, 0
      %v4187 = vsel %vm2036, %v4119, 0
      %v4190 = vsel %vm2036, %v4120, 0
      %v4193 = vsel %vm2036, %v4121, 0
      %v4196 = vsel %vm2036, %v4122, 0
      %v4199 = vsel %vm2036, %v4123, 0
      %v4202 = vsel %vm2036, %v4124, 0
      %v4205 = vsel %vm2036, %v4125, 0
      %v4208 = vsel %vm2036, %v4126, 0
      %v4211 = vsel %vm2036, %v4127, 0
      %v4214 = vsel %vm2036, %v4128, 0
      %v4217 = vsel %vm2036, %v4129, 0
      %v4220 = vsel %vm2036, %v4130, 0
      %v4223 = vsel %vm2036, %v4131, 0
      %v4226 = vsel %vm2036, %v4132, 0
      %v4229 = vsel %vm2036, %v4133, 0
      %v4232 = vsel %vm2036, %v4134, 0
      %v4235 = vsel %vm2036, %v4135, 0
      %v4238 = vsel %vm2133, %v4140, 0
      %4240 = vmatprep.subr.mxu0 0.0
      %4241 = vmatpush1.msra.mxu0 %v4136
      %4242 = vmatprep.subr.mxu0 0.0
      %4243 = vmatpush1.msra.mxu0 %v4137
      %4244 = vmatprep.subr.mxu0 0.0
      %4245 = vmatpush1.msra.mxu0 %v4138
      %4246 = vmatprep.subr.mxu0 0.0
      %4247 = vmatpush1.msra.mxu0 %v4139
      %4248 = vmatprep.subr.mxu0 0.0
      %4249 = vmatpush1.msra.mxu0 %v4238
      %4250 = vmatprep.subr.mxu0 0.0
      %4251 = vmatpush1.msra.mxu0 0.0
      %4252 = vmatprep.subr.mxu0 0.0
      %4253 = vmatpush1.msra.mxu0 0.0
      %4254 = vmatprep.subr.mxu0 0.0
      %4255 = vmatpush1.msra.mxu0 0.0
      %4256 = vmatprep.subr.mxu0 0.0
      %4257 = vmatpush1.msra.mxu0 0.0
      %4258 = vmatprep.subr.mxu0 0.0
      %4259 = vmatpush1.msra.mxu0 0.0
      %4260 = vmatprep.subr.mxu0 0.0
      %4261 = vmatpush1.msra.mxu0 0.0
      %4262 = vmatprep.subr.mxu0 0.0
      %4263 = vmatpush1.msra.mxu0 0.0
      %4264 = vmatprep.subr.mxu0 0.0
      %4265 = vmatpush1.msra.mxu0 0.0
      %4266 = vmatprep.subr.mxu0 0.0
      %4267 = vmatpush1.msra.mxu0 0.0
      %4268 = vmatprep.subr.mxu0 0.0
      %4269 = vmatpush1.msra.mxu0 0.0
      %4270 = vmatprep.subr.mxu0 0.0
      %4271 = vmatpush1.msra.mxu0 0.0
      %4272 = vmatprep.subr.mxu0 0.0
      %4273 = vmatpush1.msra.mxu0 0.0
      %4274 = vmatprep.subr.mxu0 0.0
      %4275 = vmatpush1.msra.mxu0 0.0
      %4276 = vmatprep.subr.mxu0 0.0
      %4277 = vmatpush1.msra.mxu0 0.0
      %4278 = vmatprep.subr.mxu0 0.0
      %4279 = vmatpush1.msra.mxu0 0.0
      %4280 = vmatprep.subr.mxu0 0.0
      %4281 = vmatpush1.msra.mxu0 0.0
      %4282 = vmatprep.subr.mxu0 0.0
      %4283 = vmatpush1.msra.mxu0 0.0
      %4284 = vmatprep.subr.mxu0 0.0
      %4285 = vmatpush1.msra.mxu0 0.0
      %4286 = vmatprep.subr.mxu0 0.0
      %4287 = vmatpush1.msra.mxu0 0.0
      %4288 = vmatprep.subr.mxu0 0.0
      %4289 = vmatpush1.msra.mxu0 0.0
      %4290 = vmatprep.subr.mxu0 0.0
      %4291 = vmatpush1.msra.mxu0 0.0
      %4292 = vmatprep.subr.mxu0 0.0
      %4293 = vmatpush1.msra.mxu0 0.0
      %4294 = vmatprep.subr.mxu0 0.0
      %4295 = vmatpush1.msra.mxu0 0.0
      %4296 = vmatprep.subr.mxu0 0.0
      %4297 = vmatpush1.msra.mxu0 0.0
      %4298 = vmatprep.subr.mxu0 0.0
      %4299 = vmatpush1.msra.mxu0 0.0
      %4300 = vmatprep.subr.mxu0 0.0
      %4301 = vmatpush1.msra.mxu0 0.0
      %4302 = vmatprep.subr.mxu0 0.0
      %4303 = vmatpush1.msra.mxu0 0.0
      %4304 = vmatprep.mubr.f32.mxu0 0.0
      %4305 = vmatmul.mubr.f32.gmra.mrb[0].mxu0 %v4142
      %v4306 = vpop.f32.mrb[0].mxu0
      %v4307 = vadd.f32 0.0, %v4306
      %v4308 = vpop.f32.mrb[0].mxu0
      %4309 = vmatprep.mubr.f32.mxu0 0.0
      %4310 = vmatmul.mubr.f32.gmra.mrb[0].mxu0 %v4145
      %v4311 = vpop.f32.mrb[0].mxu0
      %v4312 = vadd.f32 0.0, %v4311
      %v4313 = vpop.f32.mrb[0].mxu0
      %4314 = vmatprep.mubr.f32.mxu0 0.0
      %4315 = vmatmul.mubr.f32.gmra.mrb[0].mxu0 %v4148
      %v4316 = vpop.f32.mrb[0].mxu0
      %v4317 = vadd.f32 0.0, %v4316
      %v4318 = vpop.f32.mrb[0].mxu0
      %4319 = vmatprep.mubr.f32.mxu0 0.0
      %4320 = vmatmul.mubr.f32.gmra.mrb[0].mxu0 %v4151
      %v4321 = vpop.f32.mrb[0].mxu0
      %v4322 = vadd.f32 0.0, %v4321
      %v4323 = vpop.f32.mrb[0].mxu0
      %4324 = vmatprep.mubr.f32.mxu0 0.0
      %4325 = vmatmul.mubr.f32.gmra.mrb[0].mxu0 %v4154
      %v4326 = vpop.f32.mrb[0].mxu0
      %v4327 = vadd.f32 0.0, %v4326
      %v4328 = vpop.f32.mrb[0].mxu0
      %4329 = vmatprep.mubr.f32.mxu0 0.0
      %4330 = vmatmul.mubr.f32.gmra.mrb[0].mxu0 %v4157
      %v4331 = vpop.f32.mrb[0].mxu0
      %v4332 = vadd.f32 0.0, %v4331
      %v4333 = vpop.f32.mrb[0].mxu0
      %4334 = vmatprep.mubr.f32.mxu0 0.0
      %4335 = vmatmul.mubr.f32.gmra.mrb[0].mxu0 %v4160
      %v4336 = vpop.f32.mrb[0].mxu0
      %v4337 = vadd.f32 0.0, %v4336
      %v4338 = vpop.f32.mrb[0].mxu0
      %4339 = vmatprep.mubr.f32.mxu0 0.0
      %4340 = vmatmul.mubr.f32.gmra.mrb[0].mxu0 %v4163
      %v4341 = vpop.f32.mrb[0].mxu0
      %v4342 = vadd.f32 0.0, %v4341
      %v4343 = vpop.f32.mrb[0].mxu0
      %4344 = vmatprep.mubr.f32.mxu0 0.0
      %4345 = vmatmul.mubr.f32.gmra.mrb[0].mxu0 %v4166
      %v4346 = vpop.f32.mrb[0].mxu0
      %v4347 = vadd.f32 0.0, %v4346
      %v4348 = vpop.f32.mrb[0].mxu0
      %4349 = vmatprep.mubr.f32.mxu0 0.0
      %4350 = vmatmul.mubr.f32.gmra.mrb[0].mxu0 %v4169
      %v4351 = vpop.f32.mrb[0].mxu0
      %v4352 = vadd.f32 0.0, %v4351
      %v4353 = vpop.f32.mrb[0].mxu0
      %4354 = vmatprep.mubr.f32.mxu0 0.0
      %4355 = vmatmul.mubr.f32.gmra.mrb[0].mxu0 %v4172
      %v4356 = vpop.f32.mrb[0].mxu0
      %v4357 = vadd.f32 0.0, %v4356
      %v4358 = vpop.f32.mrb[0].mxu0
      %4359 = vmatprep.mubr.f32.mxu0 0.0
      %4360 = vmatmul.mubr.f32.gmra.mrb[0].mxu0 %v4175
      %v4361 = vpop.f32.mrb[0].mxu0
      %v4362 = vadd.f32 0.0, %v4361
      %v4363 = vpop.f32.mrb[0].mxu0
      %4364 = vmatprep.mubr.f32.mxu0 0.0
      %4365 = vmatmul.mubr.f32.gmra.mrb[0].mxu0 %v4178
      %v4366 = vpop.f32.mrb[0].mxu0
      %v4367 = vadd.f32 0.0, %v4366
      %v4368 = vpop.f32.mrb[0].mxu0
      %4369 = vmatprep.mubr.f32.mxu0 0.0
      %4370 = vmatmul.mubr.f32.gmra.mrb[0].mxu0 %v4181
      %v4371 = vpop.f32.mrb[0].mxu0
      %v4372 = vadd.f32 0.0, %v4371
      %v4373 = vpop.f32.mrb[0].mxu0
      %4374 = vmatprep.mubr.f32.mxu0 0.0
      %4375 = vmatmul.mubr.f32.gmra.mrb[0].mxu0 %v4184
      %v4376 = vpop.f32.mrb[0].mxu0
      %v4377 = vadd.f32 0.0, %v4376
      %v4378 = vpop.f32.mrb[0].mxu0
      %4379 = vmatprep.mubr.f32.mxu0 0.0
      %4380 = vmatmul.mubr.f32.gmra.mrb[0].mxu0 %v4187
      %v4381 = vpop.f32.mrb[0].mxu0
      %v4382 = vadd.f32 0.0, %v4381
      %v4383 = vpop.f32.mrb[0].mxu0
      %4384 = vmatprep.mubr.f32.mxu0 0.0
      %4385 = vmatmul.mubr.f32.gmra.mrb[0].mxu0 %v4190
      %v4386 = vpop.f32.mrb[0].mxu0
      %v4387 = vadd.f32 0.0, %v4386
      %v4388 = vpop.f32.mrb[0].mxu0
      %4389 = vmatprep.mubr.f32.mxu0 0.0
      %4390 = vmatmul.mubr.f32.gmra.mrb[0].mxu0 %v4193
      %v4391 = vpop.f32.mrb[0].mxu0
      %v4392 = vadd.f32 0.0, %v4391
      %v4393 = vpop.f32.mrb[0].mxu0
      %4394 = vmatprep.mubr.f32.mxu0 0.0
      %4395 = vmatmul.mubr.f32.gmra.mrb[0].mxu0 %v4196
      %v4396 = vpop.f32.mrb[0].mxu0
      %v4397 = vadd.f32 0.0, %v4396
      %v4398 = vpop.f32.mrb[0].mxu0
      %4399 = vmatprep.mubr.f32.mxu0 0.0
      %4400 = vmatmul.mubr.f32.gmra.mrb[0].mxu0 %v4199
      %v4401 = vpop.f32.mrb[0].mxu0
      %v4402 = vadd.f32 0.0, %v4401
      %v4403 = vpop.f32.mrb[0].mxu0
      %4404 = vmatprep.mubr.f32.mxu0 0.0
      %4405 = vmatmul.mubr.f32.gmra.mrb[0].mxu0 %v4202
      %v4406 = vpop.f32.mrb[0].mxu0
      %v4407 = vadd.f32 0.0, %v4406
      %v4408 = vpop.f32.mrb[0].mxu0
      %4409 = vmatprep.mubr.f32.mxu0 0.0
      %4410 = vmatmul.mubr.f32.gmra.mrb[0].mxu0 %v4205
      %v4411 = vpop.f32.mrb[0].mxu0
      %v4412 = vadd.f32 0.0, %v4411
      %v4413 = vpop.f32.mrb[0].mxu0
      %4414 = vmatprep.mubr.f32.mxu0 0.0
      %4415 = vmatmul.mubr.f32.gmra.mrb[0].mxu0 %v4208
      %v4416 = vpop.f32.mrb[0].mxu0
      %v4417 = vadd.f32 0.0, %v4416
      %v4418 = vpop.f32.mrb[0].mxu0
      %4419 = vmatprep.mubr.f32.mxu0 0.0
      %4420 = vmatmul.mubr.f32.gmra.mrb[0].mxu0 %v4211
      %v4421 = vpop.f32.mrb[0].mxu0
      %v4422 = vadd.f32 0.0, %v4421
      %v4423 = vpop.f32.mrb[0].mxu0
      %4424 = vmatprep.mubr.f32.mxu0 0.0
      %4425 = vmatmul.mubr.f32.gmra.mrb[0].mxu0 %v4214
      %v4426 = vpop.f32.mrb[0].mxu0
      %v4427 = vadd.f32 0.0, %v4426
      %v4428 = vpop.f32.mrb[0].mxu0
      %4429 = vmatprep.mubr.f32.mxu0 0.0
      %4430 = vmatmul.mubr.f32.gmra.mrb[0].mxu0 %v4217
      %v4431 = vpop.f32.mrb[0].mxu0
      %v4432 = vadd.f32 0.0, %v4431
      %v4433 = vpop.f32.mrb[0].mxu0
      %4434 = vmatprep.mubr.f32.mxu0 0.0
      %4435 = vmatmul.mubr.f32.gmra.mrb[0].mxu0 %v4220
      %v4436 = vpop.f32.mrb[0].mxu0
      %v4437 = vadd.f32 0.0, %v4436
      %v4438 = vpop.f32.mrb[0].mxu0
      %4439 = vmatprep.mubr.f32.mxu0 0.0
      %4440 = vmatmul.mubr.f32.gmra.mrb[0].mxu0 %v4223
      %v4441 = vpop.f32.mrb[0].mxu0
      %v4442 = vadd.f32 0.0, %v4441
      %v4443 = vpop.f32.mrb[0].mxu0
      %4444 = vmatprep.mubr.f32.mxu0 0.0
      %4445 = vmatmul.mubr.f32.gmra.mrb[0].mxu0 %v4226
      %v4446 = vpop.f32.mrb[0].mxu0
      %v4447 = vadd.f32 0.0, %v4446
      %v4448 = vpop.f32.mrb[0].mxu0
      %4449 = vmatprep.mubr.f32.mxu0 0.0
      %4450 = vmatmul.mubr.f32.gmra.mrb[0].mxu0 %v4229
      %v4451 = vpop.f32.mrb[0].mxu0
      %v4452 = vadd.f32 0.0, %v4451
      %v4453 = vpop.f32.mrb[0].mxu0
      %4454 = vmatprep.mubr.f32.mxu0 0.0
      %4455 = vmatmul.mubr.f32.gmra.mrb[0].mxu0 %v4232
      %v4456 = vpop.f32.mrb[0].mxu0
      %v4457 = vadd.f32 0.0, %v4456
      %v4458 = vpop.f32.mrb[0].mxu0
      %4459 = vmatprep.mubr.f32.mxu0 0.0
      %4460 = vmatmul.mubr.f32.gmra.mrb[0].mxu0 %v4235
      %v4461 = vpop.f32.mrb[0].mxu0
      %v4462 = vadd.f32 0.0, %v4461
      %v4463 = vpop.f32.mrb[0].mxu0
      %4464 = vdwg.mxu0
      %v4465 = vld [vmem:[%s5] sm:$0x1]
      %v4467 = vlaneseq
      %v4468 = vshrl.u32 %v4467, 7
      %v4469 = vsub.s32 0, %v4468
      %v4470 = vrot.slane %v4465, %v4469
      %v4472 = vmul.f32 %v4307, %v4470
      %v4473 = vmul.f32 %v4312, %v4470
      %v4474 = vmul.f32 %v4317, %v4470
      %v4475 = vmul.f32 %v4322, %v4470
      %v4476 = vmul.f32 %v4327, %v4470
      %v4477 = vmul.f32 %v4332, %v4470
      %v4478 = vmul.f32 %v4337, %v4470
      %v4479 = vmul.f32 %v4342, %v4470
      %v4480 = vmul.f32 %v4347, %v4470
      %v4481 = vmul.f32 %v4352, %v4470
      %v4482 = vmul.f32 %v4357, %v4470
      %v4483 = vmul.f32 %v4362, %v4470
      %v4484 = vmul.f32 %v4367, %v4470
      %v4485 = vmul.f32 %v4372, %v4470
      %v4486 = vmul.f32 %v4377, %v4470
      %v4487 = vmul.f32 %v4382, %v4470
      %v4488 = vmul.f32 %v4387, %v4470
      %v4489 = vmul.f32 %v4392, %v4470
      %v4490 = vmul.f32 %v4397, %v4470
      %v4491 = vmul.f32 %v4402, %v4470
      %v4492 = vmul.f32 %v4407, %v4470
      %v4493 = vmul.f32 %v4412, %v4470
      %v4494 = vmul.f32 %v4417, %v4470
      %v4495 = vmul.f32 %v4422, %v4470
      %v4496 = vmul.f32 %v4427, %v4470
      %v4497 = vmul.f32 %v4432, %v4470
      %v4498 = vmul.f32 %v4437, %v4470
      %v4499 = vmul.f32 %v4442, %v4470
      %v4500 = vmul.f32 %v4447, %v4470
      %v4501 = vmul.f32 %v4452, %v4470
      %v4502 = vmul.f32 %v4457, %v4470
      %v4503 = vmul.f32 %v4462, %v4470
      %v4504 = vld [vmem:[%s6] sm:$0x1]
      %v4506 = vlaneseq
      %v4507 = vshrl.u32 %v4506, 7
      %v4508 = vsub.s32 0, %v4507
      %v4509 = vrot.slane %v4504, %v4508
      %v4511 = vadd.f32 %v4472, %v4509
      %v4512 = vadd.f32 %v4473, %v4509
      %v4513 = vadd.f32 %v4474, %v4509
      %v4514 = vadd.f32 %v4475, %v4509
      %v4515 = vadd.f32 %v4476, %v4509
      %v4516 = vadd.f32 %v4477, %v4509
      %v4517 = vadd.f32 %v4478, %v4509
      %v4518 = vadd.f32 %v4479, %v4509
      %v4519 = vadd.f32 %v4480, %v4509
      %v4520 = vadd.f32 %v4481, %v4509
      %v4521 = vadd.f32 %v4482, %v4509
      %v4522 = vadd.f32 %v4483, %v4509
      %v4523 = vadd.f32 %v4484, %v4509
      %v4524 = vadd.f32 %v4485, %v4509
      %v4525 = vadd.f32 %v4486, %v4509
      %v4526 = vadd.f32 %v4487, %v4509
      %v4527 = vadd.f32 %v4488, %v4509
      %v4528 = vadd.f32 %v4489, %v4509
      %v4529 = vadd.f32 %v4490, %v4509
      %v4530 = vadd.f32 %v4491, %v4509
      %v4531 = vadd.f32 %v4492, %v4509
      %v4532 = vadd.f32 %v4493, %v4509
      %v4533 = vadd.f32 %v4494, %v4509
      %v4534 = vadd.f32 %v4495, %v4509
      %v4535 = vadd.f32 %v4496, %v4509
      %v4536 = vadd.f32 %v4497, %v4509
      %v4537 = vadd.f32 %v4498, %v4509
      %v4538 = vadd.f32 %v4499, %v4509
      %v4539 = vadd.f32 %v4500, %v4509
      %v4540 = vadd.f32 %v4501, %v4509
      %v4541 = vadd.f32 %v4502, %v4509
      %v4542 = vadd.f32 %v4503, %v4509
      %v4543 = vld [vmem:[%s273] sm:$0xff]
      %v4544 = vld [vmem:[%s273 + $0x8] sm:$0xff]
      %v4545 = vld [vmem:[%s273 + $0x10] sm:$0xff]
      %v4546 = vld [vmem:[%s273 + $0x18] sm:$0xff]
      %v4547 = vld [vmem:[%s273 + $0x20] sm:$0xff]
      %v4548 = vld [vmem:[%s273 + $0x28] sm:$0xff]
      %v4549 = vld [vmem:[%s273 + $0x30] sm:$0xff]
      %v4550 = vld [vmem:[%s273 + $0x38] sm:$0xff]
      %v4551 = vld [vmem:[%s273 + $0x40] sm:$0xff]
      %v4552 = vld [vmem:[%s273 + $0x48] sm:$0xff]
      %v4553 = vld [vmem:[%s273 + $0x50] sm:$0xff]
      %v4554 = vld [vmem:[%s273 + $0x58] sm:$0xff]
      %v4555 = vld [vmem:[%s273 + $0x60] sm:$0xff]
      %v4556 = vld [vmem:[%s273 + $0x68] sm:$0xff]
      %v4557 = vld [vmem:[%s273 + $0x70] sm:$0xff]
      %v4558 = vld [vmem:[%s273 + $0x78] sm:$0xff]
      %v4559 = vld [vmem:[%s273 + $0x80] sm:$0xff]
      %v4560 = vld [vmem:[%s273 + $0x88] sm:$0xff]
      %v4561 = vld [vmem:[%s273 + $0x90] sm:$0xff]
      %v4562 = vld [vmem:[%s273 + $0x98] sm:$0xff]
      %v4563 = vld [vmem:[%s273 + $0xa0] sm:$0xff]
      %v4564 = vld [vmem:[%s273 + $0xa8] sm:$0xff]
      %v4565 = vld [vmem:[%s273 + $0xb0] sm:$0xff]
      %v4566 = vld [vmem:[%s273 + $0xb8] sm:$0xff]
      %v4567 = vld [vmem:[%s273 + $0xc0] sm:$0xff]
      %v4568 = vld [vmem:[%s273 + $0xc8] sm:$0xff]
      %v4569 = vld [vmem:[%s273 + $0xd0] sm:$0xff]
      %v4570 = vld [vmem:[%s273 + $0xd8] sm:$0xff]
      %v4571 = vld [vmem:[%s273 + $0xe0] sm:$0xff]
      %v4572 = vld [vmem:[%s273 + $0xe8] sm:$0xff]
      %v4573 = vld [vmem:[%s273 + $0xf0] sm:$0xff]
      %v4574 = vld [vmem:[%s273 + $0xf8] sm:$0xff]
      %v4575 = vadd.f32 %v4511, %v4543
      %v4576 = vadd.f32 %v4512, %v4544
      %v4577 = vadd.f32 %v4513, %v4545
      %v4578 = vadd.f32 %v4514, %v4546
      %v4579 = vadd.f32 %v4515, %v4547
      %v4580 = vadd.f32 %v4516, %v4548
      %v4581 = vadd.f32 %v4517, %v4549
      %v4582 = vadd.f32 %v4518, %v4550
      %v4583 = vadd.f32 %v4519, %v4551
      %v4584 = vadd.f32 %v4520, %v4552
      %v4585 = vadd.f32 %v4521, %v4553
      %v4586 = vadd.f32 %v4522, %v4554
      %v4587 = vadd.f32 %v4523, %v4555
      %v4588 = vadd.f32 %v4524, %v4556
      %v4589 = vadd.f32 %v4525, %v4557
      %v4590 = vadd.f32 %v4526, %v4558
      %v4591 = vadd.f32 %v4527, %v4559
      %v4592 = vadd.f32 %v4528, %v4560
      %v4593 = vadd.f32 %v4529, %v4561
      %v4594 = vadd.f32 %v4530, %v4562
      %v4595 = vadd.f32 %v4531, %v4563
      %v4596 = vadd.f32 %v4532, %v4564
      %v4597 = vadd.f32 %v4533, %v4565
      %v4598 = vadd.f32 %v4534, %v4566
      %v4599 = vadd.f32 %v4535, %v4567
      %v4600 = vadd.f32 %v4536, %v4568
      %v4601 = vadd.f32 %v4537, %v4569
      %v4602 = vadd.f32 %v4538, %v4570
      %v4603 = vadd.f32 %v4539, %v4571
      %v4604 = vadd.f32 %v4540, %v4572
      %v4605 = vadd.f32 %v4541, %v4573
      %v4606 = vadd.f32 %v4542, %v4574
      %v4607 = vmax.f32 %v4575, 0.0
      %v4608 = vmax.f32 %v4576, 0.0
      %v4609 = vmax.f32 %v4577, 0.0
      %v4610 = vmax.f32 %v4578, 0.0
      %v4611 = vmax.f32 %v4579, 0.0
      %v4612 = vmax.f32 %v4580, 0.0
      %v4613 = vmax.f32 %v4581, 0.0
      %v4614 = vmax.f32 %v4582, 0.0
      %v4615 = vmax.f32 %v4583, 0.0
      %v4616 = vmax.f32 %v4584, 0.0
      %v4617 = vmax.f32 %v4585, 0.0
      %v4618 = vmax.f32 %v4586, 0.0
      %v4619 = vmax.f32 %v4587, 0.0
      %v4620 = vmax.f32 %v4588, 0.0
      %v4621 = vmax.f32 %v4589, 0.0
      %v4622 = vmax.f32 %v4590, 0.0
      %v4623 = vmax.f32 %v4591, 0.0
      %v4624 = vmax.f32 %v4592, 0.0
      %v4625 = vmax.f32 %v4593, 0.0
      %v4626 = vmax.f32 %v4594, 0.0
      %v4627 = vmax.f32 %v4595, 0.0
      %v4628 = vmax.f32 %v4596, 0.0
      %v4629 = vmax.f32 %v4597, 0.0
      %v4630 = vmax.f32 %v4598, 0.0
      %v4631 = vmax.f32 %v4599, 0.0
      %v4632 = vmax.f32 %v4600, 0.0
      %v4633 = vmax.f32 %v4601, 0.0
      %v4634 = vmax.f32 %v4602, 0.0
      %v4635 = vmax.f32 %v4603, 0.0
      %v4636 = vmax.f32 %v4604, 0.0
      %v4637 = vmax.f32 %v4605, 0.0
      %v4638 = vmax.f32 %v4606, 0.0
      %4639 = vst.msk [vmem:[%s278] sm:$0xff] %vm279, %v4607
      %4640 = vst.msk [vmem:[%s278 + $0x8] sm:$0xff] %vm279, %v4608
      %4641 = vst.msk [vmem:[%s278 + $0x10] sm:$0xff] %vm279, %v4609
      %4642 = vst.msk [vmem:[%s278 + $0x18] sm:$0xff] %vm279, %v4610
      %4643 = vst.msk [vmem:[%s278 + $0x20] sm:$0xff] %vm279, %v4611
      %4644 = vst.msk [vmem:[%s278 + $0x28] sm:$0xff] %vm279, %v4612
      %4645 = vst.msk [vmem:[%s278 + $0x30] sm:$0xff] %vm279, %v4613
      %4646 = vst.msk [vmem:[%s278 + $0x38] sm:$0xff] %vm279, %v4614
      %4647 = vst.msk [vmem:[%s278 + $0x40] sm:$0xff] %vm279, %v4615
      %4648 = vst.msk [vmem:[%s278 + $0x48] sm:$0xff] %vm279, %v4616
      %4649 = vst.msk [vmem:[%s278 + $0x50] sm:$0xff] %vm279, %v4617
      %4650 = vst.msk [vmem:[%s278 + $0x58] sm:$0xff] %vm279, %v4618
      %4651 = vst.msk [vmem:[%s278 + $0x60] sm:$0xff] %vm279, %v4619
      %4652 = vst.msk [vmem:[%s278 + $0x68] sm:$0xff] %vm279, %v4620
      %4653 = vst.msk [vmem:[%s278 + $0x70] sm:$0xff] %vm279, %v4621
      %4654 = vst.msk [vmem:[%s278 + $0x78] sm:$0xff] %vm279, %v4622
      %4655 = vst.msk [vmem:[%s278 + $0x80] sm:$0xff] %vm279, %v4623
      %4656 = vst.msk [vmem:[%s278 + $0x88] sm:$0xff] %vm279, %v4624
      %4657 = vst.msk [vmem:[%s278 + $0x90] sm:$0xff] %vm279, %v4625
      %4658 = vst.msk [vmem:[%s278 + $0x98] sm:$0xff] %vm279, %v4626
      %4659 = vst.msk [vmem:[%s278 + $0xa0] sm:$0xff] %vm279, %v4627
      %4660 = vst.msk [vmem:[%s278 + $0xa8] sm:$0xff] %vm279, %v4628
      %4661 = vst.msk [vmem:[%s278 + $0xb0] sm:$0xff] %vm279, %v4629
      %4662 = vst.msk [vmem:[%s278 + $0xb8] sm:$0xff] %vm279, %v4630
      %4663 = vst.msk [vmem:[%s278 + $0xc0] sm:$0xff] %vm279, %v4631
      %4664 = vst.msk [vmem:[%s278 + $0xc8] sm:$0xff] %vm279, %v4632
      %4665 = vst.msk [vmem:[%s278 + $0xd0] sm:$0xff] %vm279, %v4633
      %4666 = vst.msk [vmem:[%s278 + $0xd8] sm:$0xff] %vm279, %v4634
      %4667 = vst.msk [vmem:[%s278 + $0xe0] sm:$0xff] %vm279, %v4635
      %4668 = vst.msk [vmem:[%s278 + $0xe8] sm:$0xff] %vm279, %v4636
      %4669 = vst.msk [vmem:[%s278 + $0xf0] sm:$0xff] %vm279, %v4637
      %4670 = vst.msk [vmem:[%s278 + $0xf8] sm:$0xff] %vm279, %v4638
      %p4671 = scmp.lt.s32.totalorder %s18, 1
      %s4672 = scalar_select %p4671, %s18, 1
      %s4673 = smul.addr %s4672, 32
      %s4674 = smul.addr %s4673, 8
      %s4675 = scalar_lea.vmem %s7, %s4674
      // Predicated region
      $region49: #{tpu_custom_call.1} parent=47 // pred_check
        %p4676 = pneg %p188
      $region50: #{tpu_custom_call.1} parent=47 // pred_check_branch
        %4678 = sbr.rel (%p4676) target = $region52
      $region51: #{tpu_custom_call.1} parent=47 // pred_region
        _
      $region52: #{tpu_custom_call.1} parent=47 // pred_fallthru
        _
    $region48: #{tpu_custom_call.1} parent=5 // pred_fallthru
      _
    %p4679 = scmp.le.s32.totalorder 2, %s13
    // Predicated region
    $region53: #{tpu_custom_call.1} parent=5 // pred_check
      %p4680 = pneg %p4679
    $region54: #{tpu_custom_call.1} parent=5 // pred_check_branch
      %4682 = sbr.rel (%p4680) target = $region56
    $region55: #{tpu_custom_call.1} parent=5 // pred_region
      %s4683 = ssub.s32 %s13, 2
      // Predicated region
      $region57: #{tpu_custom_call.1} parent=55 // pred_check
        %p4684 = pneg %p194
      $region58: #{tpu_custom_call.1} parent=55 // pred_check_branch
        %4686 = sbr.rel (%p4684) target = $region60
      $region59: #{tpu_custom_call.1} parent=55 // pred_region
        %p4687 = scmp.lt.s32.totalorder %s19, 1
        %s4688 = scalar_select %p4687, %s19, 1
        %s4689 = smul.addr %s4688, 32
        %s4690 = smul.addr %s4689, 8
        %s4691 = scalar_lea.vmem %s7, %s4690
      $region60: #{tpu_custom_call.1} parent=55 // pred_fallthru
        _
    $region56: #{tpu_custom_call.1} parent=5 // pred_fallthru
      _
  $region6: #{tpu_custom_call.1} parent=0 // loop_footer
    %s17 = sadd.s32 1, %s13
  $region7: #{tpu_custom_call.1} parent=0 // loop_footer_branch
    %12 = sbr.rel target = $region3
  $region8: #{tpu_custom_call.1} parent=0 // loop_exit
    _

</llo_original>
